<compile_context>
chip_gen: v5e
topology: v5e:2x2
jax: 0.10.0
libtpu: 0.0.40
codegen_flags: <defaults>
</compile_context>

<pallas_src>
import numpy as np
import jax
import jax.numpy as jnp
from jax.experimental import pallas as pl
from jax.experimental.pallas import tpu as pltpu

_EPS = 1e-5  # nn.BatchNorm2d default eps


# --------------------------------------------------------------------------
# In-kernel building blocks
# --------------------------------------------------------------------------
def _conv3x3_im2col(src_ref, pat_ref, w_ref, n, ho, wo):
    """3x3 stride-1 conv as ONE im2col MXU matmul with K = 9*Cin.

    src_ref: Ref (n, ho+2, wo+2, c_in) f32  -- window already includes the halo
    pat_ref: Ref (n, ho, wo, 9*c_in)  bf16  -- VMEM im2col scratch
    w_ref:   Ref (9*c_in, c_out)      bf16  -- rows ordered (dy*3+dx)*c_in + cin
    returns: (n*ho*wo, c_out) float32
    """
    c_in = src_ref.shape[-1]
    # Single im2col materialization: each tap is a lane-slice store into the
    # patch scratch (cast to bf16 here -> single-pass MXU matmul below).
    for dy in range(3):
        for dx in range(3):
            tap = dy * 3 + dx
            pat_ref[:, :, :, tap * c_in:(tap + 1) * c_in] = (
                src_ref[:, dy:dy + ho, dx:dx + wo, :].astype(pat_ref.dtype))
    patches = pat_ref[...].reshape(n * ho * wo, 9 * c_in)
    # One big-K matmul, default precision (operands already bf16), f32 accumulate.
    return jnp.dot(patches, w_ref[...], preferred_element_type=jnp.float32)


def _batchnorm(y, gamma_ref, beta_ref):
    """Training-mode BatchNorm2d on a (P, C) slab, one-pass sum / sum-of-squares."""
    inv_p = 1.0 / y.shape[0]
    s = jnp.sum(y, axis=0, keepdims=True)
    ss = jnp.sum(y * y, axis=0, keepdims=True)
    mean = s * inv_p
    var = ss * inv_p - mean * mean            # biased variance
    scale = jax.lax.rsqrt(var + _EPS) * gamma_ref[...]
    shift = beta_ref[...] - mean * scale
    return y * scale + shift                  # single fused pass over the slab


# --------------------------------------------------------------------------
# Kernels
# --------------------------------------------------------------------------
def _generator_kernel(x_ref, w1_ref, g1_ref, be1_ref, a_ref,
                      w2_ref, g2_ref, be2_ref, o_ref, pad_ref, pat_ref):
    n, h, w, c = x_ref.shape
    hp, wp = h + 2, w + 2

    # Zero only the 1-pixel halo of the padded scratch (interior is written
    # below); halo stays zero for both SAME convs.
    pad_ref[:, 0:1, :, :] = jnp.zeros((n, 1, wp, c), jnp.float32)
    pad_ref[:, hp - 1:hp, :, :] = jnp.zeros((n, 1, wp, c), jnp.float32)
    pad_ref[:, 1:1 + h, 0:1, :] = jnp.zeros((n, h, 1, c), jnp.float32)
    pad_ref[:, 1:1 + h, wp - 1:wp, :] = jnp.zeros((n, h, 1, c), jnp.float32)

    # Conv1 (SAME) -> BN1 -> per-channel PReLU.  (Conv bias omitted: it is
    # exactly cancelled by training-mode BN's batch-mean subtraction.)
    pad_ref[:, 1:1 + h, 1:1 + w, :] = x_ref[...]
    y = _conv3x3_im2col(pad_ref, pat_ref, w1_ref, n, h, w)
    y = _batchnorm(y, g1_ref, be1_ref)
    y = jnp.where(y >= 0.0, y, a_ref[...] * y)

    # Conv2 (SAME) -> BN2 (reuses the padded scratch; halo still zero).
    pad_ref[:, 1:1 + h, 1:1 + w, :] = y.reshape(n, h, w, c)
    y2 = _conv3x3_im2col(pad_ref, pat_ref, w2_ref, n, h, w)
    y2 = _batchnorm(y2, g2_ref, be2_ref)

    # Residual: out = x + block(x)
    o_ref[...] = x_ref[...] + y2.reshape(n, h, w, c)


def _discriminator_kernel(x_ref, w_ref, g_ref, be_ref, o_ref, pat_ref):
    n, h, w, _ = x_ref.shape
    ho, wo = h - 2, w - 2
    c_out = w_ref.shape[-1]
    y = _conv3x3_im2col(x_ref, pat_ref, w_ref, n, ho, wo)   # VALID conv (pad=0)
    y = _batchnorm(y, g_ref, be_ref)
    y = jnp.where(y >= 0.0, y, 0.2 * y)                     # LeakyReLU(0.2)
    o_ref[...] = y.reshape(n, ho, wo, c_out)


# --------------------------------------------------------------------------
# Wrappers (glue: layout transpose, weight repack, VMEM sizing)
# --------------------------------------------------------------------------
def _prep_conv_weight(w_oihw):
    """(Cout, Cin, 3, 3) PyTorch layout -> (9*Cin, Cout) bf16 im2col weight."""
    c_out, c_in, kh, kw = w_oihw.shape
    return (jnp.transpose(w_oihw, (2, 3, 1, 0))
            .reshape(kh * kw * c_in, c_out).astype(jnp.bfloat16))


def _row(v):
    return v.reshape(1, -1).astype(jnp.float32)


def _vmem_limit_bytes(working_set_bytes):
    # Size the scoped VMEM limit from the real working set with 2x headroom for
    # compiler temporaries (defaults are only 16/32 MiB scoped); clamp below
    # v7x's 64 MiB physical VMEM.
    return int(min(max(2 * working_set_bytes, 32 * 1024 * 1024),
                   56 * 1024 * 1024))


@jax.jit
def conv_block_generator(x_nchw, params):
    # Conv biases are accepted for API parity but are mathematically cancelled
    # by training-mode BatchNorm, so they are not passed to the kernel.
    w1, _b1, g1, be1, alpha, w2, _b2, g2, be2 = params
    x = jnp.transpose(x_nchw, (0, 2, 3, 1)).astype(jnp.float32)   # NCHW -> NHWC
    n, h, w, c = x.shape
    work = (4 * n * h * w * c * 4                    # x, out, f32 temporaries
            + 4 * n * (h + 2) * (w + 2) * c          # padded scratch (f32)
            + 2 * n * h * w * 9 * c                  # im2col scratch (bf16)
            + 2 * 2 * 9 * c * c)                     # weights (bf16)
    out = pl.pallas_call(
        _generator_kernel,
        out_shape=jax.ShapeDtypeStruct((n, h, w, c), jnp.float32),
        in_specs=[pl.BlockSpec(memory_space=pltpu.MemorySpace.VMEM)] * 8,
        out_specs=pl.BlockSpec(memory_space=pltpu.MemorySpace.VMEM),
        scratch_shapes=[pltpu.VMEM((n, h + 2, w + 2, c), jnp.float32),
                        pltpu.VMEM((n, h, w, 9 * c), jnp.bfloat16)],
        compiler_params=pltpu.CompilerParams(
            vmem_limit_bytes=_vmem_limit_bytes(work)),
    )(x, _prep_conv_weight(w1), _row(g1), _row(be1), _row(alpha),
      _prep_conv_weight(w2), _row(g2), _row(be2))
    return jnp.transpose(out, (0, 3, 1, 2))                       # NHWC -> NCHW


@jax.jit
def conv_block_discriminator(x_nchw, params):
    w, _b, g, be = params
    x = jnp.transpose(x_nchw, (0, 2, 3, 1)).astype(jnp.float32)
    n, h, ww, c_in = x.shape
    c_out = w.shape[0]
    ho, wo = h - 2, ww - 2
    work = (4 * (n * h * ww * c_in + 3 * n * ho * wo * c_out)
            + 2 * n * ho * wo * 9 * c_in + 2 * 9 * c_in * c_out)
    out = pl.pallas_call(
        _discriminator_kernel,
        out_shape=jax.ShapeDtypeStruct((n, ho, wo, c_out), jnp.float32),
        in_specs=[pl.BlockSpec(memory_space=pltpu.MemorySpace.VMEM)] * 4,
        out_specs=pl.BlockSpec(memory_space=pltpu.MemorySpace.VMEM),
        scratch_shapes=[pltpu.VMEM((n, ho, wo, 9 * c_in), jnp.bfloat16)],
        compiler_params=pltpu.CompilerParams(
            vmem_limit_bytes=_vmem_limit_bytes(work)),
    )(x, _prep_conv_weight(w), _row(g), _row(be))
    return jnp.transpose(out, (0, 3, 1, 2))


# --------------------------------------------------------------------------
# Pure-JAX references (for correctness checking only; include the conv bias
# and HIGHEST-precision matmuls as the ground truth)
# --------------------------------------------------------------------------
def _ref_conv(z_nhwc, w_oihw, b, padding):
    wh = jnp.transpose(w_oihw, (2, 3, 1, 0))                # -> HWIO
    y = jax.lax.conv_general_dilated(
        z_nhwc, wh, (1, 1), padding,
        dimension_numbers=('NHWC', 'HWIO', 'NHWC'),
        precision=jax.lax.Precision.HIGHEST)
    return y + b


def _ref_bn(z, g, be):
    m = jnp.mean(z, axis=(0, 1, 2), keepdims=True)
    v = jnp.mean(jnp.square(z - m), axis=(0, 1, 2), keepdims=True)
    return (z - m) * jax.lax.rsqrt(v + _EPS) * g + be


def _ref_generator(x_nchw, params):
    w1, b1, g1, be1, alpha, w2, b2, g2, be2 = params
    x = jnp.transpose(x_nchw, (0, 2, 3, 1))
    y = _ref_bn(_ref_conv(x, w1, b1, 'SAME'), g1, be1)
    y = jnp.where(y >= 0.0, y, alpha * y)
    y = _ref_bn(_ref_conv(y, w2, b2, 'SAME'), g2, be2)
    return jnp.transpose(x + y, (0, 3, 1, 2))


def _ref_discriminator(x_nchw, params):
    w, b, g, be = params
    x = jnp.transpose(x_nchw, (0, 2, 3, 1))
    y = _ref_bn(_ref_conv(x, w, b, 'VALID'), g, be)
    y = jnp.where(y >= 0.0, y, 0.2 * y)
    return jnp.transpose(y, (0, 3, 1, 2))


# --------------------------------------------------------------------------
if __name__ == "__main__":
    key = jax.random.PRNGKey(0)
    ks = jax.random.split(key, 16)
    N, C, H, W = 2, 32, 8, 8     # generator: in_channel == out_channel == C

    def conv_init(k, c_out, c_in):
        kw_, kb_ = jax.random.split(k)
        scale = 1.0 / np.sqrt(c_in * 9)
        w = scale * jax.random.normal(kw_, (c_out, c_in, 3, 3), jnp.float32)
        b = scale * jax.random.normal(kb_, (c_out,), jnp.float32)
        return w, b

    # Generator parameters (deterministic, synthetic).
    w1, b1 = conv_init(ks[0], C, C)
    g1 = 1.0 + 0.1 * jax.random.normal(ks[1], (C,), jnp.float32)
    be1 = 0.1 * jax.random.normal(ks[2], (C,), jnp.float32)
    alpha = jnp.full((C,), 0.25, jnp.float32)               # nn.PReLU default init
    w2, b2 = conv_init(ks[3], C, C)
    g2 = 1.0 + 0.1 * jax.random.normal(ks[4], (C,), jnp.float32)
    be2 = 0.1 * jax.random.normal(ks[5], (C,), jnp.float32)
    gen_params = (w1, b1, g1, be1, alpha, w2, b2, g2, be2)

    x = jax.random.normal(ks[6], (N, C, H, W), jnp.float32)
    y_gen = jax.block_until_ready(conv_block_generator(x, gen_params))
    assert y_gen.shape == (N, C, H, W)
    # bf16 single-pass MXU conv vs f32 HIGHEST reference -> a few % tolerance.
    np.testing.assert_allclose(np.asarray(y_gen),
                               np.asarray(_ref_generator(x, gen_params)),
                               rtol=4e-2, atol=4e-2)

    # Discriminator path (isGenerator=False): Conv(pad=0) -> BN -> LeakyReLU(0.2).
    Hd, Wd, Cd_out = 10, 10, 64                             # in_channel != out_channel
    wd, bd = conv_init(ks[7], Cd_out, C)
    gd = 1.0 + 0.1 * jax.random.normal(ks[8], (Cd_out,), jnp.float32)
    bed = 0.1 * jax.random.normal(ks[9], (Cd_out,), jnp.float32)
    disc_params = (wd, bd, gd, bed)
    xd = jax.random.normal(ks[10], (N, C, Hd, Wd), jnp.float32)
    y_disc = jax.block_until_ready(conv_block_discriminator(xd, disc_params))
    assert y_disc.shape == (N, Cd_out, Hd - 2, Wd - 2)
    np.testing.assert_allclose(np.asarray(y_disc),
                               np.asarray(_ref_discriminator(xd, disc_params)),
                               rtol=4e-2, atol=4e-2)

    # TODO(synk): BatchNorm running-mean/var buffer updates (a training-mode side
    # effect in PyTorch) are not materialized; only the forward value is produced.
    print("KERNEL_OK")
</pallas_src>

<mosaic_0001>
module attributes {stable_mosaic.version = 11 : i64} {
  func.func @_generator_kernel(%arg0: memref<2x8x8x32xf32, #tpu.memory_space<vmem>>, %arg1: memref<288x32xbf16, #tpu.memory_space<vmem>>, %arg2: memref<1x32xf32, #tpu.memory_space<vmem>>, %arg3: memref<1x32xf32, #tpu.memory_space<vmem>>, %arg4: memref<1x32xf32, #tpu.memory_space<vmem>>, %arg5: memref<288x32xbf16, #tpu.memory_space<vmem>>, %arg6: memref<1x32xf32, #tpu.memory_space<vmem>>, %arg7: memref<1x32xf32, #tpu.memory_space<vmem>>, %arg8: memref<2x8x8x32xf32, #tpu.memory_space<vmem>>, %arg9: memref<2x10x10x32xf32, #tpu.memory_space<vmem>>, %arg10: memref<2x8x8x288xbf16, #tpu.memory_space<vmem>>) attributes {dimension_semantics = [], scalar_prefetch = 0 : i64, scratch_operands = 2 : i64, tpu.core_type = #tpu.core_type<tc>} {
    %cst = arith.constant 0.000000e+00 : f32
    %0 = vector.broadcast %cst : f32 to vector<2x1x10x32xf32>
    %c0 = arith.constant 0 : index
    %c0_0 = arith.constant 0 : index
    %c0_1 = arith.constant 0 : index
    %c0_2 = arith.constant 0 : index
    %1 = vector.load %arg9[%c0, %c0_0, %c0_1, %c0_2] : memref<2x10x10x32xf32, #tpu.memory_space<vmem>>, vector<2x1x10x32xf32>
    tpu.vector_store %arg9[%c0, %c0_0, %c0_1, %c0_2], %0 {strides = array<i32>} : memref<2x10x10x32xf32, #tpu.memory_space<vmem>>, vector<2x1x10x32xf32>,
    %cst_3 = arith.constant 0.000000e+00 : f32
    %2 = vector.broadcast %cst_3 : f32 to vector<2x1x10x32xf32>
    %c0_4 = arith.constant 0 : index
    %c9 = arith.constant 9 : index
    %c0_5 = arith.constant 0 : index
    %c0_6 = arith.constant 0 : index
    %3 = vector.load %arg9[%c0_4, %c9, %c0_5, %c0_6] : memref<2x10x10x32xf32, #tpu.memory_space<vmem>>, vector<2x1x10x32xf32>
    tpu.vector_store %arg9[%c0_4, %c9, %c0_5, %c0_6], %2 {strides = array<i32>} : memref<2x10x10x32xf32, #tpu.memory_space<vmem>>, vector<2x1x10x32xf32>,
    %cst_7 = arith.constant 0.000000e+00 : f32
    %4 = vector.broadcast %cst_7 : f32 to vector<2x8x1x32xf32>
    %c0_8 = arith.constant 0 : index
    %c1 = arith.constant 1 : index
    %c0_9 = arith.constant 0 : index
    %c0_10 = arith.constant 0 : index
    %5 = vector.load %arg9[%c0_8, %c1, %c0_9, %c0_10] : memref<2x10x10x32xf32, #tpu.memory_space<vmem>>, vector<2x8x1x32xf32>
    tpu.vector_store %arg9[%c0_8, %c1, %c0_9, %c0_10], %4 {strides = array<i32>} : memref<2x10x10x32xf32, #tpu.memory_space<vmem>>, vector<2x8x1x32xf32>,
    %cst_11 = arith.constant 0.000000e+00 : f32
    %6 = vector.broadcast %cst_11 : f32 to vector<2x8x1x32xf32>
    %c0_12 = arith.constant 0 : index
    %c1_13 = arith.constant 1 : index
    %c9_14 = arith.constant 9 : index
    %c0_15 = arith.constant 0 : index
    %7 = vector.load %arg9[%c0_12, %c1_13, %c9_14, %c0_15] : memref<2x10x10x32xf32, #tpu.memory_space<vmem>>, vector<2x8x1x32xf32>
    tpu.vector_store %arg9[%c0_12, %c1_13, %c9_14, %c0_15], %6 {strides = array<i32>} : memref<2x10x10x32xf32, #tpu.memory_space<vmem>>, vector<2x8x1x32xf32>,
    %c0_16 = arith.constant 0 : index
    %c0_17 = arith.constant 0 : index
    %c0_18 = arith.constant 0 : index
    %c0_19 = arith.constant 0 : index
    %8 = vector.load %arg0[%c0_16, %c0_17, %c0_18, %c0_19] : memref<2x8x8x32xf32, #tpu.memory_space<vmem>>, vector<2x8x8x32xf32>
    %c0_20 = arith.constant 0 : index
    %c1_21 = arith.constant 1 : index
    %c1_22 = arith.constant 1 : index
    %c0_23 = arith.constant 0 : index
    %9 = vector.load %arg9[%c0_20, %c1_21, %c1_22, %c0_23] : memref<2x10x10x32xf32, #tpu.memory_space<vmem>>, vector<2x8x8x32xf32>
    tpu.vector_store %arg9[%c0_20, %c1_21, %c1_22, %c0_23], %8 {strides = array<i32>} : memref<2x10x10x32xf32, #tpu.memory_space<vmem>>, vector<2x8x8x32xf32>,
    %c0_24 = arith.constant 0 : index
    %c0_25 = arith.constant 0 : index
    %c0_26 = arith.constant 0 : index
    %c0_27 = arith.constant 0 : index
    %10 = vector.load %arg9[%c0_24, %c0_25, %c0_26, %c0_27] : memref<2x10x10x32xf32, #tpu.memory_space<vmem>>, vector<2x8x8x32xf32>
    %11 = arith.truncf %10 : vector<2x8x8x32xf32> to vector<2x8x8x32xbf16>
    %c0_28 = arith.constant 0 : index
    %c0_29 = arith.constant 0 : index
    %c0_30 = arith.constant 0 : index
    %c0_31 = arith.constant 0 : index
    %12 = vector.load %arg10[%c0_28, %c0_29, %c0_30, %c0_31] : memref<2x8x8x288xbf16, #tpu.memory_space<vmem>>, vector<2x8x8x32xbf16>
    tpu.vector_store %arg10[%c0_28, %c0_29, %c0_30, %c0_31], %11 {strides = array<i32>} : memref<2x8x8x288xbf16, #tpu.memory_space<vmem>>, vector<2x8x8x32xbf16>,
    %c0_32 = arith.constant 0 : index
    %c0_33 = arith.constant 0 : index
    %c1_34 = arith.constant 1 : index
    %c0_35 = arith.constant 0 : index
    %13 = vector.load %arg9[%c0_32, %c0_33, %c1_34, %c0_35] : memref<2x10x10x32xf32, #tpu.memory_space<vmem>>, vector<2x8x8x32xf32>
    %14 = arith.truncf %13 : vector<2x8x8x32xf32> to vector<2x8x8x32xbf16>
    %c0_36 = arith.constant 0 : index
    %c0_37 = arith.constant 0 : index
    %c0_38 = arith.constant 0 : index
    %c32 = arith.constant 32 : index
    %15 = vector.load %arg10[%c0_36, %c0_37, %c0_38, %c32] : memref<2x8x8x288xbf16, #tpu.memory_space<vmem>>, vector<2x8x8x32xbf16>
    tpu.vector_store %arg10[%c0_36, %c0_37, %c0_38, %c32], %14 {strides = array<i32>} : memref<2x8x8x288xbf16, #tpu.memory_space<vmem>>, vector<2x8x8x32xbf16>,
    %c0_39 = arith.constant 0 : index
    %c0_40 = arith.constant 0 : index
    %c2 = arith.constant 2 : index
    %c0_41 = arith.constant 0 : index
    %16 = vector.load %arg9[%c0_39, %c0_40, %c2, %c0_41] : memref<2x10x10x32xf32, #tpu.memory_space<vmem>>, vector<2x8x8x32xf32>
    %17 = arith.truncf %16 : vector<2x8x8x32xf32> to vector<2x8x8x32xbf16>
    %c0_42 = arith.constant 0 : index
    %c0_43 = arith.constant 0 : index
    %c0_44 = arith.constant 0 : index
    %c64 = arith.constant 64 : index
    %18 = vector.load %arg10[%c0_42, %c0_43, %c0_44, %c64] : memref<2x8x8x288xbf16, #tpu.memory_space<vmem>>, vector<2x8x8x32xbf16>
    tpu.vector_store %arg10[%c0_42, %c0_43, %c0_44, %c64], %17 {strides = array<i32>} : memref<2x8x8x288xbf16, #tpu.memory_space<vmem>>, vector<2x8x8x32xbf16>,
    %c0_45 = arith.constant 0 : index
    %c1_46 = arith.constant 1 : index
    %c0_47 = arith.constant 0 : index
    %c0_48 = arith.constant 0 : index
    %19 = vector.load %arg9[%c0_45, %c1_46, %c0_47, %c0_48] : memref<2x10x10x32xf32, #tpu.memory_space<vmem>>, vector<2x8x8x32xf32>
    %20 = arith.truncf %19 : vector<2x8x8x32xf32> to vector<2x8x8x32xbf16>
    %c0_49 = arith.constant 0 : index
    %c0_50 = arith.constant 0 : index
    %c0_51 = arith.constant 0 : index
    %c96 = arith.constant 96 : index
    %21 = vector.load %arg10[%c0_49, %c0_50, %c0_51, %c96] : memref<2x8x8x288xbf16, #tpu.memory_space<vmem>>, vector<2x8x8x32xbf16>
    tpu.vector_store %arg10[%c0_49, %c0_50, %c0_51, %c96], %20 {strides = array<i32>} : memref<2x8x8x288xbf16, #tpu.memory_space<vmem>>, vector<2x8x8x32xbf16>,
    %c0_52 = arith.constant 0 : index
    %c1_53 = arith.constant 1 : index
    %c1_54 = arith.constant 1 : index
    %c0_55 = arith.constant 0 : index
    %22 = vector.load %arg9[%c0_52, %c1_53, %c1_54, %c0_55] : memref<2x10x10x32xf32, #tpu.memory_space<vmem>>, vector<2x8x8x32xf32>
    %23 = arith.truncf %22 : vector<2x8x8x32xf32> to vector<2x8x8x32xbf16>
    %c0_56 = arith.constant 0 : index
    %c0_57 = arith.constant 0 : index
    %c0_58 = arith.constant 0 : index
    %c128 = arith.constant 128 : index
    %24 = vector.load %arg10[%c0_56, %c0_57, %c0_58, %c128] : memref<2x8x8x288xbf16, #tpu.memory_space<vmem>>, vector<2x8x8x32xbf16>
    tpu.vector_store %arg10[%c0_56, %c0_57, %c0_58, %c128], %23 {strides = array<i32>} : memref<2x8x8x288xbf16, #tpu.memory_space<vmem>>, vector<2x8x8x32xbf16>,
    %c0_59 = arith.constant 0 : index
    %c1_60 = arith.constant 1 : index
    %c2_61 = arith.constant 2 : index
    %c0_62 = arith.constant 0 : index
    %25 = vector.load %arg9[%c0_59, %c1_60, %c2_61, %c0_62] : memref<2x10x10x32xf32, #tpu.memory_space<vmem>>, vector<2x8x8x32xf32>
    %26 = arith.truncf %25 : vector<2x8x8x32xf32> to vector<2x8x8x32xbf16>
    %c0_63 = arith.constant 0 : index
    %c0_64 = arith.constant 0 : index
    %c0_65 = arith.constant 0 : index
    %c160 = arith.constant 160 : index
    %27 = vector.load %arg10[%c0_63, %c0_64, %c0_65, %c160] : memref<2x8x8x288xbf16, #tpu.memory_space<vmem>>, vector<2x8x8x32xbf16>
    tpu.vector_store %arg10[%c0_63, %c0_64, %c0_65, %c160], %26 {strides = array<i32>} : memref<2x8x8x288xbf16, #tpu.memory_space<vmem>>, vector<2x8x8x32xbf16>,
    %c0_66 = arith.constant 0 : index
    %c2_67 = arith.constant 2 : index
    %c0_68 = arith.constant 0 : index
    %c0_69 = arith.constant 0 : index
    %28 = vector.load %arg9[%c0_66, %c2_67, %c0_68, %c0_69] : memref<2x10x10x32xf32, #tpu.memory_space<vmem>>, vector<2x8x8x32xf32>
    %29 = arith.truncf %28 : vector<2x8x8x32xf32> to vector<2x8x8x32xbf16>
    %c0_70 = arith.constant 0 : index
    %c0_71 = arith.constant 0 : index
    %c0_72 = arith.constant 0 : index
    %c192 = arith.constant 192 : index
    %30 = vector.load %arg10[%c0_70, %c0_71, %c0_72, %c192] : memref<2x8x8x288xbf16, #tpu.memory_space<vmem>>, vector<2x8x8x32xbf16>
    tpu.vector_store %arg10[%c0_70, %c0_71, %c0_72, %c192], %29 {strides = array<i32>} : memref<2x8x8x288xbf16, #tpu.memory_space<vmem>>, vector<2x8x8x32xbf16>,
    %c0_73 = arith.constant 0 : index
    %c2_74 = arith.constant 2 : index
    %c1_75 = arith.constant 1 : index
    %c0_76 = arith.constant 0 : index
    %31 = vector.load %arg9[%c0_73, %c2_74, %c1_75, %c0_76] : memref<2x10x10x32xf32, #tpu.memory_space<vmem>>, vector<2x8x8x32xf32>
    %32 = arith.truncf %31 : vector<2x8x8x32xf32> to vector<2x8x8x32xbf16>
    %c0_77 = arith.constant 0 : index
    %c0_78 = arith.constant 0 : index
    %c0_79 = arith.constant 0 : index
    %c224 = arith.constant 224 : index
    %33 = vector.load %arg10[%c0_77, %c0_78, %c0_79, %c224] : memref<2x8x8x288xbf16, #tpu.memory_space<vmem>>, vector<2x8x8x32xbf16>
    tpu.vector_store %arg10[%c0_77, %c0_78, %c0_79, %c224], %32 {strides = array<i32>} : memref<2x8x8x288xbf16, #tpu.memory_space<vmem>>, vector<2x8x8x32xbf16>,
    %c0_80 = arith.constant 0 : index
    %c2_81 = arith.constant 2 : index
    %c2_82 = arith.constant 2 : index
    %c0_83 = arith.constant 0 : index
    %34 = vector.load %arg9[%c0_80, %c2_81, %c2_82, %c0_83] : memref<2x10x10x32xf32, #tpu.memory_space<vmem>>, vector<2x8x8x32xf32>
    %35 = arith.truncf %34 : vector<2x8x8x32xf32> to vector<2x8x8x32xbf16>
    %c0_84 = arith.constant 0 : index
    %c0_85 = arith.constant 0 : index
    %c0_86 = arith.constant 0 : index
    %c256 = arith.constant 256 : index
    %36 = vector.load %arg10[%c0_84, %c0_85, %c0_86, %c256] : memref<2x8x8x288xbf16, #tpu.memory_space<vmem>>, vector<2x8x8x32xbf16>
    tpu.vector_store %arg10[%c0_84, %c0_85, %c0_86, %c256], %35 {strides = array<i32>} : memref<2x8x8x288xbf16, #tpu.memory_space<vmem>>, vector<2x8x8x32xbf16>,
    %c0_87 = arith.constant 0 : index
    %c0_88 = arith.constant 0 : index
    %c0_89 = arith.constant 0 : index
    %c0_90 = arith.constant 0 : index
    %37 = vector.load %arg10[%c0_87, %c0_88, %c0_89, %c0_90] : memref<2x8x8x288xbf16, #tpu.memory_space<vmem>>, vector<2x8x8x288xbf16>
    %38 = vector.shape_cast %37 : vector<2x8x8x288xbf16> to vector<128x288xbf16>
    %c0_91 = arith.constant 0 : index
    %c0_92 = arith.constant 0 : index
    %39 = vector.load %arg1[%c0_91, %c0_92] : memref<288x32xbf16, #tpu.memory_space<vmem>>, vector<288x32xbf16>
    %cst_93 = arith.constant dense<0.000000e+00> : vector<128x32xf32>
    %40 = tpu.matmul %38, %39, %cst_93 {dimension_numbers = #tpu.dot_dimension_numbers<[1], [0], [0], [1], [0, 0, 1, 1], [], []>} : vector<128x288xbf16>, vector<288x32xbf16>, vector<128x32xf32> -> vector<128x32xf32>
    %cst_94 = arith.constant dense<0.000000e+00> : vector<32xf32>
    %41 = vector.multi_reduction <add>, %40, %cst_94 [0] : vector<128x32xf32> to vector<32xf32>
    %42 = vector.shape_cast %41 : vector<32xf32> to vector<1x32xf32>
    %43 = arith.mulf %40, %40 : vector<128x32xf32>
    %cst_95 = arith.constant dense<0.000000e+00> : vector<32xf32>
    %44 = vector.multi_reduction <add>, %43, %cst_95 [0] : vector<128x32xf32> to vector<32xf32>
    %45 = vector.shape_cast %44 : vector<32xf32> to vector<1x32xf32>
    %cst_96 = arith.constant 7.812500e-03 : f32
    %46 = vector.broadcast %cst_96 : f32 to vector<1x32xf32>
    %47 = arith.mulf %42, %46 : vector<1x32xf32>
    %cst_97 = arith.constant 7.812500e-03 : f32
    %48 = vector.broadcast %cst_97 : f32 to vector<1x32xf32>
    %49 = arith.mulf %45, %48 : vector<1x32xf32>
    %50 = arith.mulf %47, %47 : vector<1x32xf32>
    %51 = arith.subf %49, %50 : vector<1x32xf32>
    %cst_98 = arith.constant 9.99999974E-6 : f32
    %52 = vector.broadcast %cst_98 : f32 to vector<1x32xf32>
    %53 = arith.addf %51, %52 : vector<1x32xf32>
    %54 = math.rsqrt %53 : vector<1x32xf32>
    %c0_99 = arith.constant 0 : index
    %c0_100 = arith.constant 0 : index
    %55 = vector.load %arg2[%c0_99, %c0_100] : memref<1x32xf32, #tpu.memory_space<vmem>>, vector<1x32xf32>
    %56 = arith.mulf %54, %55 : vector<1x32xf32>
    %c0_101 = arith.constant 0 : index
    %c0_102 = arith.constant 0 : index
    %57 = vector.load %arg3[%c0_101, %c0_102] : memref<1x32xf32, #tpu.memory_space<vmem>>, vector<1x32xf32>
    %58 = arith.mulf %47, %56 : vector<1x32xf32>
    %59 = arith.subf %57, %58 : vector<1x32xf32>
    %60 = vector.broadcast %56 : vector<1x32xf32> to vector<128x32xf32>
    %61 = arith.mulf %40, %60 : vector<128x32xf32>
    %62 = vector.broadcast %59 : vector<1x32xf32> to vector<128x32xf32>
    %63 = arith.addf %61, %62 : vector<128x32xf32>
    %cst_103 = arith.constant 0.000000e+00 : f32
    %64 = vector.broadcast %cst_103 : f32 to vector<128x32xf32>
    %65 = arith.cmpf oge, %63, %64 : vector<128x32xf32>
    %c0_104 = arith.constant 0 : index
    %c0_105 = arith.constant 0 : index
    %66 = vector.load %arg4[%c0_104, %c0_105] : memref<1x32xf32, #tpu.memory_space<vmem>>, vector<1x32xf32>
    %67 = vector.broadcast %66 : vector<1x32xf32> to vector<128x32xf32>
    %68 = arith.mulf %67, %63 : vector<128x32xf32>
    %69 = arith.select %65, %63, %68 : vector<128x32xi1>, vector<128x32xf32>
    %70 = vector.shape_cast %69 : vector<128x32xf32> to vector<2x8x8x32xf32>
    %c0_106 = arith.constant 0 : index
    %c1_107 = arith.constant 1 : index
    %c1_108 = arith.constant 1 : index
    %c0_109 = arith.constant 0 : index
    %71 = vector.load %arg9[%c0_106, %c1_107, %c1_108, %c0_109] : memref<2x10x10x32xf32, #tpu.memory_space<vmem>>, vector<2x8x8x32xf32>
    tpu.vector_store %arg9[%c0_106, %c1_107, %c1_108, %c0_109], %70 {strides = array<i32>} : memref<2x10x10x32xf32, #tpu.memory_space<vmem>>, vector<2x8x8x32xf32>,
    %c0_110 = arith.constant 0 : index
    %c0_111 = arith.constant 0 : index
    %c0_112 = arith.constant 0 : index
    %c0_113 = arith.constant 0 : index
    %72 = vector.load %arg9[%c0_110, %c0_111, %c0_112, %c0_113] : memref<2x10x10x32xf32, #tpu.memory_space<vmem>>, vector<2x8x8x32xf32>
    %73 = arith.truncf %72 : vector<2x8x8x32xf32> to vector<2x8x8x32xbf16>
    %c0_114 = arith.constant 0 : index
    %c0_115 = arith.constant 0 : index
    %c0_116 = arith.constant 0 : index
    %c0_117 = arith.constant 0 : index
    %74 = vector.load %arg10[%c0_114, %c0_115, %c0_116, %c0_117] : memref<2x8x8x288xbf16, #tpu.memory_space<vmem>>, vector<2x8x8x32xbf16>
    tpu.vector_store %arg10[%c0_114, %c0_115, %c0_116, %c0_117], %73 {strides = array<i32>} : memref<2x8x8x288xbf16, #tpu.memory_space<vmem>>, vector<2x8x8x32xbf16>,
    %c0_118 = arith.constant 0 : index
    %c0_119 = arith.constant 0 : index
    %c1_120 = arith.constant 1 : index
    %c0_121 = arith.constant 0 : index
    %75 = vector.load %arg9[%c0_118, %c0_119, %c1_120, %c0_121] : memref<2x10x10x32xf32, #tpu.memory_space<vmem>>, vector<2x8x8x32xf32>
    %76 = arith.truncf %75 : vector<2x8x8x32xf32> to vector<2x8x8x32xbf16>
    %c0_122 = arith.constant 0 : index
    %c0_123 = arith.constant 0 : index
    %c0_124 = arith.constant 0 : index
    %c32_125 = arith.constant 32 : index
    %77 = vector.load %arg10[%c0_122, %c0_123, %c0_124, %c32_125] : memref<2x8x8x288xbf16, #tpu.memory_space<vmem>>, vector<2x8x8x32xbf16>
    tpu.vector_store %arg10[%c0_122, %c0_123, %c0_124, %c32_125], %76 {strides = array<i32>} : memref<2x8x8x288xbf16, #tpu.memory_space<vmem>>, vector<2x8x8x32xbf16>,
    %c0_126 = arith.constant 0 : index
    %c0_127 = arith.constant 0 : index
    %c2_128 = arith.constant 2 : index
    %c0_129 = arith.constant 0 : index
    %78 = vector.load %arg9[%c0_126, %c0_127, %c2_128, %c0_129] : memref<2x10x10x32xf32, #tpu.memory_space<vmem>>, vector<2x8x8x32xf32>
    %79 = arith.truncf %78 : vector<2x8x8x32xf32> to vector<2x8x8x32xbf16>
    %c0_130 = arith.constant 0 : index
    %c0_131 = arith.constant 0 : index
    %c0_132 = arith.constant 0 : index
    %c64_133 = arith.constant 64 : index
    %80 = vector.load %arg10[%c0_130, %c0_131, %c0_132, %c64_133] : memref<2x8x8x288xbf16, #tpu.memory_space<vmem>>, vector<2x8x8x32xbf16>
    tpu.vector_store %arg10[%c0_130, %c0_131, %c0_132, %c64_133], %79 {strides = array<i32>} : memref<2x8x8x288xbf16, #tpu.memory_space<vmem>>, vector<2x8x8x32xbf16>,
    %c0_134 = arith.constant 0 : index
    %c1_135 = arith.constant 1 : index
    %c0_136 = arith.constant 0 : index
    %c0_137 = arith.constant 0 : index
    %81 = vector.load %arg9[%c0_134, %c1_135, %c0_136, %c0_137] : memref<2x10x10x32xf32, #tpu.memory_space<vmem>>, vector<2x8x8x32xf32>
    %82 = arith.truncf %81 : vector<2x8x8x32xf32> to vector<2x8x8x32xbf16>
    %c0_138 = arith.constant 0 : index
    %c0_139 = arith.constant 0 : index
    %c0_140 = arith.constant 0 : index
    %c96_141 = arith.constant 96 : index
    %83 = vector.load %arg10[%c0_138, %c0_139, %c0_140, %c96_141] : memref<2x8x8x288xbf16, #tpu.memory_space<vmem>>, vector<2x8x8x32xbf16>
    tpu.vector_store %arg10[%c0_138, %c0_139, %c0_140, %c96_141], %82 {strides = array<i32>} : memref<2x8x8x288xbf16, #tpu.memory_space<vmem>>, vector<2x8x8x32xbf16>,
    %c0_142 = arith.constant 0 : index
    %c1_143 = arith.constant 1 : index
    %c1_144 = arith.constant 1 : index
    %c0_145 = arith.constant 0 : index
    %84 = vector.load %arg9[%c0_142, %c1_143, %c1_144, %c0_145] : memref<2x10x10x32xf32, #tpu.memory_space<vmem>>, vector<2x8x8x32xf32>
    %85 = arith.truncf %84 : vector<2x8x8x32xf32> to vector<2x8x8x32xbf16>
    %c0_146 = arith.constant 0 : index
    %c0_147 = arith.constant 0 : index
    %c0_148 = arith.constant 0 : index
    %c128_149 = arith.constant 128 : index
    %86 = vector.load %arg10[%c0_146, %c0_147, %c0_148, %c128_149] : memref<2x8x8x288xbf16, #tpu.memory_space<vmem>>, vector<2x8x8x32xbf16>
    tpu.vector_store %arg10[%c0_146, %c0_147, %c0_148, %c128_149], %85 {strides = array<i32>} : memref<2x8x8x288xbf16, #tpu.memory_space<vmem>>, vector<2x8x8x32xbf16>,
    %c0_150 = arith.constant 0 : index
    %c1_151 = arith.constant 1 : index
    %c2_152 = arith.constant 2 : index
    %c0_153 = arith.constant 0 : index
    %87 = vector.load %arg9[%c0_150, %c1_151, %c2_152, %c0_153] : memref<2x10x10x32xf32, #tpu.memory_space<vmem>>, vector<2x8x8x32xf32>
    %88 = arith.truncf %87 : vector<2x8x8x32xf32> to vector<2x8x8x32xbf16>
    %c0_154 = arith.constant 0 : index
    %c0_155 = arith.constant 0 : index
    %c0_156 = arith.constant 0 : index
    %c160_157 = arith.constant 160 : index
    %89 = vector.load %arg10[%c0_154, %c0_155, %c0_156, %c160_157] : memref<2x8x8x288xbf16, #tpu.memory_space<vmem>>, vector<2x8x8x32xbf16>
    tpu.vector_store %arg10[%c0_154, %c0_155, %c0_156, %c160_157], %88 {strides = array<i32>} : memref<2x8x8x288xbf16, #tpu.memory_space<vmem>>, vector<2x8x8x32xbf16>,
    %c0_158 = arith.constant 0 : index
    %c2_159 = arith.constant 2 : index
    %c0_160 = arith.constant 0 : index
    %c0_161 = arith.constant 0 : index
    %90 = vector.load %arg9[%c0_158, %c2_159, %c0_160, %c0_161] : memref<2x10x10x32xf32, #tpu.memory_space<vmem>>, vector<2x8x8x32xf32>
    %91 = arith.truncf %90 : vector<2x8x8x32xf32> to vector<2x8x8x32xbf16>
    %c0_162 = arith.constant 0 : index
    %c0_163 = arith.constant 0 : index
    %c0_164 = arith.constant 0 : index
    %c192_165 = arith.constant 192 : index
    %92 = vector.load %arg10[%c0_162, %c0_163, %c0_164, %c192_165] : memref<2x8x8x288xbf16, #tpu.memory_space<vmem>>, vector<2x8x8x32xbf16>
    tpu.vector_store %arg10[%c0_162, %c0_163, %c0_164, %c192_165], %91 {strides = array<i32>} : memref<2x8x8x288xbf16, #tpu.memory_space<vmem>>, vector<2x8x8x32xbf16>,
    %c0_166 = arith.constant 0 : index
    %c2_167 = arith.constant 2 : index
    %c1_168 = arith.constant 1 : index
    %c0_169 = arith.constant 0 : index
    %93 = vector.load %arg9[%c0_166, %c2_167, %c1_168, %c0_169] : memref<2x10x10x32xf32, #tpu.memory_space<vmem>>, vector<2x8x8x32xf32>
    %94 = arith.truncf %93 : vector<2x8x8x32xf32> to vector<2x8x8x32xbf16>
    %c0_170 = arith.constant 0 : index
    %c0_171 = arith.constant 0 : index
    %c0_172 = arith.constant 0 : index
    %c224_173 = arith.constant 224 : index
    %95 = vector.load %arg10[%c0_170, %c0_171, %c0_172, %c224_173] : memref<2x8x8x288xbf16, #tpu.memory_space<vmem>>, vector<2x8x8x32xbf16>
    tpu.vector_store %arg10[%c0_170, %c0_171, %c0_172, %c224_173], %94 {strides = array<i32>} : memref<2x8x8x288xbf16, #tpu.memory_space<vmem>>, vector<2x8x8x32xbf16>,
    %c0_174 = arith.constant 0 : index
    %c2_175 = arith.constant 2 : index
    %c2_176 = arith.constant 2 : index
    %c0_177 = arith.constant 0 : index
    %96 = vector.load %arg9[%c0_174, %c2_175, %c2_176, %c0_177] : memref<2x10x10x32xf32, #tpu.memory_space<vmem>>, vector<2x8x8x32xf32>
    %97 = arith.truncf %96 : vector<2x8x8x32xf32> to vector<2x8x8x32xbf16>
    %c0_178 = arith.constant 0 : index
    %c0_179 = arith.constant 0 : index
    %c0_180 = arith.constant 0 : index
    %c256_181 = arith.constant 256 : index
    %98 = vector.load %arg10[%c0_178, %c0_179, %c0_180, %c256_181] : memref<2x8x8x288xbf16, #tpu.memory_space<vmem>>, vector<2x8x8x32xbf16>
    tpu.vector_store %arg10[%c0_178, %c0_179, %c0_180, %c256_181], %97 {strides = array<i32>} : memref<2x8x8x288xbf16, #tpu.memory_space<vmem>>, vector<2x8x8x32xbf16>,
    %c0_182 = arith.constant 0 : index
    %c0_183 = arith.constant 0 : index
    %c0_184 = arith.constant 0 : index
    %c0_185 = arith.constant 0 : index
    %99 = vector.load %arg10[%c0_182, %c0_183, %c0_184, %c0_185] : memref<2x8x8x288xbf16, #tpu.memory_space<vmem>>, vector<2x8x8x288xbf16>
    %100 = vector.shape_cast %99 : vector<2x8x8x288xbf16> to vector<128x288xbf16>
    %c0_186 = arith.constant 0 : index
    %c0_187 = arith.constant 0 : index
    %101 = vector.load %arg5[%c0_186, %c0_187] : memref<288x32xbf16, #tpu.memory_space<vmem>>, vector<288x32xbf16>
    %cst_188 = arith.constant dense<0.000000e+00> : vector<128x32xf32>
    %102 = tpu.matmul %100, %101, %cst_188 {dimension_numbers = #tpu.dot_dimension_numbers<[1], [0], [0], [1], [0, 0, 1, 1], [], []>} : vector<128x288xbf16>, vector<288x32xbf16>, vector<128x32xf32> -> vector<128x32xf32>
    %cst_189 = arith.constant dense<0.000000e+00> : vector<32xf32>
    %103 = vector.multi_reduction <add>, %102, %cst_189 [0] : vector<128x32xf32> to vector<32xf32>
    %104 = vector.shape_cast %103 : vector<32xf32> to vector<1x32xf32>
    %105 = arith.mulf %102, %102 : vector<128x32xf32>
    %cst_190 = arith.constant dense<0.000000e+00> : vector<32xf32>
    %106 = vector.multi_reduction <add>, %105, %cst_190 [0] : vector<128x32xf32> to vector<32xf32>
    %107 = vector.shape_cast %106 : vector<32xf32> to vector<1x32xf32>
    %cst_191 = arith.constant 7.812500e-03 : f32
    %108 = vector.broadcast %cst_191 : f32 to vector<1x32xf32>
    %109 = arith.mulf %104, %108 : vector<1x32xf32>
    %cst_192 = arith.constant 7.812500e-03 : f32
    %110 = vector.broadcast %cst_192 : f32 to vector<1x32xf32>
    %111 = arith.mulf %107, %110 : vector<1x32xf32>
    %112 = arith.mulf %109, %109 : vector<1x32xf32>
    %113 = arith.subf %111, %112 : vector<1x32xf32>
    %cst_193 = arith.constant 9.99999974E-6 : f32
    %114 = vector.broadcast %cst_193 : f32 to vector<1x32xf32>
    %115 = arith.addf %113, %114 : vector<1x32xf32>
    %116 = math.rsqrt %115 : vector<1x32xf32>
    %c0_194 = arith.constant 0 : index
    %c0_195 = arith.constant 0 : index
    %117 = vector.load %arg6[%c0_194, %c0_195] : memref<1x32xf32, #tpu.memory_space<vmem>>, vector<1x32xf32>
    %118 = arith.mulf %116, %117 : vector<1x32xf32>
    %c0_196 = arith.constant 0 : index
    %c0_197 = arith.constant 0 : index
    %119 = vector.load %arg7[%c0_196, %c0_197] : memref<1x32xf32, #tpu.memory_space<vmem>>, vector<1x32xf32>
    %120 = arith.mulf %109, %118 : vector<1x32xf32>
    %121 = arith.subf %119, %120 : vector<1x32xf32>
    %122 = vector.broadcast %118 : vector<1x32xf32> to vector<128x32xf32>
    %123 = arith.mulf %102, %122 : vector<128x32xf32>
    %124 = vector.broadcast %121 : vector<1x32xf32> to vector<128x32xf32>
    %125 = arith.addf %123, %124 : vector<128x32xf32>
    %c0_198 = arith.constant 0 : index
    %c0_199 = arith.constant 0 : index
    %c0_200 = arith.constant 0 : index
    %c0_201 = arith.constant 0 : index
    %126 = vector.load %arg0[%c0_198, %c0_199, %c0_200, %c0_201] : memref<2x8x8x32xf32, #tpu.memory_space<vmem>>, vector<2x8x8x32xf32>
    %127 = vector.shape_cast %125 : vector<128x32xf32> to vector<2x8x8x32xf32>
    %128 = arith.addf %126, %127 : vector<2x8x8x32xf32>
    %c0_202 = arith.constant 0 : index
    %c0_203 = arith.constant 0 : index
    %c0_204 = arith.constant 0 : index
    %c0_205 = arith.constant 0 : index
    %129 = vector.load %arg8[%c0_202, %c0_203, %c0_204, %c0_205] : memref<2x8x8x32xf32, #tpu.memory_space<vmem>>, vector<2x8x8x32xf32>
    tpu.vector_store %arg8[%c0_202, %c0_203, %c0_204, %c0_205], %128 {strides = array<i32>} : memref<2x8x8x32xf32, #tpu.memory_space<vmem>>, vector<2x8x8x32xf32>,
    return
  }
}

</mosaic_0001>

<llo_original>
// kernel: conv_block_generator.1
$region0: #{conv_block_generator.1}
  #allocation0 [shape = 'u32[]', space=smem, size = 0x4, offset = 0x4, fixed_abs, tag = 'smem constant byte address 0x4 - core index']
  #allocation1 [shape = 'u32[72,128]{1,0:T(1,128)}', space=vmem, size = 0x9000, scoped, tag = 'internal scratch']
  #allocation2 [shape = 'f32[2,10,10,32]{3,2,1,0:T(8,128)}', space=vmem, size = 0x28000, scoped, tag = 'scratch operand']
  #allocation3 [shape = 'bf16[2,8,8,288]{3,2,1,0:T(8,128)(2,1)}', space=vmem, size = 0x18000, scoped, tag = 'scratch operand']
  %s0 = inlined_call_operand.vmem [shape: f32[2,8,8,32], index: 0, kind: input, shape index: {}]
  %s1 = inlined_call_operand.vmem [shape: bf16[288,32], index: 1, kind: input, shape index: {}]
  %s2 = inlined_call_operand.vmem [shape: f32[1,32], index: 2, kind: input, shape index: {}]
  %s3 = inlined_call_operand.vmem [shape: f32[1,32], index: 3, kind: input, shape index: {}]
  %s4 = inlined_call_operand.vmem [shape: f32[1,32], index: 4, kind: input, shape index: {}]
  %s5 = inlined_call_operand.vmem [shape: bf16[288,32], index: 5, kind: input, shape index: {}]
  %s6 = inlined_call_operand.vmem [shape: f32[1,32], index: 6, kind: input, shape index: {}]
  %s7 = inlined_call_operand.vmem [shape: f32[1,32], index: 7, kind: input, shape index: {}]
  %s8 = inlined_call_operand.hbm [shape: f32[2,8,8,32], index: 8, kind: output, shape index: {}]
  %s9 = sld [smem:[#allocation0]]
  $region42: #{conv_block_generator.1} parent=0
    _
  %s11 = ssub.s32 1, %s9
  %s12 = scalar_select 0, %s11, %s9
  $region1: #{conv_block_generator.1} parent=0
    #allocation4 [shape = 'u8[65536]{0}', space=vmem, size = 0x10000, scoped, tag = 'output window, operand 0, single buffered']
    #allocation5 [shape = 's32[1]{0}', space=sflag, size = 0x4, scoped, tag = 'scoped memory for conv_block_generator.1']
    %13 = vsyncpa [#allocation5], 0
    // Predicated region
    $region2: #{conv_block_generator.1} parent=1 // pred_check
      _
    $region3: #{conv_block_generator.1} parent=1 // pred_check_branch
      %15 = sbr.rel (0) target = $region5
    $region4: #{conv_block_generator.1} parent=1 // pred_region
      _
    $region5: #{conv_block_generator.1} parent=1 // pred_fallthru
      _
    // Predicated region
    $region6: #{conv_block_generator.1} parent=1 // pred_check
      _
    $region7: #{conv_block_generator.1} parent=1 // pred_check_branch
      %17 = sbr.rel (0) target = $region9
    $region8: #{conv_block_generator.1} parent=1 // pred_region
      _
    $region9: #{conv_block_generator.1} parent=1 // pred_fallthru
      _
    // Predicated region
    $region10: #{conv_block_generator.1} parent=1 // pred_check
      _
    $region11: #{conv_block_generator.1} parent=1 // pred_check_branch
      %19 = sbr.rel (0) target = $region13
    $region12: #{conv_block_generator.1} parent=1 // pred_region
      _
    $region13: #{conv_block_generator.1} parent=1 // pred_fallthru
      _
    // Predicated region
    $region14: #{conv_block_generator.1} parent=1 // pred_check
      _
    $region15: #{conv_block_generator.1} parent=1 // pred_check_branch
      %21 = sbr.rel (0) target = $region17
    $region16: #{conv_block_generator.1} parent=1 // pred_region
      _
    $region17: #{conv_block_generator.1} parent=1 // pred_fallthru
      _
    // Predicated region
    $region18: #{conv_block_generator.1} parent=1 // pred_check
      _
    $region19: #{conv_block_generator.1} parent=1 // pred_check_branch
      %23 = sbr.rel (0) target = $region21
    $region20: #{conv_block_generator.1} parent=1 // pred_region
      _
    $region21: #{conv_block_generator.1} parent=1 // pred_fallthru
      _
    // Predicated region
    $region22: #{conv_block_generator.1} parent=1 // pred_check
      _
    $region23: #{conv_block_generator.1} parent=1 // pred_check_branch
      %25 = sbr.rel (0) target = $region25
    $region24: #{conv_block_generator.1} parent=1 // pred_region
      _
    $region25: #{conv_block_generator.1} parent=1 // pred_fallthru
      _
    // Predicated region
    $region26: #{conv_block_generator.1} parent=1 // pred_check
      _
    $region27: #{conv_block_generator.1} parent=1 // pred_check_branch
      %27 = sbr.rel (0) target = $region29
    $region28: #{conv_block_generator.1} parent=1 // pred_region
      _
    $region29: #{conv_block_generator.1} parent=1 // pred_fallthru
      _
    // Predicated region
    $region30: #{conv_block_generator.1} parent=1 // pred_check
      _
    $region31: #{conv_block_generator.1} parent=1 // pred_check_branch
      %29 = sbr.rel (0) target = $region33
    $region32: #{conv_block_generator.1} parent=1 // pred_region
      _
    $region33: #{conv_block_generator.1} parent=1 // pred_fallthru
      _
    %vm31 = vcmask 261120
    %32 = vst.msk [vmem:[#allocation2] sm:$0xff] %vm31, 0.0
    %vm33 = vcmask 254976
    %34 = vst.msk [vmem:[#allocation2 + $0x8] sm:$0x3] %vm33, 0.0
    %35 = vst.msk [vmem:[#allocation2 + $0xa0] sm:$0xff] %vm31, 0.0
    %36 = vst.msk [vmem:[#allocation2 + $0xa8] sm:$0x3] %vm33, 0.0
    %s37 = scalar_lea.vmem [#allocation2], 144
    %38 = vst.msk [vmem:[%s37] sm:$0xff] %vm31, 0.0
    %39 = vst.msk [vmem:[%s37 + $0x8] sm:$0x3] %vm33, 0.0
    %40 = vst.msk [vmem:[%s37 + $0xa0] sm:$0xff] %vm31, 0.0
    %41 = vst.msk [vmem:[%s37 + $0xa8] sm:$0x3] %vm33, 0.0
    %s42 = scalar_lea.vmem [#allocation2], 16
    %vm43 = vcmask 253952
    %44 = vst.msk [vmem:[%s42] sm:$0x1] %vm43, 0.0
    %45 = vst.msk [vmem:[%s42 + $0x10] sm:$0x1] %vm43, 0.0
    %46 = vst.msk [vmem:[%s42 + $0x20] sm:$0x1] %vm43, 0.0
    %47 = vst.msk [vmem:[%s42 + $0x30] sm:$0x1] %vm43, 0.0
    %48 = vst.msk [vmem:[%s42 + $0x40] sm:$0x1] %vm43, 0.0
    %49 = vst.msk [vmem:[%s42 + $0x50] sm:$0x1] %vm43, 0.0
    %50 = vst.msk [vmem:[%s42 + $0x60] sm:$0x1] %vm43, 0.0
    %51 = vst.msk [vmem:[%s42 + $0x70] sm:$0x1] %vm43, 0.0
    %52 = vst.msk [vmem:[%s42 + $0xa0] sm:$0x1] %vm43, 0.0
    %53 = vst.msk [vmem:[%s42 + $0xb0] sm:$0x1] %vm43, 0.0
    %54 = vst.msk [vmem:[%s42 + $0xc0] sm:$0x1] %vm43, 0.0
    %55 = vst.msk [vmem:[%s42 + $0xd0] sm:$0x1] %vm43, 0.0
    %56 = vst.msk [vmem:[%s42 + $0xe0] sm:$0x1] %vm43, 0.0
    %57 = vst.msk [vmem:[%s42 + $0xf0] sm:$0x1] %vm43, 0.0
    %58 = vst.msk [vmem:[%s42 + $0x100] sm:$0x1] %vm43, 0.0
    %59 = vst.msk [vmem:[%s42 + $0x110] sm:$0x1] %vm43, 0.0
    %60 = vst.msk [vmem:[%s42 + $0x9] sm:$0x1] %vm43, 0.0
    %61 = vst.msk [vmem:[%s42 + $0x19] sm:$0x1] %vm43, 0.0
    %62 = vst.msk [vmem:[%s42 + $0x29] sm:$0x1] %vm43, 0.0
    %63 = vst.msk [vmem:[%s42 + $0x39] sm:$0x1] %vm43, 0.0
    %64 = vst.msk [vmem:[%s42 + $0x49] sm:$0x1] %vm43, 0.0
    %65 = vst.msk [vmem:[%s42 + $0x59] sm:$0x1] %vm43, 0.0
    %66 = vst.msk [vmem:[%s42 + $0x69] sm:$0x1] %vm43, 0.0
    %67 = vst.msk [vmem:[%s42 + $0x79] sm:$0x1] %vm43, 0.0
    %68 = vst.msk [vmem:[%s42 + $0xa9] sm:$0x1] %vm43, 0.0
    %69 = vst.msk [vmem:[%s42 + $0xb9] sm:$0x1] %vm43, 0.0
    %70 = vst.msk [vmem:[%s42 + $0xc9] sm:$0x1] %vm43, 0.0
    %71 = vst.msk [vmem:[%s42 + $0xd9] sm:$0x1] %vm43, 0.0
    %72 = vst.msk [vmem:[%s42 + $0xe9] sm:$0x1] %vm43, 0.0
    %73 = vst.msk [vmem:[%s42 + $0xf9] sm:$0x1] %vm43, 0.0
    %74 = vst.msk [vmem:[%s42 + $0x109] sm:$0x1] %vm43, 0.0
    %75 = vst.msk [vmem:[%s42 + $0x119] sm:$0x1] %vm43, 0.0
    %v76 = vld [vmem:[%s0] sm:$0xff]
    %v77 = vld [vmem:[%s0 + $0x8] sm:$0xff]
    %v78 = vld [vmem:[%s0 + $0x10] sm:$0xff]
    %v79 = vld [vmem:[%s0 + $0x18] sm:$0xff]
    %v80 = vld [vmem:[%s0 + $0x20] sm:$0xff]
    %v81 = vld [vmem:[%s0 + $0x28] sm:$0xff]
    %v82 = vld [vmem:[%s0 + $0x30] sm:$0xff]
    %v83 = vld [vmem:[%s0 + $0x38] sm:$0xff]
    %v84 = vld [vmem:[%s0 + $0x40] sm:$0xff]
    %v85 = vld [vmem:[%s0 + $0x48] sm:$0xff]
    %v86 = vld [vmem:[%s0 + $0x50] sm:$0xff]
    %v87 = vld [vmem:[%s0 + $0x58] sm:$0xff]
    %v88 = vld [vmem:[%s0 + $0x60] sm:$0xff]
    %v89 = vld [vmem:[%s0 + $0x68] sm:$0xff]
    %v90 = vld [vmem:[%s0 + $0x70] sm:$0xff]
    %v91 = vld [vmem:[%s0 + $0x78] sm:$0xff]
    %92 = vst.msk [vmem:[%s42 + $0x1] sm:$0xff] %vm31, %v76
    %93 = vst.msk [vmem:[%s42 + $0x11] sm:$0xff] %vm31, %v77
    %94 = vst.msk [vmem:[%s42 + $0x21] sm:$0xff] %vm31, %v78
    %95 = vst.msk [vmem:[%s42 + $0x31] sm:$0xff] %vm31, %v79
    %96 = vst.msk [vmem:[%s42 + $0x41] sm:$0xff] %vm31, %v80
    %97 = vst.msk [vmem:[%s42 + $0x51] sm:$0xff] %vm31, %v81
    %98 = vst.msk [vmem:[%s42 + $0x61] sm:$0xff] %vm31, %v82
    %99 = vst.msk [vmem:[%s42 + $0x71] sm:$0xff] %vm31, %v83
    %100 = vst.msk [vmem:[%s42 + $0xa1] sm:$0xff] %vm31, %v84
    %101 = vst.msk [vmem:[%s42 + $0xb1] sm:$0xff] %vm31, %v85
    %102 = vst.msk [vmem:[%s42 + $0xc1] sm:$0xff] %vm31, %v86
    %103 = vst.msk [vmem:[%s42 + $0xd1] sm:$0xff] %vm31, %v87
    %104 = vst.msk [vmem:[%s42 + $0xe1] sm:$0xff] %vm31, %v88
    %105 = vst.msk [vmem:[%s42 + $0xf1] sm:$0xff] %vm31, %v89
    %106 = vst.msk [vmem:[%s42 + $0x101] sm:$0xff] %vm31, %v90
    %107 = vst.msk [vmem:[%s42 + $0x111] sm:$0xff] %vm31, %v91
    %v108 = vld [vmem:[#allocation2] sm:$0xff]
    %v109 = vld [vmem:[#allocation2 + $0x10] sm:$0xff]
    %v110 = vld [vmem:[#allocation2 + $0x20] sm:$0xff]
    %v111 = vld [vmem:[#allocation2 + $0x30] sm:$0xff]
    %v112 = vld [vmem:[#allocation2 + $0x40] sm:$0xff]
    %v113 = vld [vmem:[#allocation2 + $0x50] sm:$0xff]
    %v114 = vld [vmem:[#allocation2 + $0x60] sm:$0xff]
    %v115 = vld [vmem:[#allocation2 + $0x70] sm:$0xff]
    %v116 = vld [vmem:[#allocation2 + $0xa0] sm:$0xff]
    %v117 = vld [vmem:[#allocation2 + $0xb0] sm:$0xff]
    %v118 = vld [vmem:[#allocation2 + $0xc0] sm:$0xff]
    %v119 = vld [vmem:[#allocation2 + $0xd0] sm:$0xff]
    %v120 = vld [vmem:[#allocation2 + $0xe0] sm:$0xff]
    %v121 = vld [vmem:[#allocation2 + $0xf0] sm:$0xff]
    %v122 = vld [vmem:[#allocation2 + $0x100] sm:$0xff]
    %v123 = vld [vmem:[#allocation2 + $0x110] sm:$0xff]
    %v124 = vpack.c.bf16 %v108, %v108
    %v125 = vpack.c.bf16 %v109, %v109
    %v126 = vpack.c.bf16 %v110, %v110
    %v127 = vpack.c.bf16 %v111, %v111
    %v128 = vpack.c.bf16 %v112, %v112
    %v129 = vpack.c.bf16 %v113, %v113
    %v130 = vpack.c.bf16 %v114, %v114
    %v131 = vpack.c.bf16 %v115, %v115
    %v132 = vpack.c.bf16 %v116, %v116
    %v133 = vpack.c.bf16 %v117, %v117
    %v134 = vpack.c.bf16 %v118, %v118
    %v135 = vpack.c.bf16 %v119, %v119
    %v136 = vpack.c.bf16 %v120, %v120
    %v137 = vpack.c.bf16 %v121, %v121
    %v138 = vpack.c.bf16 %v122, %v122
    %v139 = vpack.c.bf16 %v123, %v123
    %vm140 = vcmask 257024
    %141 = vst.msk [vmem:[#allocation3] sm:$0xf] %vm140, %v124
    %142 = vst.msk [vmem:[#allocation3 + $0xc] sm:$0xf] %vm140, %v125
    %143 = vst.msk [vmem:[#allocation3 + $0x18] sm:$0xf] %vm140, %v126
    %144 = vst.msk [vmem:[#allocation3 + $0x24] sm:$0xf] %vm140, %v127
    %145 = vst.msk [vmem:[#allocation3 + $0x30] sm:$0xf] %vm140, %v128
    %146 = vst.msk [vmem:[#allocation3 + $0x3c] sm:$0xf] %vm140, %v129
    %147 = vst.msk [vmem:[#allocation3 + $0x48] sm:$0xf] %vm140, %v130
    %148 = vst.msk [vmem:[#allocation3 + $0x54] sm:$0xf] %vm140, %v131
    %149 = vst.msk [vmem:[#allocation3 + $0x60] sm:$0xf] %vm140, %v132
    %150 = vst.msk [vmem:[#allocation3 + $0x6c] sm:$0xf] %vm140, %v133
    %151 = vst.msk [vmem:[#allocation3 + $0x78] sm:$0xf] %vm140, %v134
    %152 = vst.msk [vmem:[#allocation3 + $0x84] sm:$0xf] %vm140, %v135
    %153 = vst.msk [vmem:[#allocation3 + $0x90] sm:$0xf] %vm140, %v136
    %154 = vst.msk [vmem:[#allocation3 + $0x9c] sm:$0xf] %vm140, %v137
    %155 = vst.msk [vmem:[#allocation3 + $0xa8] sm:$0xf] %vm140, %v138
    %156 = vst.msk [vmem:[#allocation3 + $0xb4] sm:$0xf] %vm140, %v139
    %v157 = vld [vmem:[#allocation2 + $0x1] sm:$0xff]
    %v158 = vld [vmem:[#allocation2 + $0x11] sm:$0xff]
    %v159 = vld [vmem:[#allocation2 + $0x21] sm:$0xff]
    %v160 = vld [vmem:[#allocation2 + $0x31] sm:$0xff]
    %v161 = vld [vmem:[#allocation2 + $0x41] sm:$0xff]
    %v162 = vld [vmem:[#allocation2 + $0x51] sm:$0xff]
    %v163 = vld [vmem:[#allocation2 + $0x61] sm:$0xff]
    %v164 = vld [vmem:[#allocation2 + $0x71] sm:$0xff]
    %v165 = vld [vmem:[#allocation2 + $0xa1] sm:$0xff]
    %v166 = vld [vmem:[#allocation2 + $0xb1] sm:$0xff]
    %v167 = vld [vmem:[#allocation2 + $0xc1] sm:$0xff]
    %v168 = vld [vmem:[#allocation2 + $0xd1] sm:$0xff]
    %v169 = vld [vmem:[#allocation2 + $0xe1] sm:$0xff]
    %v170 = vld [vmem:[#allocation2 + $0xf1] sm:$0xff]
    %v171 = vld [vmem:[#allocation2 + $0x101] sm:$0xff]
    %v172 = vld [vmem:[#allocation2 + $0x111] sm:$0xff]
    %v173 = vpack.c.bf16 %v157, %v157
    %v174 = vpack.c.bf16 %v158, %v158
    %v175 = vpack.c.bf16 %v159, %v159
    %v176 = vpack.c.bf16 %v160, %v160
    %v177 = vpack.c.bf16 %v161, %v161
    %v178 = vpack.c.bf16 %v162, %v162
    %v179 = vpack.c.bf16 %v163, %v163
    %v180 = vpack.c.bf16 %v164, %v164
    %v181 = vpack.c.bf16 %v165, %v165
    %v182 = vpack.c.bf16 %v166, %v166
    %v183 = vpack.c.bf16 %v167, %v167
    %v184 = vpack.c.bf16 %v168, %v168
    %v185 = vpack.c.bf16 %v169, %v169
    %v186 = vpack.c.bf16 %v170, %v170
    %v187 = vpack.c.bf16 %v171, %v171
    %v188 = vpack.c.bf16 %v172, %v172
    %205 = vrot.lane.b32.xlu0 %v173, 32
    %v206 = vpop.permute.xlu0 %205
    %207 = vrot.lane.b32.xlu0 %v174, 32
    %v208 = vpop.permute.xlu0 %207
    %209 = vrot.lane.b32.xlu0 %v175, 32
    %v210 = vpop.permute.xlu0 %209
    %211 = vrot.lane.b32.xlu0 %v176, 32
    %v212 = vpop.permute.xlu0 %211
    %213 = vrot.lane.b32.xlu0 %v177, 32
    %v214 = vpop.permute.xlu0 %213
    %215 = vrot.lane.b32.xlu0 %v178, 32
    %v216 = vpop.permute.xlu0 %215
    %217 = vrot.lane.b32.xlu0 %v179, 32
    %v218 = vpop.permute.xlu0 %217
    %219 = vrot.lane.b32.xlu0 %v180, 32
    %v220 = vpop.permute.xlu0 %219
    %221 = vrot.lane.b32.xlu0 %v181, 32
    %v222 = vpop.permute.xlu0 %221
    %223 = vrot.lane.b32.xlu0 %v182, 32
    %v224 = vpop.permute.xlu0 %223
    %225 = vrot.lane.b32.xlu0 %v183, 32
    %v226 = vpop.permute.xlu0 %225
    %227 = vrot.lane.b32.xlu0 %v184, 32
    %v228 = vpop.permute.xlu0 %227
    %229 = vrot.lane.b32.xlu0 %v185, 32
    %v230 = vpop.permute.xlu0 %229
    %231 = vrot.lane.b32.xlu0 %v186, 32
    %v232 = vpop.permute.xlu0 %231
    %233 = vrot.lane.b32.xlu0 %v187, 32
    %v234 = vpop.permute.xlu0 %233
    %235 = vrot.lane.b32.xlu0 %v188, 32
    %v236 = vpop.permute.xlu0 %235
    %vm253 = vcmask 519424
    %254 = vst.msk [vmem:[#allocation3] sm:$0xf] %vm253, %v206
    %255 = vst.msk [vmem:[#allocation3 + $0xc] sm:$0xf] %vm253, %v208
    %256 = vst.msk [vmem:[#allocation3 + $0x18] sm:$0xf] %vm253, %v210
    %257 = vst.msk [vmem:[#allocation3 + $0x24] sm:$0xf] %vm253, %v212
    %258 = vst.msk [vmem:[#allocation3 + $0x30] sm:$0xf] %vm253, %v214
    %259 = vst.msk [vmem:[#allocation3 + $0x3c] sm:$0xf] %vm253, %v216
    %260 = vst.msk [vmem:[#allocation3 + $0x48] sm:$0xf] %vm253, %v218
    %261 = vst.msk [vmem:[#allocation3 + $0x54] sm:$0xf] %vm253, %v220
    %262 = vst.msk [vmem:[#allocation3 + $0x60] sm:$0xf] %vm253, %v222
    %263 = vst.msk [vmem:[#allocation3 + $0x6c] sm:$0xf] %vm253, %v224
    %264 = vst.msk [vmem:[#allocation3 + $0x78] sm:$0xf] %vm253, %v226
    %265 = vst.msk [vmem:[#allocation3 + $0x84] sm:$0xf] %vm253, %v228
    %266 = vst.msk [vmem:[#allocation3 + $0x90] sm:$0xf] %vm253, %v230
    %267 = vst.msk [vmem:[#allocation3 + $0x9c] sm:$0xf] %vm253, %v232
    %268 = vst.msk [vmem:[#allocation3 + $0xa8] sm:$0xf] %vm253, %v234
    %269 = vst.msk [vmem:[#allocation3 + $0xb4] sm:$0xf] %vm253, %v236
    %v270 = vld [vmem:[#allocation2 + $0x2] sm:$0xff]
    %v271 = vld [vmem:[#allocation2 + $0x12] sm:$0xff]
    %v272 = vld [vmem:[#allocation2 + $0x22] sm:$0xff]
    %v273 = vld [vmem:[#allocation2 + $0x32] sm:$0xff]
    %v274 = vld [vmem:[#allocation2 + $0x42] sm:$0xff]
    %v275 = vld [vmem:[#allocation2 + $0x52] sm:$0xff]
    %v276 = vld [vmem:[#allocation2 + $0x62] sm:$0xff]
    %v277 = vld [vmem:[#allocation2 + $0x72] sm:$0xff]
    %v278 = vld [vmem:[#allocation2 + $0xa2] sm:$0xff]
    %v279 = vld [vmem:[#allocation2 + $0xb2] sm:$0xff]
    %v280 = vld [vmem:[#allocation2 + $0xc2] sm:$0xff]
    %v281 = vld [vmem:[#allocation2 + $0xd2] sm:$0xff]
    %v282 = vld [vmem:[#allocation2 + $0xe2] sm:$0xff]
    %v283 = vld [vmem:[#allocation2 + $0xf2] sm:$0xff]
    %v284 = vld [vmem:[#allocation2 + $0x102] sm:$0xff]
    %v285 = vld [vmem:[#allocation2 + $0x112] sm:$0xff]
    %v286 = vpack.c.bf16 %v270, %v270
    %v287 = vpack.c.bf16 %v271, %v271
    %v288 = vpack.c.bf16 %v272, %v272
    %v289 = vpack.c.bf16 %v273, %v273
    %v290 = vpack.c.bf16 %v274, %v274
    %v291 = vpack.c.bf16 %v275, %v275
    %v292 = vpack.c.bf16 %v276, %v276
    %v293 = vpack.c.bf16 %v277, %v277
    %v294 = vpack.c.bf16 %v278, %v278
    %v295 = vpack.c.bf16 %v279, %v279
    %v296 = vpack.c.bf16 %v280, %v280
    %v297 = vpack.c.bf16 %v281, %v281
    %v298 = vpack.c.bf16 %v282, %v282
    %v299 = vpack.c.bf16 %v283, %v283
    %v300 = vpack.c.bf16 %v284, %v284
    %v301 = vpack.c.bf16 %v285, %v285
    %318 = vrot.lane.b32.xlu0 %v286, 64
    %v319 = vpop.permute.xlu0 %318
    %320 = vrot.lane.b32.xlu0 %v287, 64
    %v321 = vpop.permute.xlu0 %320
    %322 = vrot.lane.b32.xlu0 %v288, 64
    %v323 = vpop.permute.xlu0 %322
    %324 = vrot.lane.b32.xlu0 %v289, 64
    %v325 = vpop.permute.xlu0 %324
    %326 = vrot.lane.b32.xlu0 %v290, 64
    %v327 = vpop.permute.xlu0 %326
    %328 = vrot.lane.b32.xlu0 %v291, 64
    %v329 = vpop.permute.xlu0 %328
    %330 = vrot.lane.b32.xlu0 %v292, 64
    %v331 = vpop.permute.xlu0 %330
    %332 = vrot.lane.b32.xlu0 %v293, 64
    %v333 = vpop.permute.xlu0 %332
    %334 = vrot.lane.b32.xlu0 %v294, 64
    %v335 = vpop.permute.xlu0 %334
    %336 = vrot.lane.b32.xlu0 %v295, 64
    %v337 = vpop.permute.xlu0 %336
    %338 = vrot.lane.b32.xlu0 %v296, 64
    %v339 = vpop.permute.xlu0 %338
    %340 = vrot.lane.b32.xlu0 %v297, 64
    %v341 = vpop.permute.xlu0 %340
    %342 = vrot.lane.b32.xlu0 %v298, 64
    %v343 = vpop.permute.xlu0 %342
    %344 = vrot.lane.b32.xlu0 %v299, 64
    %v345 = vpop.permute.xlu0 %344
    %346 = vrot.lane.b32.xlu0 %v300, 64
    %v347 = vpop.permute.xlu0 %346
    %348 = vrot.lane.b32.xlu0 %v301, 64
    %v349 = vpop.permute.xlu0 %348
    %vm366 = vcmask 781824
    %367 = vst.msk [vmem:[#allocation3] sm:$0xf] %vm366, %v319
    %368 = vst.msk [vmem:[#allocation3 + $0xc] sm:$0xf] %vm366, %v321
    %369 = vst.msk [vmem:[#allocation3 + $0x18] sm:$0xf] %vm366, %v323
    %370 = vst.msk [vmem:[#allocation3 + $0x24] sm:$0xf] %vm366, %v325
    %371 = vst.msk [vmem:[#allocation3 + $0x30] sm:$0xf] %vm366, %v327
    %372 = vst.msk [vmem:[#allocation3 + $0x3c] sm:$0xf] %vm366, %v329
    %373 = vst.msk [vmem:[#allocation3 + $0x48] sm:$0xf] %vm366, %v331
    %374 = vst.msk [vmem:[#allocation3 + $0x54] sm:$0xf] %vm366, %v333
    %375 = vst.msk [vmem:[#allocation3 + $0x60] sm:$0xf] %vm366, %v335
    %376 = vst.msk [vmem:[#allocation3 + $0x6c] sm:$0xf] %vm366, %v337
    %377 = vst.msk [vmem:[#allocation3 + $0x78] sm:$0xf] %vm366, %v339
    %378 = vst.msk [vmem:[#allocation3 + $0x84] sm:$0xf] %vm366, %v341
    %379 = vst.msk [vmem:[#allocation3 + $0x90] sm:$0xf] %vm366, %v343
    %380 = vst.msk [vmem:[#allocation3 + $0x9c] sm:$0xf] %vm366, %v345
    %381 = vst.msk [vmem:[#allocation3 + $0xa8] sm:$0xf] %vm366, %v347
    %382 = vst.msk [vmem:[#allocation3 + $0xb4] sm:$0xf] %vm366, %v349
    %v383 = vld [vmem:[%s42] sm:$0xff]
    %v384 = vld [vmem:[%s42 + $0x10] sm:$0xff]
    %v385 = vld [vmem:[%s42 + $0x20] sm:$0xff]
    %v386 = vld [vmem:[%s42 + $0x30] sm:$0xff]
    %v387 = vld [vmem:[%s42 + $0x40] sm:$0xff]
    %v388 = vld [vmem:[%s42 + $0x50] sm:$0xff]
    %v389 = vld [vmem:[%s42 + $0x60] sm:$0xff]
    %v390 = vld [vmem:[%s42 + $0x70] sm:$0xff]
    %v391 = vld [vmem:[%s42 + $0xa0] sm:$0xff]
    %v392 = vld [vmem:[%s42 + $0xb0] sm:$0xff]
    %v393 = vld [vmem:[%s42 + $0xc0] sm:$0xff]
    %v394 = vld [vmem:[%s42 + $0xd0] sm:$0xff]
    %v395 = vld [vmem:[%s42 + $0xe0] sm:$0xff]
    %v396 = vld [vmem:[%s42 + $0xf0] sm:$0xff]
    %v397 = vld [vmem:[%s42 + $0x100] sm:$0xff]
    %v398 = vld [vmem:[%s42 + $0x110] sm:$0xff]
    %v399 = vpack.c.bf16 %v383, %v383
    %v400 = vpack.c.bf16 %v384, %v384
    %v401 = vpack.c.bf16 %v385, %v385
    %v402 = vpack.c.bf16 %v386, %v386
    %v403 = vpack.c.bf16 %v387, %v387
    %v404 = vpack.c.bf16 %v388, %v388
    %v405 = vpack.c.bf16 %v389, %v389
    %v406 = vpack.c.bf16 %v390, %v390
    %v407 = vpack.c.bf16 %v391, %v391
    %v408 = vpack.c.bf16 %v392, %v392
    %v409 = vpack.c.bf16 %v393, %v393
    %v410 = vpack.c.bf16 %v394, %v394
    %v411 = vpack.c.bf16 %v395, %v395
    %v412 = vpack.c.bf16 %v396, %v396
    %v413 = vpack.c.bf16 %v397, %v397
    %v414 = vpack.c.bf16 %v398, %v398
    %431 = vrot.lane.b32.xlu0 %v399, 96
    %v432 = vpop.permute.xlu0 %431
    %433 = vrot.lane.b32.xlu0 %v400, 96
    %v434 = vpop.permute.xlu0 %433
    %435 = vrot.lane.b32.xlu0 %v401, 96
    %v436 = vpop.permute.xlu0 %435
    %437 = vrot.lane.b32.xlu0 %v402, 96
    %v438 = vpop.permute.xlu0 %437
    %439 = vrot.lane.b32.xlu0 %v403, 96
    %v440 = vpop.permute.xlu0 %439
    %441 = vrot.lane.b32.xlu0 %v404, 96
    %v442 = vpop.permute.xlu0 %441
    %443 = vrot.lane.b32.xlu0 %v405, 96
    %v444 = vpop.permute.xlu0 %443
    %445 = vrot.lane.b32.xlu0 %v406, 96
    %v446 = vpop.permute.xlu0 %445
    %447 = vrot.lane.b32.xlu0 %v407, 96
    %v448 = vpop.permute.xlu0 %447
    %449 = vrot.lane.b32.xlu0 %v408, 96
    %v450 = vpop.permute.xlu0 %449
    %451 = vrot.lane.b32.xlu0 %v409, 96
    %v452 = vpop.permute.xlu0 %451
    %453 = vrot.lane.b32.xlu0 %v410, 96
    %v454 = vpop.permute.xlu0 %453
    %455 = vrot.lane.b32.xlu0 %v411, 96
    %v456 = vpop.permute.xlu0 %455
    %457 = vrot.lane.b32.xlu0 %v412, 96
    %v458 = vpop.permute.xlu0 %457
    %459 = vrot.lane.b32.xlu0 %v413, 96
    %v460 = vpop.permute.xlu0 %459
    %461 = vrot.lane.b32.xlu0 %v414, 96
    %v462 = vpop.permute.xlu0 %461
    %vm479 = vcmask 1044224
    %480 = vst.msk [vmem:[#allocation3] sm:$0xf] %vm479, %v432
    %481 = vst.msk [vmem:[#allocation3 + $0xc] sm:$0xf] %vm479, %v434
    %482 = vst.msk [vmem:[#allocation3 + $0x18] sm:$0xf] %vm479, %v436
    %483 = vst.msk [vmem:[#allocation3 + $0x24] sm:$0xf] %vm479, %v438
    %484 = vst.msk [vmem:[#allocation3 + $0x30] sm:$0xf] %vm479, %v440
    %485 = vst.msk [vmem:[#allocation3 + $0x3c] sm:$0xf] %vm479, %v442
    %486 = vst.msk [vmem:[#allocation3 + $0x48] sm:$0xf] %vm479, %v444
    %487 = vst.msk [vmem:[#allocation3 + $0x54] sm:$0xf] %vm479, %v446
    %488 = vst.msk [vmem:[#allocation3 + $0x60] sm:$0xf] %vm479, %v448
    %489 = vst.msk [vmem:[#allocation3 + $0x6c] sm:$0xf] %vm479, %v450
    %490 = vst.msk [vmem:[#allocation3 + $0x78] sm:$0xf] %vm479, %v452
    %491 = vst.msk [vmem:[#allocation3 + $0x84] sm:$0xf] %vm479, %v454
    %492 = vst.msk [vmem:[#allocation3 + $0x90] sm:$0xf] %vm479, %v456
    %493 = vst.msk [vmem:[#allocation3 + $0x9c] sm:$0xf] %vm479, %v458
    %494 = vst.msk [vmem:[#allocation3 + $0xa8] sm:$0xf] %vm479, %v460
    %495 = vst.msk [vmem:[#allocation3 + $0xb4] sm:$0xf] %vm479, %v462
    %v496 = vld [vmem:[%s42 + $0x1] sm:$0xff]
    %v497 = vld [vmem:[%s42 + $0x11] sm:$0xff]
    %v498 = vld [vmem:[%s42 + $0x21] sm:$0xff]
    %v499 = vld [vmem:[%s42 + $0x31] sm:$0xff]
    %v500 = vld [vmem:[%s42 + $0x41] sm:$0xff]
    %v501 = vld [vmem:[%s42 + $0x51] sm:$0xff]
    %v502 = vld [vmem:[%s42 + $0x61] sm:$0xff]
    %v503 = vld [vmem:[%s42 + $0x71] sm:$0xff]
    %v504 = vld [vmem:[%s42 + $0xa1] sm:$0xff]
    %v505 = vld [vmem:[%s42 + $0xb1] sm:$0xff]
    %v506 = vld [vmem:[%s42 + $0xc1] sm:$0xff]
    %v507 = vld [vmem:[%s42 + $0xd1] sm:$0xff]
    %v508 = vld [vmem:[%s42 + $0xe1] sm:$0xff]
    %v509 = vld [vmem:[%s42 + $0xf1] sm:$0xff]
    %v510 = vld [vmem:[%s42 + $0x101] sm:$0xff]
    %v511 = vld [vmem:[%s42 + $0x111] sm:$0xff]
    %v512 = vpack.c.bf16 %v496, %v496
    %v513 = vpack.c.bf16 %v497, %v497
    %v514 = vpack.c.bf16 %v498, %v498
    %v515 = vpack.c.bf16 %v499, %v499
    %v516 = vpack.c.bf16 %v500, %v500
    %v517 = vpack.c.bf16 %v501, %v501
    %v518 = vpack.c.bf16 %v502, %v502
    %v519 = vpack.c.bf16 %v503, %v503
    %v520 = vpack.c.bf16 %v504, %v504
    %v521 = vpack.c.bf16 %v505, %v505
    %v522 = vpack.c.bf16 %v506, %v506
    %v523 = vpack.c.bf16 %v507, %v507
    %v524 = vpack.c.bf16 %v508, %v508
    %v525 = vpack.c.bf16 %v509, %v509
    %v526 = vpack.c.bf16 %v510, %v510
    %v527 = vpack.c.bf16 %v511, %v511
    %528 = vst.msk [vmem:[#allocation3 + $0x4] sm:$0xf] %vm140, %v512
    %529 = vst.msk [vmem:[#allocation3 + $0x10] sm:$0xf] %vm140, %v513
    %530 = vst.msk [vmem:[#allocation3 + $0x1c] sm:$0xf] %vm140, %v514
    %531 = vst.msk [vmem:[#allocation3 + $0x28] sm:$0xf] %vm140, %v515
    %532 = vst.msk [vmem:[#allocation3 + $0x34] sm:$0xf] %vm140, %v516
    %533 = vst.msk [vmem:[#allocation3 + $0x40] sm:$0xf] %vm140, %v517
    %534 = vst.msk [vmem:[#allocation3 + $0x4c] sm:$0xf] %vm140, %v518
    %535 = vst.msk [vmem:[#allocation3 + $0x58] sm:$0xf] %vm140, %v519
    %536 = vst.msk [vmem:[#allocation3 + $0x64] sm:$0xf] %vm140, %v520
    %537 = vst.msk [vmem:[#allocation3 + $0x70] sm:$0xf] %vm140, %v521
    %538 = vst.msk [vmem:[#allocation3 + $0x7c] sm:$0xf] %vm140, %v522
    %539 = vst.msk [vmem:[#allocation3 + $0x88] sm:$0xf] %vm140, %v523
    %540 = vst.msk [vmem:[#allocation3 + $0x94] sm:$0xf] %vm140, %v524
    %541 = vst.msk [vmem:[#allocation3 + $0xa0] sm:$0xf] %vm140, %v525
    %542 = vst.msk [vmem:[#allocation3 + $0xac] sm:$0xf] %vm140, %v526
    %543 = vst.msk [vmem:[#allocation3 + $0xb8] sm:$0xf] %vm140, %v527
    %v544 = vld [vmem:[%s42 + $0x2] sm:$0xff]
    %v545 = vld [vmem:[%s42 + $0x12] sm:$0xff]
    %v546 = vld [vmem:[%s42 + $0x22] sm:$0xff]
    %v547 = vld [vmem:[%s42 + $0x32] sm:$0xff]
    %v548 = vld [vmem:[%s42 + $0x42] sm:$0xff]
    %v549 = vld [vmem:[%s42 + $0x52] sm:$0xff]
    %v550 = vld [vmem:[%s42 + $0x62] sm:$0xff]
    %v551 = vld [vmem:[%s42 + $0x72] sm:$0xff]
    %v552 = vld [vmem:[%s42 + $0xa2] sm:$0xff]
    %v553 = vld [vmem:[%s42 + $0xb2] sm:$0xff]
    %v554 = vld [vmem:[%s42 + $0xc2] sm:$0xff]
    %v555 = vld [vmem:[%s42 + $0xd2] sm:$0xff]
    %v556 = vld [vmem:[%s42 + $0xe2] sm:$0xff]
    %v557 = vld [vmem:[%s42 + $0xf2] sm:$0xff]
    %v558 = vld [vmem:[%s42 + $0x102] sm:$0xff]
    %v559 = vld [vmem:[%s42 + $0x112] sm:$0xff]
    %v560 = vpack.c.bf16 %v544, %v544
    %v561 = vpack.c.bf16 %v545, %v545
    %v562 = vpack.c.bf16 %v546, %v546
    %v563 = vpack.c.bf16 %v547, %v547
    %v564 = vpack.c.bf16 %v548, %v548
    %v565 = vpack.c.bf16 %v549, %v549
    %v566 = vpack.c.bf16 %v550, %v550
    %v567 = vpack.c.bf16 %v551, %v551
    %v568 = vpack.c.bf16 %v552, %v552
    %v569 = vpack.c.bf16 %v553, %v553
    %v570 = vpack.c.bf16 %v554, %v554
    %v571 = vpack.c.bf16 %v555, %v555
    %v572 = vpack.c.bf16 %v556, %v556
    %v573 = vpack.c.bf16 %v557, %v557
    %v574 = vpack.c.bf16 %v558, %v558
    %v575 = vpack.c.bf16 %v559, %v559
    %592 = vrot.lane.b32.xlu0 %v560, 32
    %v593 = vpop.permute.xlu0 %592
    %594 = vrot.lane.b32.xlu0 %v561, 32
    %v595 = vpop.permute.xlu0 %594
    %596 = vrot.lane.b32.xlu0 %v562, 32
    %v597 = vpop.permute.xlu0 %596
    %598 = vrot.lane.b32.xlu0 %v563, 32
    %v599 = vpop.permute.xlu0 %598
    %600 = vrot.lane.b32.xlu0 %v564, 32
    %v601 = vpop.permute.xlu0 %600
    %602 = vrot.lane.b32.xlu0 %v565, 32
    %v603 = vpop.permute.xlu0 %602
    %604 = vrot.lane.b32.xlu0 %v566, 32
    %v605 = vpop.permute.xlu0 %604
    %606 = vrot.lane.b32.xlu0 %v567, 32
    %v607 = vpop.permute.xlu0 %606
    %608 = vrot.lane.b32.xlu0 %v568, 32
    %v609 = vpop.permute.xlu0 %608
    %610 = vrot.lane.b32.xlu0 %v569, 32
    %v611 = vpop.permute.xlu0 %610
    %612 = vrot.lane.b32.xlu0 %v570, 32
    %v613 = vpop.permute.xlu0 %612
    %614 = vrot.lane.b32.xlu0 %v571, 32
    %v615 = vpop.permute.xlu0 %614
    %616 = vrot.lane.b32.xlu0 %v572, 32
    %v617 = vpop.permute.xlu0 %616
    %618 = vrot.lane.b32.xlu0 %v573, 32
    %v619 = vpop.permute.xlu0 %618
    %620 = vrot.lane.b32.xlu0 %v574, 32
    %v621 = vpop.permute.xlu0 %620
    %622 = vrot.lane.b32.xlu0 %v575, 32
    %v623 = vpop.permute.xlu0 %622
    %640 = vst.msk [vmem:[#allocation3 + $0x4] sm:$0xf] %vm253, %v593
    %641 = vst.msk [vmem:[#allocation3 + $0x10] sm:$0xf] %vm253, %v595
    %642 = vst.msk [vmem:[#allocation3 + $0x1c] sm:$0xf] %vm253, %v597
    %643 = vst.msk [vmem:[#allocation3 + $0x28] sm:$0xf] %vm253, %v599
    %644 = vst.msk [vmem:[#allocation3 + $0x34] sm:$0xf] %vm253, %v601
    %645 = vst.msk [vmem:[#allocation3 + $0x40] sm:$0xf] %vm253, %v603
    %646 = vst.msk [vmem:[#allocation3 + $0x4c] sm:$0xf] %vm253, %v605
    %647 = vst.msk [vmem:[#allocation3 + $0x58] sm:$0xf] %vm253, %v607
    %648 = vst.msk [vmem:[#allocation3 + $0x64] sm:$0xf] %vm253, %v609
    %649 = vst.msk [vmem:[#allocation3 + $0x70] sm:$0xf] %vm253, %v611
    %650 = vst.msk [vmem:[#allocation3 + $0x7c] sm:$0xf] %vm253, %v613
    %651 = vst.msk [vmem:[#allocation3 + $0x88] sm:$0xf] %vm253, %v615
    %652 = vst.msk [vmem:[#allocation3 + $0x94] sm:$0xf] %vm253, %v617
    %653 = vst.msk [vmem:[#allocation3 + $0xa0] sm:$0xf] %vm253, %v619
    %654 = vst.msk [vmem:[#allocation3 + $0xac] sm:$0xf] %vm253, %v621
    %655 = vst.msk [vmem:[#allocation3 + $0xb8] sm:$0xf] %vm253, %v623
    %s656 = scalar_lea.vmem [#allocation2], 32
    %v657 = vld [vmem:[%s656] sm:$0xff]
    %v658 = vld [vmem:[%s656 + $0x10] sm:$0xff]
    %v659 = vld [vmem:[%s656 + $0x20] sm:$0xff]
    %v660 = vld [vmem:[%s656 + $0x30] sm:$0xff]
    %v661 = vld [vmem:[%s656 + $0x40] sm:$0xff]
    %v662 = vld [vmem:[%s656 + $0x50] sm:$0xff]
    %v663 = vld [vmem:[%s656 + $0x60] sm:$0xff]
    %v664 = vld [vmem:[%s656 + $0x70] sm:$0xff]
    %v665 = vld [vmem:[%s656 + $0xa0] sm:$0xff]
    %v666 = vld [vmem:[%s656 + $0xb0] sm:$0xff]
    %v667 = vld [vmem:[%s656 + $0xc0] sm:$0xff]
    %v668 = vld [vmem:[%s656 + $0xd0] sm:$0xff]
    %v669 = vld [vmem:[%s656 + $0xe0] sm:$0xff]
    %v670 = vld [vmem:[%s656 + $0xf0] sm:$0xff]
    %v671 = vld [vmem:[%s656 + $0x100] sm:$0xff]
    %v672 = vld [vmem:[%s656 + $0x110] sm:$0xff]
    %v673 = vpack.c.bf16 %v657, %v657
    %v674 = vpack.c.bf16 %v658, %v658
    %v675 = vpack.c.bf16 %v659, %v659
    %v676 = vpack.c.bf16 %v660, %v660
    %v677 = vpack.c.bf16 %v661, %v661
    %v678 = vpack.c.bf16 %v662, %v662
    %v679 = vpack.c.bf16 %v663, %v663
    %v680 = vpack.c.bf16 %v664, %v664
    %v681 = vpack.c.bf16 %v665, %v665
    %v682 = vpack.c.bf16 %v666, %v666
    %v683 = vpack.c.bf16 %v667, %v667
    %v684 = vpack.c.bf16 %v668, %v668
    %v685 = vpack.c.bf16 %v669, %v669
    %v686 = vpack.c.bf16 %v670, %v670
    %v687 = vpack.c.bf16 %v671, %v671
    %v688 = vpack.c.bf16 %v672, %v672
    %705 = vrot.lane.b32.xlu0 %v673, 64
    %v706 = vpop.permute.xlu0 %705
    %707 = vrot.lane.b32.xlu0 %v674, 64
    %v708 = vpop.permute.xlu0 %707
    %709 = vrot.lane.b32.xlu0 %v675, 64
    %v710 = vpop.permute.xlu0 %709
    %711 = vrot.lane.b32.xlu0 %v676, 64
    %v712 = vpop.permute.xlu0 %711
    %713 = vrot.lane.b32.xlu0 %v677, 64
    %v714 = vpop.permute.xlu0 %713
    %715 = vrot.lane.b32.xlu0 %v678, 64
    %v716 = vpop.permute.xlu0 %715
    %717 = vrot.lane.b32.xlu0 %v679, 64
    %v718 = vpop.permute.xlu0 %717
    %719 = vrot.lane.b32.xlu0 %v680, 64
    %v720 = vpop.permute.xlu0 %719
    %721 = vrot.lane.b32.xlu0 %v681, 64
    %v722 = vpop.permute.xlu0 %721
    %723 = vrot.lane.b32.xlu0 %v682, 64
    %v724 = vpop.permute.xlu0 %723
    %725 = vrot.lane.b32.xlu0 %v683, 64
    %v726 = vpop.permute.xlu0 %725
    %727 = vrot.lane.b32.xlu0 %v684, 64
    %v728 = vpop.permute.xlu0 %727
    %729 = vrot.lane.b32.xlu0 %v685, 64
    %v730 = vpop.permute.xlu0 %729
    %731 = vrot.lane.b32.xlu0 %v686, 64
    %v732 = vpop.permute.xlu0 %731
    %733 = vrot.lane.b32.xlu0 %v687, 64
    %v734 = vpop.permute.xlu0 %733
    %735 = vrot.lane.b32.xlu0 %v688, 64
    %v736 = vpop.permute.xlu0 %735
    %753 = vst.msk [vmem:[#allocation3 + $0x4] sm:$0xf] %vm366, %v706
    %754 = vst.msk [vmem:[#allocation3 + $0x10] sm:$0xf] %vm366, %v708
    %755 = vst.msk [vmem:[#allocation3 + $0x1c] sm:$0xf] %vm366, %v710
    %756 = vst.msk [vmem:[#allocation3 + $0x28] sm:$0xf] %vm366, %v712
    %757 = vst.msk [vmem:[#allocation3 + $0x34] sm:$0xf] %vm366, %v714
    %758 = vst.msk [vmem:[#allocation3 + $0x40] sm:$0xf] %vm366, %v716
    %759 = vst.msk [vmem:[#allocation3 + $0x4c] sm:$0xf] %vm366, %v718
    %760 = vst.msk [vmem:[#allocation3 + $0x58] sm:$0xf] %vm366, %v720
    %761 = vst.msk [vmem:[#allocation3 + $0x64] sm:$0xf] %vm366, %v722
    %762 = vst.msk [vmem:[#allocation3 + $0x70] sm:$0xf] %vm366, %v724
    %763 = vst.msk [vmem:[#allocation3 + $0x7c] sm:$0xf] %vm366, %v726
    %764 = vst.msk [vmem:[#allocation3 + $0x88] sm:$0xf] %vm366, %v728
    %765 = vst.msk [vmem:[#allocation3 + $0x94] sm:$0xf] %vm366, %v730
    %766 = vst.msk [vmem:[#allocation3 + $0xa0] sm:$0xf] %vm366, %v732
    %767 = vst.msk [vmem:[#allocation3 + $0xac] sm:$0xf] %vm366, %v734
    %768 = vst.msk [vmem:[#allocation3 + $0xb8] sm:$0xf] %vm366, %v736
    %v769 = vld [vmem:[%s656 + $0x1] sm:$0xff]
    %v770 = vld [vmem:[%s656 + $0x11] sm:$0xff]
    %v771 = vld [vmem:[%s656 + $0x21] sm:$0xff]
    %v772 = vld [vmem:[%s656 + $0x31] sm:$0xff]
    %v773 = vld [vmem:[%s656 + $0x41] sm:$0xff]
    %v774 = vld [vmem:[%s656 + $0x51] sm:$0xff]
    %v775 = vld [vmem:[%s656 + $0x61] sm:$0xff]
    %v776 = vld [vmem:[%s656 + $0x71] sm:$0xff]
    %v777 = vld [vmem:[%s656 + $0xa1] sm:$0xff]
    %v778 = vld [vmem:[%s656 + $0xb1] sm:$0xff]
    %v779 = vld [vmem:[%s656 + $0xc1] sm:$0xff]
    %v780 = vld [vmem:[%s656 + $0xd1] sm:$0xff]
    %v781 = vld [vmem:[%s656 + $0xe1] sm:$0xff]
    %v782 = vld [vmem:[%s656 + $0xf1] sm:$0xff]
    %v783 = vld [vmem:[%s656 + $0x101] sm:$0xff]
    %v784 = vld [vmem:[%s656 + $0x111] sm:$0xff]
    %v785 = vpack.c.bf16 %v769, %v769
    %v786 = vpack.c.bf16 %v770, %v770
    %v787 = vpack.c.bf16 %v771, %v771
    %v788 = vpack.c.bf16 %v772, %v772
    %v789 = vpack.c.bf16 %v773, %v773
    %v790 = vpack.c.bf16 %v774, %v774
    %v791 = vpack.c.bf16 %v775, %v775
    %v792 = vpack.c.bf16 %v776, %v776
    %v793 = vpack.c.bf16 %v777, %v777
    %v794 = vpack.c.bf16 %v778, %v778
    %v795 = vpack.c.bf16 %v779, %v779
    %v796 = vpack.c.bf16 %v780, %v780
    %v797 = vpack.c.bf16 %v781, %v781
    %v798 = vpack.c.bf16 %v782, %v782
    %v799 = vpack.c.bf16 %v783, %v783
    %v800 = vpack.c.bf16 %v784, %v784
    %817 = vrot.lane.b32.xlu0 %v785, 96
    %v818 = vpop.permute.xlu0 %817
    %819 = vrot.lane.b32.xlu0 %v786, 96
    %v820 = vpop.permute.xlu0 %819
    %821 = vrot.lane.b32.xlu0 %v787, 96
    %v822 = vpop.permute.xlu0 %821
    %823 = vrot.lane.b32.xlu0 %v788, 96
    %v824 = vpop.permute.xlu0 %823
    %825 = vrot.lane.b32.xlu0 %v789, 96
    %v826 = vpop.permute.xlu0 %825
    %827 = vrot.lane.b32.xlu0 %v790, 96
    %v828 = vpop.permute.xlu0 %827
    %829 = vrot.lane.b32.xlu0 %v791, 96
    %v830 = vpop.permute.xlu0 %829
    %831 = vrot.lane.b32.xlu0 %v792, 96
    %v832 = vpop.permute.xlu0 %831
    %833 = vrot.lane.b32.xlu0 %v793, 96
    %v834 = vpop.permute.xlu0 %833
    %835 = vrot.lane.b32.xlu0 %v794, 96
    %v836 = vpop.permute.xlu0 %835
    %837 = vrot.lane.b32.xlu0 %v795, 96
    %v838 = vpop.permute.xlu0 %837
    %839 = vrot.lane.b32.xlu0 %v796, 96
    %v840 = vpop.permute.xlu0 %839
    %841 = vrot.lane.b32.xlu0 %v797, 96
    %v842 = vpop.permute.xlu0 %841
    %843 = vrot.lane.b32.xlu0 %v798, 96
    %v844 = vpop.permute.xlu0 %843
    %845 = vrot.lane.b32.xlu0 %v799, 96
    %v846 = vpop.permute.xlu0 %845
    %847 = vrot.lane.b32.xlu0 %v800, 96
    %v848 = vpop.permute.xlu0 %847
    %865 = vst.msk [vmem:[#allocation3 + $0x4] sm:$0xf] %vm479, %v818
    %866 = vst.msk [vmem:[#allocation3 + $0x10] sm:$0xf] %vm479, %v820
    %867 = vst.msk [vmem:[#allocation3 + $0x1c] sm:$0xf] %vm479, %v822
    %868 = vst.msk [vmem:[#allocation3 + $0x28] sm:$0xf] %vm479, %v824
    %869 = vst.msk [vmem:[#allocation3 + $0x34] sm:$0xf] %vm479, %v826
    %870 = vst.msk [vmem:[#allocation3 + $0x40] sm:$0xf] %vm479, %v828
    %871 = vst.msk [vmem:[#allocation3 + $0x4c] sm:$0xf] %vm479, %v830
    %872 = vst.msk [vmem:[#allocation3 + $0x58] sm:$0xf] %vm479, %v832
    %873 = vst.msk [vmem:[#allocation3 + $0x64] sm:$0xf] %vm479, %v834
    %874 = vst.msk [vmem:[#allocation3 + $0x70] sm:$0xf] %vm479, %v836
    %875 = vst.msk [vmem:[#allocation3 + $0x7c] sm:$0xf] %vm479, %v838
    %876 = vst.msk [vmem:[#allocation3 + $0x88] sm:$0xf] %vm479, %v840
    %877 = vst.msk [vmem:[#allocation3 + $0x94] sm:$0xf] %vm479, %v842
    %878 = vst.msk [vmem:[#allocation3 + $0xa0] sm:$0xf] %vm479, %v844
    %879 = vst.msk [vmem:[#allocation3 + $0xac] sm:$0xf] %vm479, %v846
    %880 = vst.msk [vmem:[#allocation3 + $0xb8] sm:$0xf] %vm479, %v848
    %v881 = vld [vmem:[%s656 + $0x2] sm:$0xff]
    %v882 = vld [vmem:[%s656 + $0x12] sm:$0xff]
    %v883 = vld [vmem:[%s656 + $0x22] sm:$0xff]
    %v884 = vld [vmem:[%s656 + $0x32] sm:$0xff]
    %v885 = vld [vmem:[%s656 + $0x42] sm:$0xff]
    %v886 = vld [vmem:[%s656 + $0x52] sm:$0xff]
    %v887 = vld [vmem:[%s656 + $0x62] sm:$0xff]
    %v888 = vld [vmem:[%s656 + $0x72] sm:$0xff]
    %v889 = vld [vmem:[%s656 + $0xa2] sm:$0xff]
    %v890 = vld [vmem:[%s656 + $0xb2] sm:$0xff]
    %v891 = vld [vmem:[%s656 + $0xc2] sm:$0xff]
    %v892 = vld [vmem:[%s656 + $0xd2] sm:$0xff]
    %v893 = vld [vmem:[%s656 + $0xe2] sm:$0xff]
    %v894 = vld [vmem:[%s656 + $0xf2] sm:$0xff]
    %v895 = vld [vmem:[%s656 + $0x102] sm:$0xff]
    %v896 = vld [vmem:[%s656 + $0x112] sm:$0xff]
    %v897 = vpack.c.bf16 %v881, %v881
    %v898 = vpack.c.bf16 %v882, %v882
    %v899 = vpack.c.bf16 %v883, %v883
    %v900 = vpack.c.bf16 %v884, %v884
    %v901 = vpack.c.bf16 %v885, %v885
    %v902 = vpack.c.bf16 %v886, %v886
    %v903 = vpack.c.bf16 %v887, %v887
    %v904 = vpack.c.bf16 %v888, %v888
    %v905 = vpack.c.bf16 %v889, %v889
    %v906 = vpack.c.bf16 %v890, %v890
    %v907 = vpack.c.bf16 %v891, %v891
    %v908 = vpack.c.bf16 %v892, %v892
    %v909 = vpack.c.bf16 %v893, %v893
    %v910 = vpack.c.bf16 %v894, %v894
    %v911 = vpack.c.bf16 %v895, %v895
    %v912 = vpack.c.bf16 %v896, %v896
    %913 = vst.msk [vmem:[#allocation3 + $0x8] sm:$0xf] %vm140, %v897
    %914 = vst.msk [vmem:[#allocation3 + $0x14] sm:$0xf] %vm140, %v898
    %915 = vst.msk [vmem:[#allocation3 + $0x20] sm:$0xf] %vm140, %v899
    %916 = vst.msk [vmem:[#allocation3 + $0x2c] sm:$0xf] %vm140, %v900
    %917 = vst.msk [vmem:[#allocation3 + $0x38] sm:$0xf] %vm140, %v901
    %918 = vst.msk [vmem:[#allocation3 + $0x44] sm:$0xf] %vm140, %v902
    %919 = vst.msk [vmem:[#allocation3 + $0x50] sm:$0xf] %vm140, %v903
    %920 = vst.msk [vmem:[#allocation3 + $0x5c] sm:$0xf] %vm140, %v904
    %921 = vst.msk [vmem:[#allocation3 + $0x68] sm:$0xf] %vm140, %v905
    %922 = vst.msk [vmem:[#allocation3 + $0x74] sm:$0xf] %vm140, %v906
    %923 = vst.msk [vmem:[#allocation3 + $0x80] sm:$0xf] %vm140, %v907
    %924 = vst.msk [vmem:[#allocation3 + $0x8c] sm:$0xf] %vm140, %v908
    %925 = vst.msk [vmem:[#allocation3 + $0x98] sm:$0xf] %vm140, %v909
    %926 = vst.msk [vmem:[#allocation3 + $0xa4] sm:$0xf] %vm140, %v910
    %927 = vst.msk [vmem:[#allocation3 + $0xb0] sm:$0xf] %vm140, %v911
    %928 = vst.msk [vmem:[#allocation3 + $0xbc] sm:$0xf] %vm140, %v912
    %v929 = vld [vmem:[#allocation3] sm:$0xff]
    %v930 = vld [vmem:[#allocation3 + $0x8] sm:$0xf]
    %v931 = vld [vmem:[#allocation3 + $0xc] sm:$0xff]
    %v932 = vld [vmem:[#allocation3 + $0x14] sm:$0xf]
    %v933 = vld [vmem:[#allocation3 + $0x18] sm:$0xff]
    %v934 = vld [vmem:[#allocation3 + $0x20] sm:$0xf]
    %v935 = vld [vmem:[#allocation3 + $0x24] sm:$0xff]
    %v936 = vld [vmem:[#allocation3 + $0x2c] sm:$0xf]
    %v937 = vld [vmem:[#allocation3 + $0x30] sm:$0xff]
    %v938 = vld [vmem:[#allocation3 + $0x38] sm:$0xf]
    %v939 = vld [vmem:[#allocation3 + $0x3c] sm:$0xff]
    %v940 = vld [vmem:[#allocation3 + $0x44] sm:$0xf]
    %v941 = vld [vmem:[#allocation3 + $0x48] sm:$0xff]
    %v942 = vld [vmem:[#allocation3 + $0x50] sm:$0xf]
    %v943 = vld [vmem:[#allocation3 + $0x54] sm:$0xff]
    %v944 = vld [vmem:[#allocation3 + $0x5c] sm:$0xf]
    %v945 = vld [vmem:[#allocation3 + $0x60] sm:$0xff]
    %v946 = vld [vmem:[#allocation3 + $0x68] sm:$0xf]
    %v947 = vld [vmem:[#allocation3 + $0x6c] sm:$0xff]
    %v948 = vld [vmem:[#allocation3 + $0x74] sm:$0xf]
    %v949 = vld [vmem:[#allocation3 + $0x78] sm:$0xff]
    %v950 = vld [vmem:[#allocation3 + $0x80] sm:$0xf]
    %v951 = vld [vmem:[#allocation3 + $0x84] sm:$0xff]
    %v952 = vld [vmem:[#allocation3 + $0x8c] sm:$0xf]
    %v953 = vld [vmem:[#allocation3 + $0x90] sm:$0xff]
    %v954 = vld [vmem:[#allocation3 + $0x98] sm:$0xf]
    %v955 = vld [vmem:[#allocation3 + $0x9c] sm:$0xff]
    %v956 = vld [vmem:[#allocation3 + $0xa4] sm:$0xf]
    %v957 = vld [vmem:[#allocation3 + $0xa8] sm:$0xff]
    %v958 = vld [vmem:[#allocation3 + $0xb0] sm:$0xf]
    %v959 = vld [vmem:[#allocation3 + $0xb4] sm:$0xff]
    %v960 = vld [vmem:[#allocation3 + $0xbc] sm:$0xf]
    %v961 = vld [vmem:[%s1] sm:$0xf]
    %v962 = vld [vmem:[%s1 + $0x4] sm:$0xf]
    %v963 = vld [vmem:[%s1 + $0x8] sm:$0xf]
    %v964 = vld [vmem:[%s1 + $0xc] sm:$0xf]
    %v965 = vld [vmem:[%s1 + $0x10] sm:$0xf]
    %v966 = vld [vmem:[%s1 + $0x14] sm:$0xf]
    %v967 = vld [vmem:[%s1 + $0x18] sm:$0xf]
    %v968 = vld [vmem:[%s1 + $0x1c] sm:$0xf]
    %v969 = vld [vmem:[%s1 + $0x20] sm:$0xf]
    %v970 = vld [vmem:[%s1 + $0x24] sm:$0xf]
    %v971 = vld [vmem:[%s1 + $0x28] sm:$0xf]
    %v972 = vld [vmem:[%s1 + $0x2c] sm:$0xf]
    %v973 = vld [vmem:[%s1 + $0x30] sm:$0xf]
    %v974 = vld [vmem:[%s1 + $0x34] sm:$0xf]
    %v975 = vld [vmem:[%s1 + $0x38] sm:$0xf]
    %v976 = vld [vmem:[%s1 + $0x3c] sm:$0xf]
    %v977 = vld [vmem:[%s1 + $0x40] sm:$0xf]
    %v978 = vld [vmem:[%s1 + $0x44] sm:$0xf]
    %v979 = vld [vmem:[%s1 + $0x48] sm:$0xf]
    %v980 = vld [vmem:[%s1 + $0x4c] sm:$0xf]
    %v981 = vld [vmem:[%s1 + $0x50] sm:$0xf]
    %v982 = vld [vmem:[%s1 + $0x54] sm:$0xf]
    %v983 = vld [vmem:[%s1 + $0x58] sm:$0xf]
    %v984 = vld [vmem:[%s1 + $0x5c] sm:$0xf]
    %v985 = vld [vmem:[%s1 + $0x60] sm:$0xf]
    %v986 = vld [vmem:[%s1 + $0x64] sm:$0xf]
    %v987 = vld [vmem:[%s1 + $0x68] sm:$0xf]
    %v988 = vld [vmem:[%s1 + $0x6c] sm:$0xf]
    %v989 = vld [vmem:[%s1 + $0x70] sm:$0xf]
    %v990 = vld [vmem:[%s1 + $0x74] sm:$0xf]
    %v991 = vld [vmem:[%s1 + $0x78] sm:$0xf]
    %v992 = vld [vmem:[%s1 + $0x7c] sm:$0xf]
    %v993 = vld [vmem:[%s1 + $0x80] sm:$0xf]
    %v994 = vld [vmem:[%s1 + $0x84] sm:$0xf]
    %v995 = vld [vmem:[%s1 + $0x88] sm:$0xf]
    %v996 = vld [vmem:[%s1 + $0x8c] sm:$0xf]
    %v1029 = vunpack.c.l.b16 %v929
    %v1030 = vunpack.c.h.b16 %v929
    %v1031 = vunpack.c.l.b16 %v930
    %v1032 = vunpack.c.l.b16 %v931
    %v1033 = vunpack.c.h.b16 %v931
    %v1034 = vunpack.c.l.b16 %v932
    %v1035 = vunpack.c.l.b16 %v933
    %v1036 = vunpack.c.h.b16 %v933
    %v1037 = vunpack.c.l.b16 %v934
    %v1038 = vunpack.c.l.b16 %v935
    %v1039 = vunpack.c.h.b16 %v935
    %v1040 = vunpack.c.l.b16 %v936
    %v1041 = vunpack.c.l.b16 %v937
    %v1042 = vunpack.c.h.b16 %v937
    %v1043 = vunpack.c.l.b16 %v938
    %v1044 = vunpack.c.l.b16 %v939
    %v1045 = vunpack.c.h.b16 %v939
    %v1046 = vunpack.c.l.b16 %v940
    %v1047 = vunpack.c.l.b16 %v941
    %v1048 = vunpack.c.h.b16 %v941
    %v1049 = vunpack.c.l.b16 %v942
    %v1050 = vunpack.c.l.b16 %v943
    %v1051 = vunpack.c.h.b16 %v943
    %v1052 = vunpack.c.l.b16 %v944
    %v1053 = vunpack.c.l.b16 %v945
    %v1054 = vunpack.c.h.b16 %v945
    %v1055 = vunpack.c.l.b16 %v946
    %v1056 = vunpack.c.l.b16 %v947
    %v1057 = vunpack.c.h.b16 %v947
    %v1058 = vunpack.c.l.b16 %v948
    %v1059 = vunpack.c.l.b16 %v949
    %v1060 = vunpack.c.h.b16 %v949
    %v1061 = vunpack.c.l.b16 %v950
    %v1062 = vunpack.c.l.b16 %v951
    %v1063 = vunpack.c.h.b16 %v951
    %v1064 = vunpack.c.l.b16 %v952
    %v1065 = vunpack.c.l.b16 %v953
    %v1066 = vunpack.c.h.b16 %v953
    %v1067 = vunpack.c.l.b16 %v954
    %v1068 = vunpack.c.l.b16 %v955
    %v1069 = vunpack.c.h.b16 %v955
    %v1070 = vunpack.c.l.b16 %v956
    %v1071 = vunpack.c.l.b16 %v957
    %v1072 = vunpack.c.h.b16 %v957
    %v1073 = vunpack.c.l.b16 %v958
    %v1074 = vunpack.c.l.b16 %v959
    %v1075 = vunpack.c.h.b16 %v959
    %v1076 = vunpack.c.l.b16 %v960
    %v1077 = vpack.c.b16 %v1032, %v1029
    %v1078 = vpack.c.b16 %v1033, %v1030
    %v1079 = vpack.c.b16 %v1034, %v1031
    %v1080 = vpack.c.b16 %v1038, %v1035
    %v1081 = vpack.c.b16 %v1039, %v1036
    %v1082 = vpack.c.b16 %v1040, %v1037
    %v1083 = vpack.c.b16 %v1044, %v1041
    %v1084 = vpack.c.b16 %v1045, %v1042
    %v1085 = vpack.c.b16 %v1046, %v1043
    %v1086 = vpack.c.b16 %v1050, %v1047
    %v1087 = vpack.c.b16 %v1051, %v1048
    %v1088 = vpack.c.b16 %v1052, %v1049
    %v1089 = vpack.c.b16 %v1056, %v1053
    %v1090 = vpack.c.b16 %v1057, %v1054
    %v1091 = vpack.c.b16 %v1058, %v1055
    %v1092 = vpack.c.b16 %v1062, %v1059
    %v1093 = vpack.c.b16 %v1063, %v1060
    %v1094 = vpack.c.b16 %v1064, %v1061
    %v1095 = vpack.c.b16 %v1068, %v1065
    %v1096 = vpack.c.b16 %v1069, %v1066
    %v1097 = vpack.c.b16 %v1070, %v1067
    %v1098 = vpack.c.b16 %v1074, %v1071
    %v1099 = vpack.c.b16 %v1075, %v1072
    %v1100 = vpack.c.b16 %v1076, %v1073
    %v1153 = vunpack.c.l.b16 %v961
    %v1154 = vunpack.c.l.b16 %v962
    %v1155 = vunpack.c.l.b16 %v963
    %v1156 = vunpack.c.l.b16 %v964
    %v1157 = vunpack.c.l.b16 %v965
    %v1158 = vunpack.c.l.b16 %v966
    %v1159 = vunpack.c.l.b16 %v967
    %v1160 = vunpack.c.l.b16 %v968
    %v1161 = vunpack.c.l.b16 %v969
    %v1162 = vunpack.c.l.b16 %v970
    %v1163 = vunpack.c.l.b16 %v971
    %v1164 = vunpack.c.l.b16 %v972
    %v1165 = vunpack.c.l.b16 %v973
    %v1166 = vunpack.c.l.b16 %v974
    %v1167 = vunpack.c.l.b16 %v975
    %v1168 = vunpack.c.l.b16 %v976
    %v1169 = vunpack.c.l.b16 %v977
    %v1170 = vunpack.c.l.b16 %v978
    %v1171 = vunpack.c.l.b16 %v979
    %v1172 = vunpack.c.l.b16 %v980
    %v1173 = vunpack.c.l.b16 %v981
    %v1174 = vunpack.c.l.b16 %v982
    %v1175 = vunpack.c.l.b16 %v983
    %v1176 = vunpack.c.l.b16 %v984
    %v1177 = vunpack.c.l.b16 %v985
    %v1178 = vunpack.c.l.b16 %v986
    %v1179 = vunpack.c.l.b16 %v987
    %v1180 = vunpack.c.l.b16 %v988
    %v1181 = vunpack.c.l.b16 %v989
    %v1182 = vunpack.c.l.b16 %v990
    %v1183 = vunpack.c.l.b16 %v991
    %v1184 = vunpack.c.l.b16 %v992
    %v1185 = vunpack.c.l.b16 %v993
    %v1186 = vunpack.c.l.b16 %v994
    %v1187 = vunpack.c.l.b16 %v995
    %v1188 = vunpack.c.l.b16 %v996
    %v1189 = vpack.c.b16 %v1154, %v1153
    %v1190 = vpack.c.b16 %v1156, %v1155
    %v1191 = vpack.c.b16 %v1158, %v1157
    %v1192 = vpack.c.b16 %v1160, %v1159
    %v1193 = vpack.c.b16 %v1162, %v1161
    %v1194 = vpack.c.b16 %v1164, %v1163
    %v1195 = vpack.c.b16 %v1166, %v1165
    %v1196 = vpack.c.b16 %v1168, %v1167
    %v1197 = vpack.c.b16 %v1170, %v1169
    %v1198 = vpack.c.b16 %v1172, %v1171
    %v1199 = vpack.c.b16 %v1174, %v1173
    %v1200 = vpack.c.b16 %v1176, %v1175
    %v1201 = vpack.c.b16 %v1178, %v1177
    %v1202 = vpack.c.b16 %v1180, %v1179
    %v1203 = vpack.c.b16 %v1182, %v1181
    %v1204 = vpack.c.b16 %v1184, %v1183
    %v1205 = vpack.c.b16 %v1186, %v1185
    %v1206 = vpack.c.b16 %v1188, %v1187
    %v1226 = vsel %vm31, %v1079, 0
    %v1229 = vsel %vm31, %v1082, 0
    %v1232 = vsel %vm31, %v1085, 0
    %v1235 = vsel %vm31, %v1088, 0
    %v1238 = vsel %vm31, %v1091, 0
    %v1241 = vsel %vm31, %v1094, 0
    %v1244 = vsel %vm31, %v1097, 0
    %v1247 = vsel %vm31, %v1100, 0
    %1249 = vmatpush.bf16.msra.mxu0 %v1196
    %1250 = vmatpush.bf16.msra.mxu0 %v1195
    %1251 = vmatpush.bf16.msra.mxu0 %v1194
    %1252 = vmatpush.bf16.msra.mxu0 %v1193
    %1253 = vmatpush.bf16.msra.mxu0 %v1192
    %1254 = vmatpush.bf16.msra.mxu0 %v1191
    %1255 = vmatpush.bf16.msra.mxu0 %v1190
    %1256 = vmatpush.bf16.msra.mxu0 %v1189
    %1257 = vmatmul.bf16.gmra.mxu0 %v1077
    %v1258 = vpop.f32.mrf.mxu0
    %v1259 = vadd.f32 0.0, %v1258
    %v1260 = vpop.f32.mrf.mxu0
    %v1261 = vadd.f32 0.0, %v1260
    %1262 = vmatmul.bf16.gmra.mxu0 %v1080
    %v1263 = vpop.f32.mrf.mxu0
    %v1264 = vadd.f32 0.0, %v1263
    %v1265 = vpop.f32.mrf.mxu0
    %v1266 = vadd.f32 0.0, %v1265
    %1267 = vmatmul.bf16.gmra.mxu0 %v1083
    %v1268 = vpop.f32.mrf.mxu0
    %v1269 = vadd.f32 0.0, %v1268
    %v1270 = vpop.f32.mrf.mxu0
    %v1271 = vadd.f32 0.0, %v1270
    %1272 = vmatmul.bf16.gmra.mxu0 %v1086
    %v1273 = vpop.f32.mrf.mxu0
    %v1274 = vadd.f32 0.0, %v1273
    %v1275 = vpop.f32.mrf.mxu0
    %v1276 = vadd.f32 0.0, %v1275
    %1277 = vmatmul.bf16.gmra.mxu0 %v1089
    %v1278 = vpop.f32.mrf.mxu0
    %v1279 = vadd.f32 0.0, %v1278
    %v1280 = vpop.f32.mrf.mxu0
    %v1281 = vadd.f32 0.0, %v1280
    %1282 = vmatmul.bf16.gmra.mxu0 %v1092
    %v1283 = vpop.f32.mrf.mxu0
    %v1284 = vadd.f32 0.0, %v1283
    %v1285 = vpop.f32.mrf.mxu0
    %v1286 = vadd.f32 0.0, %v1285
    %1287 = vmatmul.bf16.gmra.mxu0 %v1095
    %v1288 = vpop.f32.mrf.mxu0
    %v1289 = vadd.f32 0.0, %v1288
    %v1290 = vpop.f32.mrf.mxu0
    %v1291 = vadd.f32 0.0, %v1290
    %1292 = vmatmul.bf16.gmra.mxu0 %v1098
    %v1293 = vpop.f32.mrf.mxu0
    %v1294 = vadd.f32 0.0, %v1293
    %v1295 = vpop.f32.mrf.mxu0
    %v1296 = vadd.f32 0.0, %v1295
    %1297 = vdwg.mxu0
    %1298 = vmatpush.bf16.msra.mxu0 %v1204
    %1299 = vmatpush.bf16.msra.mxu0 %v1203
    %1300 = vmatpush.bf16.msra.mxu0 %v1202
    %1301 = vmatpush.bf16.msra.mxu0 %v1201
    %1302 = vmatpush.bf16.msra.mxu0 %v1200
    %1303 = vmatpush.bf16.msra.mxu0 %v1199
    %1304 = vmatpush.bf16.msra.mxu0 %v1198
    %1305 = vmatpush.bf16.msra.mxu0 %v1197
    %1306 = vmatmul.bf16.gmra.mxu0 %v1078
    %v1307 = vpop.f32.mrf.mxu0
    %v1308 = vadd.f32 %v1259, %v1307
    %v1309 = vpop.f32.mrf.mxu0
    %v1310 = vadd.f32 %v1261, %v1309
    %1311 = vmatmul.bf16.gmra.mxu0 %v1081
    %v1312 = vpop.f32.mrf.mxu0
    %v1313 = vadd.f32 %v1264, %v1312
    %v1314 = vpop.f32.mrf.mxu0
    %v1315 = vadd.f32 %v1266, %v1314
    %1316 = vmatmul.bf16.gmra.mxu0 %v1084
    %v1317 = vpop.f32.mrf.mxu0
    %v1318 = vadd.f32 %v1269, %v1317
    %v1319 = vpop.f32.mrf.mxu0
    %v1320 = vadd.f32 %v1271, %v1319
    %1321 = vmatmul.bf16.gmra.mxu0 %v1087
    %v1322 = vpop.f32.mrf.mxu0
    %v1323 = vadd.f32 %v1274, %v1322
    %v1324 = vpop.f32.mrf.mxu0
    %v1325 = vadd.f32 %v1276, %v1324
    %1326 = vmatmul.bf16.gmra.mxu0 %v1090
    %v1327 = vpop.f32.mrf.mxu0
    %v1328 = vadd.f32 %v1279, %v1327
    %v1329 = vpop.f32.mrf.mxu0
    %v1330 = vadd.f32 %v1281, %v1329
    %1331 = vmatmul.bf16.gmra.mxu0 %v1093
    %v1332 = vpop.f32.mrf.mxu0
    %v1333 = vadd.f32 %v1284, %v1332
    %v1334 = vpop.f32.mrf.mxu0
    %v1335 = vadd.f32 %v1286, %v1334
    %1336 = vmatmul.bf16.gmra.mxu0 %v1096
    %v1337 = vpop.f32.mrf.mxu0
    %v1338 = vadd.f32 %v1289, %v1337
    %v1339 = vpop.f32.mrf.mxu0
    %v1340 = vadd.f32 %v1291, %v1339
    %1341 = vmatmul.bf16.gmra.mxu0 %v1099
    %v1342 = vpop.f32.mrf.mxu0
    %v1343 = vadd.f32 %v1294, %v1342
    %v1344 = vpop.f32.mrf.mxu0
    %v1345 = vadd.f32 %v1296, %v1344
    %1346 = vdwg.mxu0
    %1347 = vmatpush.bf16.msra.mxu0 0
    %1348 = vmatpush.bf16.msra.mxu0 0
    %1349 = vmatpush.bf16.msra.mxu0 0
    %1350 = vmatpush.bf16.msra.mxu0 0
    %1351 = vmatpush.bf16.msra.mxu0 0
    %1352 = vmatpush.bf16.msra.mxu0 0
    %1353 = vmatpush.bf16.msra.mxu0 %v1206
    %1354 = vmatpush.bf16.msra.mxu0 %v1205
    %1355 = vmatmul.bf16.gmra.mxu0 %v1226
    %v1356 = vpop.f32.mrf.mxu0
    %v1357 = vadd.f32 %v1308, %v1356
    %v1358 = vpop.f32.mrf.mxu0
    %v1359 = vadd.f32 %v1310, %v1358
    %1360 = vmatmul.bf16.gmra.mxu0 %v1229
    %v1361 = vpop.f32.mrf.mxu0
    %v1362 = vadd.f32 %v1313, %v1361
    %v1363 = vpop.f32.mrf.mxu0
    %v1364 = vadd.f32 %v1315, %v1363
    %1365 = vmatmul.bf16.gmra.mxu0 %v1232
    %v1366 = vpop.f32.mrf.mxu0
    %v1367 = vadd.f32 %v1318, %v1366
    %v1368 = vpop.f32.mrf.mxu0
    %v1369 = vadd.f32 %v1320, %v1368
    %1370 = vmatmul.bf16.gmra.mxu0 %v1235
    %v1371 = vpop.f32.mrf.mxu0
    %v1372 = vadd.f32 %v1323, %v1371
    %v1373 = vpop.f32.mrf.mxu0
    %v1374 = vadd.f32 %v1325, %v1373
    %1375 = vmatmul.bf16.gmra.mxu0 %v1238
    %v1376 = vpop.f32.mrf.mxu0
    %v1377 = vadd.f32 %v1328, %v1376
    %v1378 = vpop.f32.mrf.mxu0
    %v1379 = vadd.f32 %v1330, %v1378
    %1380 = vmatmul.bf16.gmra.mxu0 %v1241
    %v1381 = vpop.f32.mrf.mxu0
    %v1382 = vadd.f32 %v1333, %v1381
    %v1383 = vpop.f32.mrf.mxu0
    %v1384 = vadd.f32 %v1335, %v1383
    %1385 = vmatmul.bf16.gmra.mxu0 %v1244
    %v1386 = vpop.f32.mrf.mxu0
    %v1387 = vadd.f32 %v1338, %v1386
    %v1388 = vpop.f32.mrf.mxu0
    %v1389 = vadd.f32 %v1340, %v1388
    %1390 = vmatmul.bf16.gmra.mxu0 %v1247
    %v1391 = vpop.f32.mrf.mxu0
    %v1392 = vadd.f32 %v1343, %v1391
    %v1393 = vpop.f32.mrf.mxu0
    %v1394 = vadd.f32 %v1345, %v1393
    %1395 = vdwg.mxu0
    %v1396 = vsel %vm31, %v1357, 0.0
    %v1397 = vsel %vm31, %v1359, 0.0
    %v1398 = vadd.f32 %v1396, %v1397
    %v1399 = vsel %vm31, %v1362, 0.0
    %v1400 = vadd.f32 %v1398, %v1399
    %v1401 = vsel %vm31, %v1364, 0.0
    %v1402 = vadd.f32 %v1400, %v1401
    %v1403 = vsel %vm31, %v1367, 0.0
    %v1404 = vadd.f32 %v1402, %v1403
    %v1405 = vsel %vm31, %v1369, 0.0
    %v1406 = vadd.f32 %v1404, %v1405
    %v1407 = vsel %vm31, %v1372, 0.0
    %v1408 = vadd.f32 %v1406, %v1407
    %v1409 = vsel %vm31, %v1374, 0.0
    %v1410 = vadd.f32 %v1408, %v1409
    %v1411 = vsel %vm31, %v1377, 0.0
    %v1412 = vadd.f32 %v1410, %v1411
    %v1413 = vsel %vm31, %v1379, 0.0
    %v1414 = vadd.f32 %v1412, %v1413
    %v1415 = vsel %vm31, %v1382, 0.0
    %v1416 = vadd.f32 %v1414, %v1415
    %v1417 = vsel %vm31, %v1384, 0.0
    %v1418 = vadd.f32 %v1416, %v1417
    %v1419 = vsel %vm31, %v1387, 0.0
    %v1420 = vadd.f32 %v1418, %v1419
    %v1421 = vsel %vm31, %v1389, 0.0
    %v1422 = vadd.f32 %v1420, %v1421
    %v1423 = vsel %vm31, %v1392, 0.0
    %v1424 = vadd.f32 %v1422, %v1423
    %v1425 = vsel %vm31, %v1394, 0.0
    %v1426 = vadd.f32 %v1424, %v1425
    %v1427 = vrot.slane %v1426, 4
    %v1428 = vadd.f32 %v1426, %v1427
    %v1429 = vrot.slane %v1428, 2
    %v1430 = vadd.f32 %v1428, %v1429
    %v1431 = vrot.slane %v1430, 1
    %v1432 = vadd.f32 %v1430, %v1431
    %v1433 = vmul.f32 %v1357, %v1357
    %v1434 = vmul.f32 %v1359, %v1359
    %v1435 = vmul.f32 %v1362, %v1362
    %v1436 = vmul.f32 %v1364, %v1364
    %v1437 = vmul.f32 %v1367, %v1367
    %v1438 = vmul.f32 %v1369, %v1369
    %v1439 = vmul.f32 %v1372, %v1372
    %v1440 = vmul.f32 %v1374, %v1374
    %v1441 = vmul.f32 %v1377, %v1377
    %v1442 = vmul.f32 %v1379, %v1379
    %v1443 = vmul.f32 %v1382, %v1382
    %v1444 = vmul.f32 %v1384, %v1384
    %v1445 = vmul.f32 %v1387, %v1387
    %v1446 = vmul.f32 %v1389, %v1389
    %v1447 = vmul.f32 %v1392, %v1392
    %v1448 = vmul.f32 %v1394, %v1394
    %v1449 = vsel %vm31, %v1433, 0.0
    %v1450 = vsel %vm31, %v1434, 0.0
    %v1451 = vadd.f32 %v1449, %v1450
    %v1452 = vsel %vm31, %v1435, 0.0
    %v1453 = vadd.f32 %v1451, %v1452
    %v1454 = vsel %vm31, %v1436, 0.0
    %v1455 = vadd.f32 %v1453, %v1454
    %v1456 = vsel %vm31, %v1437, 0.0
    %v1457 = vadd.f32 %v1455, %v1456
    %v1458 = vsel %vm31, %v1438, 0.0
    %v1459 = vadd.f32 %v1457, %v1458
    %v1460 = vsel %vm31, %v1439, 0.0
    %v1461 = vadd.f32 %v1459, %v1460
    %v1462 = vsel %vm31, %v1440, 0.0
    %v1463 = vadd.f32 %v1461, %v1462
    %v1464 = vsel %vm31, %v1441, 0.0
    %v1465 = vadd.f32 %v1463, %v1464
    %v1466 = vsel %vm31, %v1442, 0.0
    %v1467 = vadd.f32 %v1465, %v1466
    %v1468 = vsel %vm31, %v1443, 0.0
    %v1469 = vadd.f32 %v1467, %v1468
    %v1470 = vsel %vm31, %v1444, 0.0
    %v1471 = vadd.f32 %v1469, %v1470
    %v1472 = vsel %vm31, %v1445, 0.0
    %v1473 = vadd.f32 %v1471, %v1472
    %v1474 = vsel %vm31, %v1446, 0.0
    %v1475 = vadd.f32 %v1473, %v1474
    %v1476 = vsel %vm31, %v1447, 0.0
    %v1477 = vadd.f32 %v1475, %v1476
    %v1478 = vsel %vm31, %v1448, 0.0
    %v1479 = vadd.f32 %v1477, %v1478
    %v1480 = vrot.slane %v1479, 4
    %v1481 = vadd.f32 %v1479, %v1480
    %v1482 = vrot.slane %v1481, 2
    %v1483 = vadd.f32 %v1481, %v1482
    %v1484 = vrot.slane %v1483, 1
    %v1485 = vadd.f32 %v1483, %v1484
    %v1486 = vmul.f32 %v1432, 0.0078125
    %v1487 = vmul.f32 %v1485, 0.0078125
    %v1488 = vmul.f32 %v1486, %v1486
    %v1489 = vsub.f32 %v1487, %v1488
    %v1490 = vadd.f32 %v1489, 1e-05
    %v1491 = vrsqrt.pop %v1490
    %v1492 = vmul.f32 %v1491, %v1490
    %v1493 = vmul.f32 %v1492, %v1491
    %v1494 = vmul.f32 0.5, %v1493
    %v1495 = vsub.f32 1.5, %v1494
    %v1496 = vmul.f32 %v1491, %v1495
    %vm1497 = vweird.f32 %v1490
    %vm1498 = vweird.f32 %v1491
    %vm1499 = vmor %vm1497, %vm1498
    %v1500 = vsel %vm1499, %v1491, %v1496
    %v1501 = vld [vmem:[%s2] sm:$0x1]
    %v1502 = vmul.f32 %v1500, %v1501
    %v1503 = vld [vmem:[%s3] sm:$0x1]
    %v1504 = vmul.f32 %v1486, %v1502
    %v1505 = vsub.f32 %v1503, %v1504
    %v1506 = vperm.slane %v1502, 0
    %v1507 = vmul.f32 %v1357, %v1506
    %v1508 = vmul.f32 %v1359, %v1506
    %v1509 = vmul.f32 %v1362, %v1506
    %v1510 = vmul.f32 %v1364, %v1506
    %v1511 = vmul.f32 %v1367, %v1506
    %v1512 = vmul.f32 %v1369, %v1506
    %v1513 = vmul.f32 %v1372, %v1506
    %v1514 = vmul.f32 %v1374, %v1506
    %v1515 = vmul.f32 %v1377, %v1506
    %v1516 = vmul.f32 %v1379, %v1506
    %v1517 = vmul.f32 %v1382, %v1506
    %v1518 = vmul.f32 %v1384, %v1506
    %v1519 = vmul.f32 %v1387, %v1506
    %v1520 = vmul.f32 %v1389, %v1506
    %v1521 = vmul.f32 %v1392, %v1506
    %v1522 = vmul.f32 %v1394, %v1506
    %v1524 = vperm.slane %v1505, 0
    %v1526 = vadd.f32 %v1507, %v1524
    %v1527 = vadd.f32 %v1508, %v1524
    %v1528 = vadd.f32 %v1509, %v1524
    %v1529 = vadd.f32 %v1510, %v1524
    %v1530 = vadd.f32 %v1511, %v1524
    %v1531 = vadd.f32 %v1512, %v1524
    %v1532 = vadd.f32 %v1513, %v1524
    %v1533 = vadd.f32 %v1514, %v1524
    %v1534 = vadd.f32 %v1515, %v1524
    %v1535 = vadd.f32 %v1516, %v1524
    %v1536 = vadd.f32 %v1517, %v1524
    %v1537 = vadd.f32 %v1518, %v1524
    %v1538 = vadd.f32 %v1519, %v1524
    %v1539 = vadd.f32 %v1520, %v1524
    %v1540 = vadd.f32 %v1521, %v1524
    %v1541 = vadd.f32 %v1522, %v1524
    %vm1542 = vcmp.ge.f32.partialorder %v1526, 0.0
    %vm1543 = vcmp.ge.f32.partialorder %v1527, 0.0
    %vm1544 = vcmp.ge.f32.partialorder %v1528, 0.0
    %vm1545 = vcmp.ge.f32.partialorder %v1529, 0.0
    %vm1546 = vcmp.ge.f32.partialorder %v1530, 0.0
    %vm1547 = vcmp.ge.f32.partialorder %v1531, 0.0
    %vm1548 = vcmp.ge.f32.partialorder %v1532, 0.0
    %vm1549 = vcmp.ge.f32.partialorder %v1533, 0.0
    %vm1550 = vcmp.ge.f32.partialorder %v1534, 0.0
    %vm1551 = vcmp.ge.f32.partialorder %v1535, 0.0
    %vm1552 = vcmp.ge.f32.partialorder %v1536, 0.0
    %vm1553 = vcmp.ge.f32.partialorder %v1537, 0.0
    %vm1554 = vcmp.ge.f32.partialorder %v1538, 0.0
    %vm1555 = vcmp.ge.f32.partialorder %v1539, 0.0
    %vm1556 = vcmp.ge.f32.partialorder %v1540, 0.0
    %vm1557 = vcmp.ge.f32.partialorder %v1541, 0.0
    %v1558 = vld [vmem:[%s4] sm:$0x1]
    %v1560 = vperm.slane %v1558, 0
    %v1562 = vmul.f32 %v1560, %v1526
    %v1563 = vmul.f32 %v1560, %v1527
    %v1564 = vmul.f32 %v1560, %v1528
    %v1565 = vmul.f32 %v1560, %v1529
    %v1566 = vmul.f32 %v1560, %v1530
    %v1567 = vmul.f32 %v1560, %v1531
    %v1568 = vmul.f32 %v1560, %v1532
    %v1569 = vmul.f32 %v1560, %v1533
    %v1570 = vmul.f32 %v1560, %v1534
    %v1571 = vmul.f32 %v1560, %v1535
    %v1572 = vmul.f32 %v1560, %v1536
    %v1573 = vmul.f32 %v1560, %v1537
    %v1574 = vmul.f32 %v1560, %v1538
    %v1575 = vmul.f32 %v1560, %v1539
    %v1576 = vmul.f32 %v1560, %v1540
    %v1577 = vmul.f32 %v1560, %v1541
    %v1578 = vsel %vm1542, %v1526, %v1562
    %v1579 = vsel %vm1543, %v1527, %v1563
    %v1580 = vsel %vm1544, %v1528, %v1564
    %v1581 = vsel %vm1545, %v1529, %v1565
    %v1582 = vsel %vm1546, %v1530, %v1566
    %v1583 = vsel %vm1547, %v1531, %v1567
    %v1584 = vsel %vm1548, %v1532, %v1568
    %v1585 = vsel %vm1549, %v1533, %v1569
    %v1586 = vsel %vm1550, %v1534, %v1570
    %v1587 = vsel %vm1551, %v1535, %v1571
    %v1588 = vsel %vm1552, %v1536, %v1572
    %v1589 = vsel %vm1553, %v1537, %v1573
    %v1590 = vsel %vm1554, %v1538, %v1574
    %v1591 = vsel %vm1555, %v1539, %v1575
    %v1592 = vsel %vm1556, %v1540, %v1576
    %v1593 = vsel %vm1557, %v1541, %v1577
    %1594 = vst.msk [vmem:[%s42 + $0x1] sm:$0xff] %vm31, %v1578
    %1595 = vst.msk [vmem:[%s42 + $0x11] sm:$0xff] %vm31, %v1579
    %1596 = vst.msk [vmem:[%s42 + $0x21] sm:$0xff] %vm31, %v1580
    %1597 = vst.msk [vmem:[%s42 + $0x31] sm:$0xff] %vm31, %v1581
    %1598 = vst.msk [vmem:[%s42 + $0x41] sm:$0xff] %vm31, %v1582
    %1599 = vst.msk [vmem:[%s42 + $0x51] sm:$0xff] %vm31, %v1583
    %1600 = vst.msk [vmem:[%s42 + $0x61] sm:$0xff] %vm31, %v1584
    %1601 = vst.msk [vmem:[%s42 + $0x71] sm:$0xff] %vm31, %v1585
    %1602 = vst.msk [vmem:[%s42 + $0xa1] sm:$0xff] %vm31, %v1586
    %1603 = vst.msk [vmem:[%s42 + $0xb1] sm:$0xff] %vm31, %v1587
    %1604 = vst.msk [vmem:[%s42 + $0xc1] sm:$0xff] %vm31, %v1588
    %1605 = vst.msk [vmem:[%s42 + $0xd1] sm:$0xff] %vm31, %v1589
    %1606 = vst.msk [vmem:[%s42 + $0xe1] sm:$0xff] %vm31, %v1590
    %1607 = vst.msk [vmem:[%s42 + $0xf1] sm:$0xff] %vm31, %v1591
    %1608 = vst.msk [vmem:[%s42 + $0x101] sm:$0xff] %vm31, %v1592
    %1609 = vst.msk [vmem:[%s42 + $0x111] sm:$0xff] %vm31, %v1593
    %v1610 = vld [vmem:[#allocation2] sm:$0xff]
    %v1611 = vld [vmem:[#allocation2 + $0x10] sm:$0xff]
    %v1612 = vld [vmem:[#allocation2 + $0x20] sm:$0xff]
    %v1613 = vld [vmem:[#allocation2 + $0x30] sm:$0xff]
    %v1614 = vld [vmem:[#allocation2 + $0x40] sm:$0xff]
    %v1615 = vld [vmem:[#allocation2 + $0x50] sm:$0xff]
    %v1616 = vld [vmem:[#allocation2 + $0x60] sm:$0xff]
    %v1617 = vld [vmem:[#allocation2 + $0x70] sm:$0xff]
    %v1618 = vld [vmem:[#allocation2 + $0xa0] sm:$0xff]
    %v1619 = vld [vmem:[#allocation2 + $0xb0] sm:$0xff]
    %v1620 = vld [vmem:[#allocation2 + $0xc0] sm:$0xff]
    %v1621 = vld [vmem:[#allocation2 + $0xd0] sm:$0xff]
    %v1622 = vld [vmem:[#allocation2 + $0xe0] sm:$0xff]
    %v1623 = vld [vmem:[#allocation2 + $0xf0] sm:$0xff]
    %v1624 = vld [vmem:[#allocation2 + $0x100] sm:$0xff]
    %v1625 = vld [vmem:[#allocation2 + $0x110] sm:$0xff]
    %v1626 = vpack.c.bf16 %v1610, %v1610
    %v1627 = vpack.c.bf16 %v1611, %v1611
    %v1628 = vpack.c.bf16 %v1612, %v1612
    %v1629 = vpack.c.bf16 %v1613, %v1613
    %v1630 = vpack.c.bf16 %v1614, %v1614
    %v1631 = vpack.c.bf16 %v1615, %v1615
    %v1632 = vpack.c.bf16 %v1616, %v1616
    %v1633 = vpack.c.bf16 %v1617, %v1617
    %v1634 = vpack.c.bf16 %v1618, %v1618
    %v1635 = vpack.c.bf16 %v1619, %v1619
    %v1636 = vpack.c.bf16 %v1620, %v1620
    %v1637 = vpack.c.bf16 %v1621, %v1621
    %v1638 = vpack.c.bf16 %v1622, %v1622
    %v1639 = vpack.c.bf16 %v1623, %v1623
    %v1640 = vpack.c.bf16 %v1624, %v1624
    %v1641 = vpack.c.bf16 %v1625, %v1625
    %1642 = vst.msk [vmem:[#allocation3] sm:$0xf] %vm140, %v1626
    %1643 = vst.msk [vmem:[#allocation3 + $0xc] sm:$0xf] %vm140, %v1627
    %1644 = vst.msk [vmem:[#allocation3 + $0x18] sm:$0xf] %vm140, %v1628
    %1645 = vst.msk [vmem:[#allocation3 + $0x24] sm:$0xf] %vm140, %v1629
    %1646 = vst.msk [vmem:[#allocation3 + $0x30] sm:$0xf] %vm140, %v1630
    %1647 = vst.msk [vmem:[#allocation3 + $0x3c] sm:$0xf] %vm140, %v1631
    %1648 = vst.msk [vmem:[#allocation3 + $0x48] sm:$0xf] %vm140, %v1632
    %1649 = vst.msk [vmem:[#allocation3 + $0x54] sm:$0xf] %vm140, %v1633
    %1650 = vst.msk [vmem:[#allocation3 + $0x60] sm:$0xf] %vm140, %v1634
    %1651 = vst.msk [vmem:[#allocation3 + $0x6c] sm:$0xf] %vm140, %v1635
    %1652 = vst.msk [vmem:[#allocation3 + $0x78] sm:$0xf] %vm140, %v1636
    %1653 = vst.msk [vmem:[#allocation3 + $0x84] sm:$0xf] %vm140, %v1637
    %1654 = vst.msk [vmem:[#allocation3 + $0x90] sm:$0xf] %vm140, %v1638
    %1655 = vst.msk [vmem:[#allocation3 + $0x9c] sm:$0xf] %vm140, %v1639
    %1656 = vst.msk [vmem:[#allocation3 + $0xa8] sm:$0xf] %vm140, %v1640
    %1657 = vst.msk [vmem:[#allocation3 + $0xb4] sm:$0xf] %vm140, %v1641
    %v1658 = vld [vmem:[#allocation2 + $0x1] sm:$0xff]
    %v1659 = vld [vmem:[#allocation2 + $0x11] sm:$0xff]
    %v1660 = vld [vmem:[#allocation2 + $0x21] sm:$0xff]
    %v1661 = vld [vmem:[#allocation2 + $0x31] sm:$0xff]
    %v1662 = vld [vmem:[#allocation2 + $0x41] sm:$0xff]
    %v1663 = vld [vmem:[#allocation2 + $0x51] sm:$0xff]
    %v1664 = vld [vmem:[#allocation2 + $0x61] sm:$0xff]
    %v1665 = vld [vmem:[#allocation2 + $0x71] sm:$0xff]
    %v1666 = vld [vmem:[#allocation2 + $0xa1] sm:$0xff]
    %v1667 = vld [vmem:[#allocation2 + $0xb1] sm:$0xff]
    %v1668 = vld [vmem:[#allocation2 + $0xc1] sm:$0xff]
    %v1669 = vld [vmem:[#allocation2 + $0xd1] sm:$0xff]
    %v1670 = vld [vmem:[#allocation2 + $0xe1] sm:$0xff]
    %v1671 = vld [vmem:[#allocation2 + $0xf1] sm:$0xff]
    %v1672 = vld [vmem:[#allocation2 + $0x101] sm:$0xff]
    %v1673 = vld [vmem:[#allocation2 + $0x111] sm:$0xff]
    %v1674 = vpack.c.bf16 %v1658, %v1658
    %v1675 = vpack.c.bf16 %v1659, %v1659
    %v1676 = vpack.c.bf16 %v1660, %v1660
    %v1677 = vpack.c.bf16 %v1661, %v1661
    %v1678 = vpack.c.bf16 %v1662, %v1662
    %v1679 = vpack.c.bf16 %v1663, %v1663
    %v1680 = vpack.c.bf16 %v1664, %v1664
    %v1681 = vpack.c.bf16 %v1665, %v1665
    %v1682 = vpack.c.bf16 %v1666, %v1666
    %v1683 = vpack.c.bf16 %v1667, %v1667
    %v1684 = vpack.c.bf16 %v1668, %v1668
    %v1685 = vpack.c.bf16 %v1669, %v1669
    %v1686 = vpack.c.bf16 %v1670, %v1670
    %v1687 = vpack.c.bf16 %v1671, %v1671
    %v1688 = vpack.c.bf16 %v1672, %v1672
    %v1689 = vpack.c.bf16 %v1673, %v1673
    %1706 = vrot.lane.b32.xlu0 %v1674, 32
    %v1707 = vpop.permute.xlu0 %1706
    %1708 = vrot.lane.b32.xlu0 %v1675, 32
    %v1709 = vpop.permute.xlu0 %1708
    %1710 = vrot.lane.b32.xlu0 %v1676, 32
    %v1711 = vpop.permute.xlu0 %1710
    %1712 = vrot.lane.b32.xlu0 %v1677, 32
    %v1713 = vpop.permute.xlu0 %1712
    %1714 = vrot.lane.b32.xlu0 %v1678, 32
    %v1715 = vpop.permute.xlu0 %1714
    %1716 = vrot.lane.b32.xlu0 %v1679, 32
    %v1717 = vpop.permute.xlu0 %1716
    %1718 = vrot.lane.b32.xlu0 %v1680, 32
    %v1719 = vpop.permute.xlu0 %1718
    %1720 = vrot.lane.b32.xlu0 %v1681, 32
    %v1721 = vpop.permute.xlu0 %1720
    %1722 = vrot.lane.b32.xlu0 %v1682, 32
    %v1723 = vpop.permute.xlu0 %1722
    %1724 = vrot.lane.b32.xlu0 %v1683, 32
    %v1725 = vpop.permute.xlu0 %1724
    %1726 = vrot.lane.b32.xlu0 %v1684, 32
    %v1727 = vpop.permute.xlu0 %1726
    %1728 = vrot.lane.b32.xlu0 %v1685, 32
    %v1729 = vpop.permute.xlu0 %1728
    %1730 = vrot.lane.b32.xlu0 %v1686, 32
    %v1731 = vpop.permute.xlu0 %1730
    %1732 = vrot.lane.b32.xlu0 %v1687, 32
    %v1733 = vpop.permute.xlu0 %1732
    %1734 = vrot.lane.b32.xlu0 %v1688, 32
    %v1735 = vpop.permute.xlu0 %1734
    %1736 = vrot.lane.b32.xlu0 %v1689, 32
    %v1737 = vpop.permute.xlu0 %1736
    %1754 = vst.msk [vmem:[#allocation3] sm:$0xf] %vm253, %v1707
    %1755 = vst.msk [vmem:[#allocation3 + $0xc] sm:$0xf] %vm253, %v1709
    %1756 = vst.msk [vmem:[#allocation3 + $0x18] sm:$0xf] %vm253, %v1711
    %1757 = vst.msk [vmem:[#allocation3 + $0x24] sm:$0xf] %vm253, %v1713
    %1758 = vst.msk [vmem:[#allocation3 + $0x30] sm:$0xf] %vm253, %v1715
    %1759 = vst.msk [vmem:[#allocation3 + $0x3c] sm:$0xf] %vm253, %v1717
    %1760 = vst.msk [vmem:[#allocation3 + $0x48] sm:$0xf] %vm253, %v1719
    %1761 = vst.msk [vmem:[#allocation3 + $0x54] sm:$0xf] %vm253, %v1721
    %1762 = vst.msk [vmem:[#allocation3 + $0x60] sm:$0xf] %vm253, %v1723
    %1763 = vst.msk [vmem:[#allocation3 + $0x6c] sm:$0xf] %vm253, %v1725
    %1764 = vst.msk [vmem:[#allocation3 + $0x78] sm:$0xf] %vm253, %v1727
    %1765 = vst.msk [vmem:[#allocation3 + $0x84] sm:$0xf] %vm253, %v1729
    %1766 = vst.msk [vmem:[#allocation3 + $0x90] sm:$0xf] %vm253, %v1731
    %1767 = vst.msk [vmem:[#allocation3 + $0x9c] sm:$0xf] %vm253, %v1733
    %1768 = vst.msk [vmem:[#allocation3 + $0xa8] sm:$0xf] %vm253, %v1735
    %1769 = vst.msk [vmem:[#allocation3 + $0xb4] sm:$0xf] %vm253, %v1737
    %v1770 = vld [vmem:[#allocation2 + $0x2] sm:$0xff]
    %v1771 = vld [vmem:[#allocation2 + $0x12] sm:$0xff]
    %v1772 = vld [vmem:[#allocation2 + $0x22] sm:$0xff]
    %v1773 = vld [vmem:[#allocation2 + $0x32] sm:$0xff]
    %v1774 = vld [vmem:[#allocation2 + $0x42] sm:$0xff]
    %v1775 = vld [vmem:[#allocation2 + $0x52] sm:$0xff]
    %v1776 = vld [vmem:[#allocation2 + $0x62] sm:$0xff]
    %v1777 = vld [vmem:[#allocation2 + $0x72] sm:$0xff]
    %v1778 = vld [vmem:[#allocation2 + $0xa2] sm:$0xff]
    %v1779 = vld [vmem:[#allocation2 + $0xb2] sm:$0xff]
    %v1780 = vld [vmem:[#allocation2 + $0xc2] sm:$0xff]
    %v1781 = vld [vmem:[#allocation2 + $0xd2] sm:$0xff]
    %v1782 = vld [vmem:[#allocation2 + $0xe2] sm:$0xff]
    %v1783 = vld [vmem:[#allocation2 + $0xf2] sm:$0xff]
    %v1784 = vld [vmem:[#allocation2 + $0x102] sm:$0xff]
    %v1785 = vld [vmem:[#allocation2 + $0x112] sm:$0xff]
    %v1786 = vpack.c.bf16 %v1770, %v1770
    %v1787 = vpack.c.bf16 %v1771, %v1771
    %v1788 = vpack.c.bf16 %v1772, %v1772
    %v1789 = vpack.c.bf16 %v1773, %v1773
    %v1790 = vpack.c.bf16 %v1774, %v1774
    %v1791 = vpack.c.bf16 %v1775, %v1775
    %v1792 = vpack.c.bf16 %v1776, %v1776
    %v1793 = vpack.c.bf16 %v1777, %v1777
    %v1794 = vpack.c.bf16 %v1778, %v1778
    %v1795 = vpack.c.bf16 %v1779, %v1779
    %v1796 = vpack.c.bf16 %v1780, %v1780
    %v1797 = vpack.c.bf16 %v1781, %v1781
    %v1798 = vpack.c.bf16 %v1782, %v1782
    %v1799 = vpack.c.bf16 %v1783, %v1783
    %v1800 = vpack.c.bf16 %v1784, %v1784
    %v1801 = vpack.c.bf16 %v1785, %v1785
    %1818 = vrot.lane.b32.xlu0 %v1786, 64
    %v1819 = vpop.permute.xlu0 %1818
    %1820 = vrot.lane.b32.xlu0 %v1787, 64
    %v1821 = vpop.permute.xlu0 %1820
    %1822 = vrot.lane.b32.xlu0 %v1788, 64
    %v1823 = vpop.permute.xlu0 %1822
    %1824 = vrot.lane.b32.xlu0 %v1789, 64
    %v1825 = vpop.permute.xlu0 %1824
    %1826 = vrot.lane.b32.xlu0 %v1790, 64
    %v1827 = vpop.permute.xlu0 %1826
    %1828 = vrot.lane.b32.xlu0 %v1791, 64
    %v1829 = vpop.permute.xlu0 %1828
    %1830 = vrot.lane.b32.xlu0 %v1792, 64
    %v1831 = vpop.permute.xlu0 %1830
    %1832 = vrot.lane.b32.xlu0 %v1793, 64
    %v1833 = vpop.permute.xlu0 %1832
    %1834 = vrot.lane.b32.xlu0 %v1794, 64
    %v1835 = vpop.permute.xlu0 %1834
    %1836 = vrot.lane.b32.xlu0 %v1795, 64
    %v1837 = vpop.permute.xlu0 %1836
    %1838 = vrot.lane.b32.xlu0 %v1796, 64
    %v1839 = vpop.permute.xlu0 %1838
    %1840 = vrot.lane.b32.xlu0 %v1797, 64
    %v1841 = vpop.permute.xlu0 %1840
    %1842 = vrot.lane.b32.xlu0 %v1798, 64
    %v1843 = vpop.permute.xlu0 %1842
    %1844 = vrot.lane.b32.xlu0 %v1799, 64
    %v1845 = vpop.permute.xlu0 %1844
    %1846 = vrot.lane.b32.xlu0 %v1800, 64
    %v1847 = vpop.permute.xlu0 %1846
    %1848 = vrot.lane.b32.xlu0 %v1801, 64
    %v1849 = vpop.permute.xlu0 %1848
    %1866 = vst.msk [vmem:[#allocation3] sm:$0xf] %vm366, %v1819
    %1867 = vst.msk [vmem:[#allocation3 + $0xc] sm:$0xf] %vm366, %v1821
    %1868 = vst.msk [vmem:[#allocation3 + $0x18] sm:$0xf] %vm366, %v1823
    %1869 = vst.msk [vmem:[#allocation3 + $0x24] sm:$0xf] %vm366, %v1825
    %1870 = vst.msk [vmem:[#allocation3 + $0x30] sm:$0xf] %vm366, %v1827
    %1871 = vst.msk [vmem:[#allocation3 + $0x3c] sm:$0xf] %vm366, %v1829
    %1872 = vst.msk [vmem:[#allocation3 + $0x48] sm:$0xf] %vm366, %v1831
    %1873 = vst.msk [vmem:[#allocation3 + $0x54] sm:$0xf] %vm366, %v1833
    %1874 = vst.msk [vmem:[#allocation3 + $0x60] sm:$0xf] %vm366, %v1835
    %1875 = vst.msk [vmem:[#allocation3 + $0x6c] sm:$0xf] %vm366, %v1837
    %1876 = vst.msk [vmem:[#allocation3 + $0x78] sm:$0xf] %vm366, %v1839
    %1877 = vst.msk [vmem:[#allocation3 + $0x84] sm:$0xf] %vm366, %v1841
    %1878 = vst.msk [vmem:[#allocation3 + $0x90] sm:$0xf] %vm366, %v1843
    %1879 = vst.msk [vmem:[#allocation3 + $0x9c] sm:$0xf] %vm366, %v1845
    %1880 = vst.msk [vmem:[#allocation3 + $0xa8] sm:$0xf] %vm366, %v1847
    %1881 = vst.msk [vmem:[#allocation3 + $0xb4] sm:$0xf] %vm366, %v1849
    %v1882 = vld [vmem:[%s42] sm:$0xff]
    %v1883 = vld [vmem:[%s42 + $0x10] sm:$0xff]
    %v1884 = vld [vmem:[%s42 + $0x20] sm:$0xff]
    %v1885 = vld [vmem:[%s42 + $0x30] sm:$0xff]
    %v1886 = vld [vmem:[%s42 + $0x40] sm:$0xff]
    %v1887 = vld [vmem:[%s42 + $0x50] sm:$0xff]
    %v1888 = vld [vmem:[%s42 + $0x60] sm:$0xff]
    %v1889 = vld [vmem:[%s42 + $0x70] sm:$0xff]
    %v1890 = vld [vmem:[%s42 + $0xa0] sm:$0xff]
    %v1891 = vld [vmem:[%s42 + $0xb0] sm:$0xff]
    %v1892 = vld [vmem:[%s42 + $0xc0] sm:$0xff]
    %v1893 = vld [vmem:[%s42 + $0xd0] sm:$0xff]
    %v1894 = vld [vmem:[%s42 + $0xe0] sm:$0xff]
    %v1895 = vld [vmem:[%s42 + $0xf0] sm:$0xff]
    %v1896 = vld [vmem:[%s42 + $0x100] sm:$0xff]
    %v1897 = vld [vmem:[%s42 + $0x110] sm:$0xff]
    %v1898 = vpack.c.bf16 %v1882, %v1882
    %v1899 = vpack.c.bf16 %v1883, %v1883
    %v1900 = vpack.c.bf16 %v1884, %v1884
    %v1901 = vpack.c.bf16 %v1885, %v1885
    %v1902 = vpack.c.bf16 %v1886, %v1886
    %v1903 = vpack.c.bf16 %v1887, %v1887
    %v1904 = vpack.c.bf16 %v1888, %v1888
    %v1905 = vpack.c.bf16 %v1889, %v1889
    %v1906 = vpack.c.bf16 %v1890, %v1890
    %v1907 = vpack.c.bf16 %v1891, %v1891
    %v1908 = vpack.c.bf16 %v1892, %v1892
    %v1909 = vpack.c.bf16 %v1893, %v1893
    %v1910 = vpack.c.bf16 %v1894, %v1894
    %v1911 = vpack.c.bf16 %v1895, %v1895
    %v1912 = vpack.c.bf16 %v1896, %v1896
    %v1913 = vpack.c.bf16 %v1897, %v1897
    %1930 = vrot.lane.b32.xlu0 %v1898, 96
    %v1931 = vpop.permute.xlu0 %1930
    %1932 = vrot.lane.b32.xlu0 %v1899, 96
    %v1933 = vpop.permute.xlu0 %1932
    %1934 = vrot.lane.b32.xlu0 %v1900, 96
    %v1935 = vpop.permute.xlu0 %1934
    %1936 = vrot.lane.b32.xlu0 %v1901, 96
    %v1937 = vpop.permute.xlu0 %1936
    %1938 = vrot.lane.b32.xlu0 %v1902, 96
    %v1939 = vpop.permute.xlu0 %1938
    %1940 = vrot.lane.b32.xlu0 %v1903, 96
    %v1941 = vpop.permute.xlu0 %1940
    %1942 = vrot.lane.b32.xlu0 %v1904, 96
    %v1943 = vpop.permute.xlu0 %1942
    %1944 = vrot.lane.b32.xlu0 %v1905, 96
    %v1945 = vpop.permute.xlu0 %1944
    %1946 = vrot.lane.b32.xlu0 %v1906, 96
    %v1947 = vpop.permute.xlu0 %1946
    %1948 = vrot.lane.b32.xlu0 %v1907, 96
    %v1949 = vpop.permute.xlu0 %1948
    %1950 = vrot.lane.b32.xlu0 %v1908, 96
    %v1951 = vpop.permute.xlu0 %1950
    %1952 = vrot.lane.b32.xlu0 %v1909, 96
    %v1953 = vpop.permute.xlu0 %1952
    %1954 = vrot.lane.b32.xlu0 %v1910, 96
    %v1955 = vpop.permute.xlu0 %1954
    %1956 = vrot.lane.b32.xlu0 %v1911, 96
    %v1957 = vpop.permute.xlu0 %1956
    %1958 = vrot.lane.b32.xlu0 %v1912, 96
    %v1959 = vpop.permute.xlu0 %1958
    %1960 = vrot.lane.b32.xlu0 %v1913, 96
    %v1961 = vpop.permute.xlu0 %1960
    %1978 = vst.msk [vmem:[#allocation3] sm:$0xf] %vm479, %v1931
    %1979 = vst.msk [vmem:[#allocation3 + $0xc] sm:$0xf] %vm479, %v1933
    %1980 = vst.msk [vmem:[#allocation3 + $0x18] sm:$0xf] %vm479, %v1935
    %1981 = vst.msk [vmem:[#allocation3 + $0x24] sm:$0xf] %vm479, %v1937
    %1982 = vst.msk [vmem:[#allocation3 + $0x30] sm:$0xf] %vm479, %v1939
    %1983 = vst.msk [vmem:[#allocation3 + $0x3c] sm:$0xf] %vm479, %v1941
    %1984 = vst.msk [vmem:[#allocation3 + $0x48] sm:$0xf] %vm479, %v1943
    %1985 = vst.msk [vmem:[#allocation3 + $0x54] sm:$0xf] %vm479, %v1945
    %1986 = vst.msk [vmem:[#allocation3 + $0x60] sm:$0xf] %vm479, %v1947
    %1987 = vst.msk [vmem:[#allocation3 + $0x6c] sm:$0xf] %vm479, %v1949
    %1988 = vst.msk [vmem:[#allocation3 + $0x78] sm:$0xf] %vm479, %v1951
    %1989 = vst.msk [vmem:[#allocation3 + $0x84] sm:$0xf] %vm479, %v1953
    %1990 = vst.msk [vmem:[#allocation3 + $0x90] sm:$0xf] %vm479, %v1955
    %1991 = vst.msk [vmem:[#allocation3 + $0x9c] sm:$0xf] %vm479, %v1957
    %1992 = vst.msk [vmem:[#allocation3 + $0xa8] sm:$0xf] %vm479, %v1959
    %1993 = vst.msk [vmem:[#allocation3 + $0xb4] sm:$0xf] %vm479, %v1961
    %v1994 = vld [vmem:[%s42 + $0x1] sm:$0xff]
    %v1995 = vld [vmem:[%s42 + $0x11] sm:$0xff]
    %v1996 = vld [vmem:[%s42 + $0x21] sm:$0xff]
    %v1997 = vld [vmem:[%s42 + $0x31] sm:$0xff]
    %v1998 = vld [vmem:[%s42 + $0x41] sm:$0xff]
    %v1999 = vld [vmem:[%s42 + $0x51] sm:$0xff]
    %v2000 = vld [vmem:[%s42 + $0x61] sm:$0xff]
    %v2001 = vld [vmem:[%s42 + $0x71] sm:$0xff]
    %v2002 = vld [vmem:[%s42 + $0xa1] sm:$0xff]
    %v2003 = vld [vmem:[%s42 + $0xb1] sm:$0xff]
    %v2004 = vld [vmem:[%s42 + $0xc1] sm:$0xff]
    %v2005 = vld [vmem:[%s42 + $0xd1] sm:$0xff]
    %v2006 = vld [vmem:[%s42 + $0xe1] sm:$0xff]
    %v2007 = vld [vmem:[%s42 + $0xf1] sm:$0xff]
    %v2008 = vld [vmem:[%s42 + $0x101] sm:$0xff]
    %v2009 = vld [vmem:[%s42 + $0x111] sm:$0xff]
    %v2010 = vpack.c.bf16 %v1994, %v1994
    %v2011 = vpack.c.bf16 %v1995, %v1995
    %v2012 = vpack.c.bf16 %v1996, %v1996
    %v2013 = vpack.c.bf16 %v1997, %v1997
    %v2014 = vpack.c.bf16 %v1998, %v1998
    %v2015 = vpack.c.bf16 %v1999, %v1999
    %v2016 = vpack.c.bf16 %v2000, %v2000
    %v2017 = vpack.c.bf16 %v2001, %v2001
    %v2018 = vpack.c.bf16 %v2002, %v2002
    %v2019 = vpack.c.bf16 %v2003, %v2003
    %v2020 = vpack.c.bf16 %v2004, %v2004
    %v2021 = vpack.c.bf16 %v2005, %v2005
    %v2022 = vpack.c.bf16 %v2006, %v2006
    %v2023 = vpack.c.bf16 %v2007, %v2007
    %v2024 = vpack.c.bf16 %v2008, %v2008
    %v2025 = vpack.c.bf16 %v2009, %v2009
    %2026 = vst.msk [vmem:[#allocation3 + $0x4] sm:$0xf] %vm140, %v2010
    %2027 = vst.msk [vmem:[#allocation3 + $0x10] sm:$0xf] %vm140, %v2011
    %2028 = vst.msk [vmem:[#allocation3 + $0x1c] sm:$0xf] %vm140, %v2012
    %2029 = vst.msk [vmem:[#allocation3 + $0x28] sm:$0xf] %vm140, %v2013
    %2030 = vst.msk [vmem:[#allocation3 + $0x34] sm:$0xf] %vm140, %v2014
    %2031 = vst.msk [vmem:[#allocation3 + $0x40] sm:$0xf] %vm140, %v2015
    %2032 = vst.msk [vmem:[#allocation3 + $0x4c] sm:$0xf] %vm140, %v2016
    %2033 = vst.msk [vmem:[#allocation3 + $0x58] sm:$0xf] %vm140, %v2017
    %2034 = vst.msk [vmem:[#allocation3 + $0x64] sm:$0xf] %vm140, %v2018
    %2035 = vst.msk [vmem:[#allocation3 + $0x70] sm:$0xf] %vm140, %v2019
    %2036 = vst.msk [vmem:[#allocation3 + $0x7c] sm:$0xf] %vm140, %v2020
    %2037 = vst.msk [vmem:[#allocation3 + $0x88] sm:$0xf] %vm140, %v2021
    %2038 = vst.msk [vmem:[#allocation3 + $0x94] sm:$0xf] %vm140, %v2022
    %2039 = vst.msk [vmem:[#allocation3 + $0xa0] sm:$0xf] %vm140, %v2023
    %2040 = vst.msk [vmem:[#allocation3 + $0xac] sm:$0xf] %vm140, %v2024
    %2041 = vst.msk [vmem:[#allocation3 + $0xb8] sm:$0xf] %vm140, %v2025
    %v2042 = vld [vmem:[%s42 + $0x2] sm:$0xff]
    %v2043 = vld [vmem:[%s42 + $0x12] sm:$0xff]
    %v2044 = vld [vmem:[%s42 + $0x22] sm:$0xff]
    %v2045 = vld [vmem:[%s42 + $0x32] sm:$0xff]
    %v2046 = vld [vmem:[%s42 + $0x42] sm:$0xff]
    %v2047 = vld [vmem:[%s42 + $0x52] sm:$0xff]
    %v2048 = vld [vmem:[%s42 + $0x62] sm:$0xff]
    %v2049 = vld [vmem:[%s42 + $0x72] sm:$0xff]
    %v2050 = vld [vmem:[%s42 + $0xa2] sm:$0xff]
    %v2051 = vld [vmem:[%s42 + $0xb2] sm:$0xff]
    %v2052 = vld [vmem:[%s42 + $0xc2] sm:$0xff]
    %v2053 = vld [vmem:[%s42 + $0xd2] sm:$0xff]
    %v2054 = vld [vmem:[%s42 + $0xe2] sm:$0xff]
    %v2055 = vld [vmem:[%s42 + $0xf2] sm:$0xff]
    %v2056 = vld [vmem:[%s42 + $0x102] sm:$0xff]
    %v2057 = vld [vmem:[%s42 + $0x112] sm:$0xff]
    %v2058 = vpack.c.bf16 %v2042, %v2042
    %v2059 = vpack.c.bf16 %v2043, %v2043
    %v2060 = vpack.c.bf16 %v2044, %v2044
    %v2061 = vpack.c.bf16 %v2045, %v2045
    %v2062 = vpack.c.bf16 %v2046, %v2046
    %v2063 = vpack.c.bf16 %v2047, %v2047
    %v2064 = vpack.c.bf16 %v2048, %v2048
    %v2065 = vpack.c.bf16 %v2049, %v2049
    %v2066 = vpack.c.bf16 %v2050, %v2050
    %v2067 = vpack.c.bf16 %v2051, %v2051
    %v2068 = vpack.c.bf16 %v2052, %v2052
    %v2069 = vpack.c.bf16 %v2053, %v2053
    %v2070 = vpack.c.bf16 %v2054, %v2054
    %v2071 = vpack.c.bf16 %v2055, %v2055
    %v2072 = vpack.c.bf16 %v2056, %v2056
    %v2073 = vpack.c.bf16 %v2057, %v2057
    %2090 = vrot.lane.b32.xlu0 %v2058, 32
    %v2091 = vpop.permute.xlu0 %2090
    %2092 = vrot.lane.b32.xlu0 %v2059, 32
    %v2093 = vpop.permute.xlu0 %2092
    %2094 = vrot.lane.b32.xlu0 %v2060, 32
    %v2095 = vpop.permute.xlu0 %2094
    %2096 = vrot.lane.b32.xlu0 %v2061, 32
    %v2097 = vpop.permute.xlu0 %2096
    %2098 = vrot.lane.b32.xlu0 %v2062, 32
    %v2099 = vpop.permute.xlu0 %2098
    %2100 = vrot.lane.b32.xlu0 %v2063, 32
    %v2101 = vpop.permute.xlu0 %2100
    %2102 = vrot.lane.b32.xlu0 %v2064, 32
    %v2103 = vpop.permute.xlu0 %2102
    %2104 = vrot.lane.b32.xlu0 %v2065, 32
    %v2105 = vpop.permute.xlu0 %2104
    %2106 = vrot.lane.b32.xlu0 %v2066, 32
    %v2107 = vpop.permute.xlu0 %2106
    %2108 = vrot.lane.b32.xlu0 %v2067, 32
    %v2109 = vpop.permute.xlu0 %2108
    %2110 = vrot.lane.b32.xlu0 %v2068, 32
    %v2111 = vpop.permute.xlu0 %2110
    %2112 = vrot.lane.b32.xlu0 %v2069, 32
    %v2113 = vpop.permute.xlu0 %2112
    %2114 = vrot.lane.b32.xlu0 %v2070, 32
    %v2115 = vpop.permute.xlu0 %2114
    %2116 = vrot.lane.b32.xlu0 %v2071, 32
    %v2117 = vpop.permute.xlu0 %2116
    %2118 = vrot.lane.b32.xlu0 %v2072, 32
    %v2119 = vpop.permute.xlu0 %2118
    %2120 = vrot.lane.b32.xlu0 %v2073, 32
    %v2121 = vpop.permute.xlu0 %2120
    %2138 = vst.msk [vmem:[#allocation3 + $0x4] sm:$0xf] %vm253, %v2091
    %2139 = vst.msk [vmem:[#allocation3 + $0x10] sm:$0xf] %vm253, %v2093
    %2140 = vst.msk [vmem:[#allocation3 + $0x1c] sm:$0xf] %vm253, %v2095
    %2141 = vst.msk [vmem:[#allocation3 + $0x28] sm:$0xf] %vm253, %v2097
    %2142 = vst.msk [vmem:[#allocation3 + $0x34] sm:$0xf] %vm253, %v2099
    %2143 = vst.msk [vmem:[#allocation3 + $0x40] sm:$0xf] %vm253, %v2101
    %2144 = vst.msk [vmem:[#allocation3 + $0x4c] sm:$0xf] %vm253, %v2103
    %2145 = vst.msk [vmem:[#allocation3 + $0x58] sm:$0xf] %vm253, %v2105
    %2146 = vst.msk [vmem:[#allocation3 + $0x64] sm:$0xf] %vm253, %v2107
    %2147 = vst.msk [vmem:[#allocation3 + $0x70] sm:$0xf] %vm253, %v2109
    %2148 = vst.msk [vmem:[#allocation3 + $0x7c] sm:$0xf] %vm253, %v2111
    %2149 = vst.msk [vmem:[#allocation3 + $0x88] sm:$0xf] %vm253, %v2113
    %2150 = vst.msk [vmem:[#allocation3 + $0x94] sm:$0xf] %vm253, %v2115
    %2151 = vst.msk [vmem:[#allocation3 + $0xa0] sm:$0xf] %vm253, %v2117
    %2152 = vst.msk [vmem:[#allocation3 + $0xac] sm:$0xf] %vm253, %v2119
    %2153 = vst.msk [vmem:[#allocation3 + $0xb8] sm:$0xf] %vm253, %v2121
    %v2154 = vld [vmem:[%s656] sm:$0xff]
    %v2155 = vld [vmem:[%s656 + $0x10] sm:$0xff]
    %v2156 = vld [vmem:[%s656 + $0x20] sm:$0xff]
    %v2157 = vld [vmem:[%s656 + $0x30] sm:$0xff]
    %v2158 = vld [vmem:[%s656 + $0x40] sm:$0xff]
    %v2159 = vld [vmem:[%s656 + $0x50] sm:$0xff]
    %v2160 = vld [vmem:[%s656 + $0x60] sm:$0xff]
    %v2161 = vld [vmem:[%s656 + $0x70] sm:$0xff]
    %v2162 = vld [vmem:[%s656 + $0xa0] sm:$0xff]
    %v2163 = vld [vmem:[%s656 + $0xb0] sm:$0xff]
    %v2164 = vld [vmem:[%s656 + $0xc0] sm:$0xff]
    %v2165 = vld [vmem:[%s656 + $0xd0] sm:$0xff]
    %v2166 = vld [vmem:[%s656 + $0xe0] sm:$0xff]
    %v2167 = vld [vmem:[%s656 + $0xf0] sm:$0xff]
    %v2168 = vld [vmem:[%s656 + $0x100] sm:$0xff]
    %v2169 = vld [vmem:[%s656 + $0x110] sm:$0xff]
    %v2170 = vpack.c.bf16 %v2154, %v2154
    %v2171 = vpack.c.bf16 %v2155, %v2155
    %v2172 = vpack.c.bf16 %v2156, %v2156
    %v2173 = vpack.c.bf16 %v2157, %v2157
    %v2174 = vpack.c.bf16 %v2158, %v2158
    %v2175 = vpack.c.bf16 %v2159, %v2159
    %v2176 = vpack.c.bf16 %v2160, %v2160
    %v2177 = vpack.c.bf16 %v2161, %v2161
    %v2178 = vpack.c.bf16 %v2162, %v2162
    %v2179 = vpack.c.bf16 %v2163, %v2163
    %v2180 = vpack.c.bf16 %v2164, %v2164
    %v2181 = vpack.c.bf16 %v2165, %v2165
    %v2182 = vpack.c.bf16 %v2166, %v2166
    %v2183 = vpack.c.bf16 %v2167, %v2167
    %v2184 = vpack.c.bf16 %v2168, %v2168
    %v2185 = vpack.c.bf16 %v2169, %v2169
    %2202 = vrot.lane.b32.xlu0 %v2170, 64
    %v2203 = vpop.permute.xlu0 %2202
    %2204 = vrot.lane.b32.xlu0 %v2171, 64
    %v2205 = vpop.permute.xlu0 %2204
    %2206 = vrot.lane.b32.xlu0 %v2172, 64
    %v2207 = vpop.permute.xlu0 %2206
    %2208 = vrot.lane.b32.xlu0 %v2173, 64
    %v2209 = vpop.permute.xlu0 %2208
    %2210 = vrot.lane.b32.xlu0 %v2174, 64
    %v2211 = vpop.permute.xlu0 %2210
    %2212 = vrot.lane.b32.xlu0 %v2175, 64
    %v2213 = vpop.permute.xlu0 %2212
    %2214 = vrot.lane.b32.xlu0 %v2176, 64
    %v2215 = vpop.permute.xlu0 %2214
    %2216 = vrot.lane.b32.xlu0 %v2177, 64
    %v2217 = vpop.permute.xlu0 %2216
    %2218 = vrot.lane.b32.xlu0 %v2178, 64
    %v2219 = vpop.permute.xlu0 %2218
    %2220 = vrot.lane.b32.xlu0 %v2179, 64
    %v2221 = vpop.permute.xlu0 %2220
    %2222 = vrot.lane.b32.xlu0 %v2180, 64
    %v2223 = vpop.permute.xlu0 %2222
    %2224 = vrot.lane.b32.xlu0 %v2181, 64
    %v2225 = vpop.permute.xlu0 %2224
    %2226 = vrot.lane.b32.xlu0 %v2182, 64
    %v2227 = vpop.permute.xlu0 %2226
    %2228 = vrot.lane.b32.xlu0 %v2183, 64
    %v2229 = vpop.permute.xlu0 %2228
    %2230 = vrot.lane.b32.xlu0 %v2184, 64
    %v2231 = vpop.permute.xlu0 %2230
    %2232 = vrot.lane.b32.xlu0 %v2185, 64
    %v2233 = vpop.permute.xlu0 %2232
    %2250 = vst.msk [vmem:[#allocation3 + $0x4] sm:$0xf] %vm366, %v2203
    %2251 = vst.msk [vmem:[#allocation3 + $0x10] sm:$0xf] %vm366, %v2205
    %2252 = vst.msk [vmem:[#allocation3 + $0x1c] sm:$0xf] %vm366, %v2207
    %2253 = vst.msk [vmem:[#allocation3 + $0x28] sm:$0xf] %vm366, %v2209
    %2254 = vst.msk [vmem:[#allocation3 + $0x34] sm:$0xf] %vm366, %v2211
    %2255 = vst.msk [vmem:[#allocation3 + $0x40] sm:$0xf] %vm366, %v2213
    %2256 = vst.msk [vmem:[#allocation3 + $0x4c] sm:$0xf] %vm366, %v2215
    %2257 = vst.msk [vmem:[#allocation3 + $0x58] sm:$0xf] %vm366, %v2217
    %2258 = vst.msk [vmem:[#allocation3 + $0x64] sm:$0xf] %vm366, %v2219
    %2259 = vst.msk [vmem:[#allocation3 + $0x70] sm:$0xf] %vm366, %v2221
    %2260 = vst.msk [vmem:[#allocation3 + $0x7c] sm:$0xf] %vm366, %v2223
    %2261 = vst.msk [vmem:[#allocation3 + $0x88] sm:$0xf] %vm366, %v2225
    %2262 = vst.msk [vmem:[#allocation3 + $0x94] sm:$0xf] %vm366, %v2227
    %2263 = vst.msk [vmem:[#allocation3 + $0xa0] sm:$0xf] %vm366, %v2229
    %2264 = vst.msk [vmem:[#allocation3 + $0xac] sm:$0xf] %vm366, %v2231
    %2265 = vst.msk [vmem:[#allocation3 + $0xb8] sm:$0xf] %vm366, %v2233
    %v2266 = vld [vmem:[%s656 + $0x1] sm:$0xff]
    %v2267 = vld [vmem:[%s656 + $0x11] sm:$0xff]
    %v2268 = vld [vmem:[%s656 + $0x21] sm:$0xff]
    %v2269 = vld [vmem:[%s656 + $0x31] sm:$0xff]
    %v2270 = vld [vmem:[%s656 + $0x41] sm:$0xff]
    %v2271 = vld [vmem:[%s656 + $0x51] sm:$0xff]
    %v2272 = vld [vmem:[%s656 + $0x61] sm:$0xff]
    %v2273 = vld [vmem:[%s656 + $0x71] sm:$0xff]
    %v2274 = vld [vmem:[%s656 + $0xa1] sm:$0xff]
    %v2275 = vld [vmem:[%s656 + $0xb1] sm:$0xff]
    %v2276 = vld [vmem:[%s656 + $0xc1] sm:$0xff]
    %v2277 = vld [vmem:[%s656 + $0xd1] sm:$0xff]
    %v2278 = vld [vmem:[%s656 + $0xe1] sm:$0xff]
    %v2279 = vld [vmem:[%s656 + $0xf1] sm:$0xff]
    %v2280 = vld [vmem:[%s656 + $0x101] sm:$0xff]
    %v2281 = vld [vmem:[%s656 + $0x111] sm:$0xff]
    %v2282 = vpack.c.bf16 %v2266, %v2266
    %v2283 = vpack.c.bf16 %v2267, %v2267
    %v2284 = vpack.c.bf16 %v2268, %v2268
    %v2285 = vpack.c.bf16 %v2269, %v2269
    %v2286 = vpack.c.bf16 %v2270, %v2270
    %v2287 = vpack.c.bf16 %v2271, %v2271
    %v2288 = vpack.c.bf16 %v2272, %v2272
    %v2289 = vpack.c.bf16 %v2273, %v2273
    %v2290 = vpack.c.bf16 %v2274, %v2274
    %v2291 = vpack.c.bf16 %v2275, %v2275
    %v2292 = vpack.c.bf16 %v2276, %v2276
    %v2293 = vpack.c.bf16 %v2277, %v2277
    %v2294 = vpack.c.bf16 %v2278, %v2278
    %v2295 = vpack.c.bf16 %v2279, %v2279
    %v2296 = vpack.c.bf16 %v2280, %v2280
    %v2297 = vpack.c.bf16 %v2281, %v2281
    %2314 = vrot.lane.b32.xlu0 %v2282, 96
    %v2315 = vpop.permute.xlu0 %2314
    %2316 = vrot.lane.b32.xlu0 %v2283, 96
    %v2317 = vpop.permute.xlu0 %2316
    %2318 = vrot.lane.b32.xlu0 %v2284, 96
    %v2319 = vpop.permute.xlu0 %2318
    %2320 = vrot.lane.b32.xlu0 %v2285, 96
    %v2321 = vpop.permute.xlu0 %2320
    %2322 = vrot.lane.b32.xlu0 %v2286, 96
    %v2323 = vpop.permute.xlu0 %2322
    %2324 = vrot.lane.b32.xlu0 %v2287, 96
    %v2325 = vpop.permute.xlu0 %2324
    %2326 = vrot.lane.b32.xlu0 %v2288, 96
    %v2327 = vpop.permute.xlu0 %2326
    %2328 = vrot.lane.b32.xlu0 %v2289, 96
    %v2329 = vpop.permute.xlu0 %2328
    %2330 = vrot.lane.b32.xlu0 %v2290, 96
    %v2331 = vpop.permute.xlu0 %2330
    %2332 = vrot.lane.b32.xlu0 %v2291, 96
    %v2333 = vpop.permute.xlu0 %2332
    %2334 = vrot.lane.b32.xlu0 %v2292, 96
    %v2335 = vpop.permute.xlu0 %2334
    %2336 = vrot.lane.b32.xlu0 %v2293, 96
    %v2337 = vpop.permute.xlu0 %2336
    %2338 = vrot.lane.b32.xlu0 %v2294, 96
    %v2339 = vpop.permute.xlu0 %2338
    %2340 = vrot.lane.b32.xlu0 %v2295, 96
    %v2341 = vpop.permute.xlu0 %2340
    %2342 = vrot.lane.b32.xlu0 %v2296, 96
    %v2343 = vpop.permute.xlu0 %2342
    %2344 = vrot.lane.b32.xlu0 %v2297, 96
    %v2345 = vpop.permute.xlu0 %2344
    %2362 = vst.msk [vmem:[#allocation3 + $0x4] sm:$0xf] %vm479, %v2315
    %2363 = vst.msk [vmem:[#allocation3 + $0x10] sm:$0xf] %vm479, %v2317
    %2364 = vst.msk [vmem:[#allocation3 + $0x1c] sm:$0xf] %vm479, %v2319
    %2365 = vst.msk [vmem:[#allocation3 + $0x28] sm:$0xf] %vm479, %v2321
    %2366 = vst.msk [vmem:[#allocation3 + $0x34] sm:$0xf] %vm479, %v2323
    %2367 = vst.msk [vmem:[#allocation3 + $0x40] sm:$0xf] %vm479, %v2325
    %2368 = vst.msk [vmem:[#allocation3 + $0x4c] sm:$0xf] %vm479, %v2327
    %2369 = vst.msk [vmem:[#allocation3 + $0x58] sm:$0xf] %vm479, %v2329
    %2370 = vst.msk [vmem:[#allocation3 + $0x64] sm:$0xf] %vm479, %v2331
    %2371 = vst.msk [vmem:[#allocation3 + $0x70] sm:$0xf] %vm479, %v2333
    %2372 = vst.msk [vmem:[#allocation3 + $0x7c] sm:$0xf] %vm479, %v2335
    %2373 = vst.msk [vmem:[#allocation3 + $0x88] sm:$0xf] %vm479, %v2337
    %2374 = vst.msk [vmem:[#allocation3 + $0x94] sm:$0xf] %vm479, %v2339
    %2375 = vst.msk [vmem:[#allocation3 + $0xa0] sm:$0xf] %vm479, %v2341
    %2376 = vst.msk [vmem:[#allocation3 + $0xac] sm:$0xf] %vm479, %v2343
    %2377 = vst.msk [vmem:[#allocation3 + $0xb8] sm:$0xf] %vm479, %v2345
    %v2378 = vld [vmem:[%s656 + $0x2] sm:$0xff]
    %v2379 = vld [vmem:[%s656 + $0x12] sm:$0xff]
    %v2380 = vld [vmem:[%s656 + $0x22] sm:$0xff]
    %v2381 = vld [vmem:[%s656 + $0x32] sm:$0xff]
    %v2382 = vld [vmem:[%s656 + $0x42] sm:$0xff]
    %v2383 = vld [vmem:[%s656 + $0x52] sm:$0xff]
    %v2384 = vld [vmem:[%s656 + $0x62] sm:$0xff]
    %v2385 = vld [vmem:[%s656 + $0x72] sm:$0xff]
    %v2386 = vld [vmem:[%s656 + $0xa2] sm:$0xff]
    %v2387 = vld [vmem:[%s656 + $0xb2] sm:$0xff]
    %v2388 = vld [vmem:[%s656 + $0xc2] sm:$0xff]
    %v2389 = vld [vmem:[%s656 + $0xd2] sm:$0xff]
    %v2390 = vld [vmem:[%s656 + $0xe2] sm:$0xff]
    %v2391 = vld [vmem:[%s656 + $0xf2] sm:$0xff]
    %v2392 = vld [vmem:[%s656 + $0x102] sm:$0xff]
    %v2393 = vld [vmem:[%s656 + $0x112] sm:$0xff]
    %v2394 = vpack.c.bf16 %v2378, %v2378
    %v2395 = vpack.c.bf16 %v2379, %v2379
    %v2396 = vpack.c.bf16 %v2380, %v2380
    %v2397 = vpack.c.bf16 %v2381, %v2381
    %v2398 = vpack.c.bf16 %v2382, %v2382
    %v2399 = vpack.c.bf16 %v2383, %v2383
    %v2400 = vpack.c.bf16 %v2384, %v2384
    %v2401 = vpack.c.bf16 %v2385, %v2385
    %v2402 = vpack.c.bf16 %v2386, %v2386
    %v2403 = vpack.c.bf16 %v2387, %v2387
    %v2404 = vpack.c.bf16 %v2388, %v2388
    %v2405 = vpack.c.bf16 %v2389, %v2389
    %v2406 = vpack.c.bf16 %v2390, %v2390
    %v2407 = vpack.c.bf16 %v2391, %v2391
    %v2408 = vpack.c.bf16 %v2392, %v2392
    %v2409 = vpack.c.bf16 %v2393, %v2393
    %2410 = vst.msk [vmem:[#allocation3 + $0x8] sm:$0xf] %vm140, %v2394
    %2411 = vst.msk [vmem:[#allocation3 + $0x14] sm:$0xf] %vm140, %v2395
    %2412 = vst.msk [vmem:[#allocation3 + $0x20] sm:$0xf] %vm140, %v2396
    %2413 = vst.msk [vmem:[#allocation3 + $0x2c] sm:$0xf] %vm140, %v2397
    %2414 = vst.msk [vmem:[#allocation3 + $0x38] sm:$0xf] %vm140, %v2398
    %2415 = vst.msk [vmem:[#allocation3 + $0x44] sm:$0xf] %vm140, %v2399
    %2416 = vst.msk [vmem:[#allocation3 + $0x50] sm:$0xf] %vm140, %v2400
    %2417 = vst.msk [vmem:[#allocation3 + $0x5c] sm:$0xf] %vm140, %v2401
    %2418 = vst.msk [vmem:[#allocation3 + $0x68] sm:$0xf] %vm140, %v2402
    %2419 = vst.msk [vmem:[#allocation3 + $0x74] sm:$0xf] %vm140, %v2403
    %2420 = vst.msk [vmem:[#allocation3 + $0x80] sm:$0xf] %vm140, %v2404
    %2421 = vst.msk [vmem:[#allocation3 + $0x8c] sm:$0xf] %vm140, %v2405
    %2422 = vst.msk [vmem:[#allocation3 + $0x98] sm:$0xf] %vm140, %v2406
    %2423 = vst.msk [vmem:[#allocation3 + $0xa4] sm:$0xf] %vm140, %v2407
    %2424 = vst.msk [vmem:[#allocation3 + $0xb0] sm:$0xf] %vm140, %v2408
    %2425 = vst.msk [vmem:[#allocation3 + $0xbc] sm:$0xf] %vm140, %v2409
    %v2426 = vld [vmem:[#allocation3] sm:$0xff]
    %v2427 = vld [vmem:[#allocation3 + $0x8] sm:$0xf]
    %v2428 = vld [vmem:[#allocation3 + $0xc] sm:$0xff]
    %v2429 = vld [vmem:[#allocation3 + $0x14] sm:$0xf]
    %v2430 = vld [vmem:[#allocation3 + $0x18] sm:$0xff]
    %v2431 = vld [vmem:[#allocation3 + $0x20] sm:$0xf]
    %v2432 = vld [vmem:[#allocation3 + $0x24] sm:$0xff]
    %v2433 = vld [vmem:[#allocation3 + $0x2c] sm:$0xf]
    %v2434 = vld [vmem:[#allocation3 + $0x30] sm:$0xff]
    %v2435 = vld [vmem:[#allocation3 + $0x38] sm:$0xf]
    %v2436 = vld [vmem:[#allocation3 + $0x3c] sm:$0xff]
    %v2437 = vld [vmem:[#allocation3 + $0x44] sm:$0xf]
    %v2438 = vld [vmem:[#allocation3 + $0x48] sm:$0xff]
    %v2439 = vld [vmem:[#allocation3 + $0x50] sm:$0xf]
    %v2440 = vld [vmem:[#allocation3 + $0x54] sm:$0xff]
    %v2441 = vld [vmem:[#allocation3 + $0x5c] sm:$0xf]
    %v2442 = vld [vmem:[#allocation3 + $0x60] sm:$0xff]
    %v2443 = vld [vmem:[#allocation3 + $0x68] sm:$0xf]
    %v2444 = vld [vmem:[#allocation3 + $0x6c] sm:$0xff]
    %v2445 = vld [vmem:[#allocation3 + $0x74] sm:$0xf]
    %v2446 = vld [vmem:[#allocation3 + $0x78] sm:$0xff]
    %v2447 = vld [vmem:[#allocation3 + $0x80] sm:$0xf]
    %v2448 = vld [vmem:[#allocation3 + $0x84] sm:$0xff]
    %v2449 = vld [vmem:[#allocation3 + $0x8c] sm:$0xf]
    %v2450 = vld [vmem:[#allocation3 + $0x90] sm:$0xff]
    %v2451 = vld [vmem:[#allocation3 + $0x98] sm:$0xf]
    %v2452 = vld [vmem:[#allocation3 + $0x9c] sm:$0xff]
    %v2453 = vld [vmem:[#allocation3 + $0xa4] sm:$0xf]
    %v2454 = vld [vmem:[#allocation3 + $0xa8] sm:$0xff]
    %v2455 = vld [vmem:[#allocation3 + $0xb0] sm:$0xf]
    %v2456 = vld [vmem:[#allocation3 + $0xb4] sm:$0xff]
    %v2457 = vld [vmem:[#allocation3 + $0xbc] sm:$0xf]
    %v2458 = vld [vmem:[%s5] sm:$0xf]
    %v2459 = vld [vmem:[%s5 + $0x4] sm:$0xf]
    %v2460 = vld [vmem:[%s5 + $0x8] sm:$0xf]
    %v2461 = vld [vmem:[%s5 + $0xc] sm:$0xf]
    %v2462 = vld [vmem:[%s5 + $0x10] sm:$0xf]
    %v2463 = vld [vmem:[%s5 + $0x14] sm:$0xf]
    %v2464 = vld [vmem:[%s5 + $0x18] sm:$0xf]
    %v2465 = vld [vmem:[%s5 + $0x1c] sm:$0xf]
    %v2466 = vld [vmem:[%s5 + $0x20] sm:$0xf]
    %v2467 = vld [vmem:[%s5 + $0x24] sm:$0xf]
    %v2468 = vld [vmem:[%s5 + $0x28] sm:$0xf]
    %v2469 = vld [vmem:[%s5 + $0x2c] sm:$0xf]
    %v2470 = vld [vmem:[%s5 + $0x30] sm:$0xf]
    %v2471 = vld [vmem:[%s5 + $0x34] sm:$0xf]
    %v2472 = vld [vmem:[%s5 + $0x38] sm:$0xf]
    %v2473 = vld [vmem:[%s5 + $0x3c] sm:$0xf]
    %v2474 = vld [vmem:[%s5 + $0x40] sm:$0xf]
    %v2475 = vld [vmem:[%s5 + $0x44] sm:$0xf]
    %v2476 = vld [vmem:[%s5 + $0x48] sm:$0xf]
    %v2477 = vld [vmem:[%s5 + $0x4c] sm:$0xf]
    %v2478 = vld [vmem:[%s5 + $0x50] sm:$0xf]
    %v2479 = vld [vmem:[%s5 + $0x54] sm:$0xf]
    %v2480 = vld [vmem:[%s5 + $0x58] sm:$0xf]
    %v2481 = vld [vmem:[%s5 + $0x5c] sm:$0xf]
    %v2482 = vld [vmem:[%s5 + $0x60] sm:$0xf]
    %v2483 = vld [vmem:[%s5 + $0x64] sm:$0xf]
    %v2484 = vld [vmem:[%s5 + $0x68] sm:$0xf]
    %v2485 = vld [vmem:[%s5 + $0x6c] sm:$0xf]
    %v2486 = vld [vmem:[%s5 + $0x70] sm:$0xf]
    %v2487 = vld [vmem:[%s5 + $0x74] sm:$0xf]
    %v2488 = vld [vmem:[%s5 + $0x78] sm:$0xf]
    %v2489 = vld [vmem:[%s5 + $0x7c] sm:$0xf]
    %v2490 = vld [vmem:[%s5 + $0x80] sm:$0xf]
    %v2491 = vld [vmem:[%s5 + $0x84] sm:$0xf]
    %v2492 = vld [vmem:[%s5 + $0x88] sm:$0xf]
    %v2493 = vld [vmem:[%s5 + $0x8c] sm:$0xf]
    %v2526 = vunpack.c.l.b16 %v2426
    %v2527 = vunpack.c.h.b16 %v2426
    %v2528 = vunpack.c.l.b16 %v2427
    %v2529 = vunpack.c.l.b16 %v2428
    %v2530 = vunpack.c.h.b16 %v2428
    %v2531 = vunpack.c.l.b16 %v2429
    %v2532 = vunpack.c.l.b16 %v2430
    %v2533 = vunpack.c.h.b16 %v2430
    %v2534 = vunpack.c.l.b16 %v2431
    %v2535 = vunpack.c.l.b16 %v2432
    %v2536 = vunpack.c.h.b16 %v2432
    %v2537 = vunpack.c.l.b16 %v2433
    %v2538 = vunpack.c.l.b16 %v2434
    %v2539 = vunpack.c.h.b16 %v2434
    %v2540 = vunpack.c.l.b16 %v2435
    %v2541 = vunpack.c.l.b16 %v2436
    %v2542 = vunpack.c.h.b16 %v2436
    %v2543 = vunpack.c.l.b16 %v2437
    %v2544 = vunpack.c.l.b16 %v2438
    %v2545 = vunpack.c.h.b16 %v2438
    %v2546 = vunpack.c.l.b16 %v2439
    %v2547 = vunpack.c.l.b16 %v2440
    %v2548 = vunpack.c.h.b16 %v2440
    %v2549 = vunpack.c.l.b16 %v2441
    %v2550 = vunpack.c.l.b16 %v2442
    %v2551 = vunpack.c.h.b16 %v2442
    %v2552 = vunpack.c.l.b16 %v2443
    %v2553 = vunpack.c.l.b16 %v2444
    %v2554 = vunpack.c.h.b16 %v2444
    %v2555 = vunpack.c.l.b16 %v2445
    %v2556 = vunpack.c.l.b16 %v2446
    %v2557 = vunpack.c.h.b16 %v2446
    %v2558 = vunpack.c.l.b16 %v2447
    %v2559 = vunpack.c.l.b16 %v2448
    %v2560 = vunpack.c.h.b16 %v2448
    %v2561 = vunpack.c.l.b16 %v2449
    %v2562 = vunpack.c.l.b16 %v2450
    %v2563 = vunpack.c.h.b16 %v2450
    %v2564 = vunpack.c.l.b16 %v2451
    %v2565 = vunpack.c.l.b16 %v2452
    %v2566 = vunpack.c.h.b16 %v2452
    %v2567 = vunpack.c.l.b16 %v2453
    %v2568 = vunpack.c.l.b16 %v2454
    %v2569 = vunpack.c.h.b16 %v2454
    %v2570 = vunpack.c.l.b16 %v2455
    %v2571 = vunpack.c.l.b16 %v2456
    %v2572 = vunpack.c.h.b16 %v2456
    %v2573 = vunpack.c.l.b16 %v2457
    %v2574 = vpack.c.b16 %v2529, %v2526
    %v2575 = vpack.c.b16 %v2530, %v2527
    %v2576 = vpack.c.b16 %v2531, %v2528
    %v2577 = vpack.c.b16 %v2535, %v2532
    %v2578 = vpack.c.b16 %v2536, %v2533
    %v2579 = vpack.c.b16 %v2537, %v2534
    %v2580 = vpack.c.b16 %v2541, %v2538
    %v2581 = vpack.c.b16 %v2542, %v2539
    %v2582 = vpack.c.b16 %v2543, %v2540
    %v2583 = vpack.c.b16 %v2547, %v2544
    %v2584 = vpack.c.b16 %v2548, %v2545
    %v2585 = vpack.c.b16 %v2549, %v2546
    %v2586 = vpack.c.b16 %v2553, %v2550
    %v2587 = vpack.c.b16 %v2554, %v2551
    %v2588 = vpack.c.b16 %v2555, %v2552
    %v2589 = vpack.c.b16 %v2559, %v2556
    %v2590 = vpack.c.b16 %v2560, %v2557
    %v2591 = vpack.c.b16 %v2561, %v2558
    %v2592 = vpack.c.b16 %v2565, %v2562
    %v2593 = vpack.c.b16 %v2566, %v2563
    %v2594 = vpack.c.b16 %v2567, %v2564
    %v2595 = vpack.c.b16 %v2571, %v2568
    %v2596 = vpack.c.b16 %v2572, %v2569
    %v2597 = vpack.c.b16 %v2573, %v2570
    %v2650 = vunpack.c.l.b16 %v2458
    %v2651 = vunpack.c.l.b16 %v2459
    %v2652 = vunpack.c.l.b16 %v2460
    %v2653 = vunpack.c.l.b16 %v2461
    %v2654 = vunpack.c.l.b16 %v2462
    %v2655 = vunpack.c.l.b16 %v2463
    %v2656 = vunpack.c.l.b16 %v2464
    %v2657 = vunpack.c.l.b16 %v2465
    %v2658 = vunpack.c.l.b16 %v2466
    %v2659 = vunpack.c.l.b16 %v2467
    %v2660 = vunpack.c.l.b16 %v2468
    %v2661 = vunpack.c.l.b16 %v2469
    %v2662 = vunpack.c.l.b16 %v2470
    %v2663 = vunpack.c.l.b16 %v2471
    %v2664 = vunpack.c.l.b16 %v2472
    %v2665 = vunpack.c.l.b16 %v2473
    %v2666 = vunpack.c.l.b16 %v2474
    %v2667 = vunpack.c.l.b16 %v2475
    %v2668 = vunpack.c.l.b16 %v2476
    %v2669 = vunpack.c.l.b16 %v2477
    %v2670 = vunpack.c.l.b16 %v2478
    %v2671 = vunpack.c.l.b16 %v2479
    %v2672 = vunpack.c.l.b16 %v2480
    %v2673 = vunpack.c.l.b16 %v2481
    %v2674 = vunpack.c.l.b16 %v2482
    %v2675 = vunpack.c.l.b16 %v2483
    %v2676 = vunpack.c.l.b16 %v2484
    %v2677 = vunpack.c.l.b16 %v2485
    %v2678 = vunpack.c.l.b16 %v2486
    %v2679 = vunpack.c.l.b16 %v2487
    %v2680 = vunpack.c.l.b16 %v2488
    %v2681 = vunpack.c.l.b16 %v2489
    %v2682 = vunpack.c.l.b16 %v2490
    %v2683 = vunpack.c.l.b16 %v2491
    %v2684 = vunpack.c.l.b16 %v2492
    %v2685 = vunpack.c.l.b16 %v2493
    %v2686 = vpack.c.b16 %v2651, %v2650
    %v2687 = vpack.c.b16 %v2653, %v2652
    %v2688 = vpack.c.b16 %v2655, %v2654
    %v2689 = vpack.c.b16 %v2657, %v2656
    %v2690 = vpack.c.b16 %v2659, %v2658
    %v2691 = vpack.c.b16 %v2661, %v2660
    %v2692 = vpack.c.b16 %v2663, %v2662
    %v2693 = vpack.c.b16 %v2665, %v2664
    %v2694 = vpack.c.b16 %v2667, %v2666
    %v2695 = vpack.c.b16 %v2669, %v2668
    %v2696 = vpack.c.b16 %v2671, %v2670
    %v2697 = vpack.c.b16 %v2673, %v2672
    %v2698 = vpack.c.b16 %v2675, %v2674
    %v2699 = vpack.c.b16 %v2677, %v2676
    %v2700 = vpack.c.b16 %v2679, %v2678
    %v2701 = vpack.c.b16 %v2681, %v2680
    %v2702 = vpack.c.b16 %v2683, %v2682
    %v2703 = vpack.c.b16 %v2685, %v2684
    %v2723 = vsel %vm31, %v2576, 0
    %v2726 = vsel %vm31, %v2579, 0
    %v2729 = vsel %vm31, %v2582, 0
    %v2732 = vsel %vm31, %v2585, 0
    %v2735 = vsel %vm31, %v2588, 0
    %v2738 = vsel %vm31, %v2591, 0
    %v2741 = vsel %vm31, %v2594, 0
    %v2744 = vsel %vm31, %v2597, 0
    %2746 = vmatpush.bf16.msra.mxu0 %v2693
    %2747 = vmatpush.bf16.msra.mxu0 %v2692
    %2748 = vmatpush.bf16.msra.mxu0 %v2691
    %2749 = vmatpush.bf16.msra.mxu0 %v2690
    %2750 = vmatpush.bf16.msra.mxu0 %v2689
    %2751 = vmatpush.bf16.msra.mxu0 %v2688
    %2752 = vmatpush.bf16.msra.mxu0 %v2687
    %2753 = vmatpush.bf16.msra.mxu0 %v2686
    %2754 = vmatmul.bf16.gmra.mxu0 %v2574
    %v2755 = vpop.f32.mrf.mxu0
    %v2756 = vadd.f32 0.0, %v2755
    %v2757 = vpop.f32.mrf.mxu0
    %v2758 = vadd.f32 0.0, %v2757
    %2759 = vmatmul.bf16.gmra.mxu0 %v2577
    %v2760 = vpop.f32.mrf.mxu0
    %v2761 = vadd.f32 0.0, %v2760
    %v2762 = vpop.f32.mrf.mxu0
    %v2763 = vadd.f32 0.0, %v2762
    %2764 = vmatmul.bf16.gmra.mxu0 %v2580
    %v2765 = vpop.f32.mrf.mxu0
    %v2766 = vadd.f32 0.0, %v2765
    %v2767 = vpop.f32.mrf.mxu0
    %v2768 = vadd.f32 0.0, %v2767
    %2769 = vmatmul.bf16.gmra.mxu0 %v2583
    %v2770 = vpop.f32.mrf.mxu0
    %v2771 = vadd.f32 0.0, %v2770
    %v2772 = vpop.f32.mrf.mxu0
    %v2773 = vadd.f32 0.0, %v2772
    %2774 = vmatmul.bf16.gmra.mxu0 %v2586
    %v2775 = vpop.f32.mrf.mxu0
    %v2776 = vadd.f32 0.0, %v2775
    %v2777 = vpop.f32.mrf.mxu0
    %v2778 = vadd.f32 0.0, %v2777
    %2779 = vmatmul.bf16.gmra.mxu0 %v2589
    %v2780 = vpop.f32.mrf.mxu0
    %v2781 = vadd.f32 0.0, %v2780
    %v2782 = vpop.f32.mrf.mxu0
    %v2783 = vadd.f32 0.0, %v2782
    %2784 = vmatmul.bf16.gmra.mxu0 %v2592
    %v2785 = vpop.f32.mrf.mxu0
    %v2786 = vadd.f32 0.0, %v2785
    %v2787 = vpop.f32.mrf.mxu0
    %v2788 = vadd.f32 0.0, %v2787
    %2789 = vmatmul.bf16.gmra.mxu0 %v2595
    %v2790 = vpop.f32.mrf.mxu0
    %v2791 = vadd.f32 0.0, %v2790
    %v2792 = vpop.f32.mrf.mxu0
    %v2793 = vadd.f32 0.0, %v2792
    %2794 = vdwg.mxu0
    %2795 = vmatpush.bf16.msra.mxu0 %v2701
    %2796 = vmatpush.bf16.msra.mxu0 %v2700
    %2797 = vmatpush.bf16.msra.mxu0 %v2699
    %2798 = vmatpush.bf16.msra.mxu0 %v2698
    %2799 = vmatpush.bf16.msra.mxu0 %v2697
    %2800 = vmatpush.bf16.msra.mxu0 %v2696
    %2801 = vmatpush.bf16.msra.mxu0 %v2695
    %2802 = vmatpush.bf16.msra.mxu0 %v2694
    %2803 = vmatmul.bf16.gmra.mxu0 %v2575
    %v2804 = vpop.f32.mrf.mxu0
    %v2805 = vadd.f32 %v2756, %v2804
    %v2806 = vpop.f32.mrf.mxu0
    %v2807 = vadd.f32 %v2758, %v2806
    %2808 = vmatmul.bf16.gmra.mxu0 %v2578
    %v2809 = vpop.f32.mrf.mxu0
    %v2810 = vadd.f32 %v2761, %v2809
    %v2811 = vpop.f32.mrf.mxu0
    %v2812 = vadd.f32 %v2763, %v2811
    %2813 = vmatmul.bf16.gmra.mxu0 %v2581
    %v2814 = vpop.f32.mrf.mxu0
    %v2815 = vadd.f32 %v2766, %v2814
    %v2816 = vpop.f32.mrf.mxu0
    %v2817 = vadd.f32 %v2768, %v2816
    %2818 = vmatmul.bf16.gmra.mxu0 %v2584
    %v2819 = vpop.f32.mrf.mxu0
    %v2820 = vadd.f32 %v2771, %v2819
    %v2821 = vpop.f32.mrf.mxu0
    %v2822 = vadd.f32 %v2773, %v2821
    %2823 = vmatmul.bf16.gmra.mxu0 %v2587
    %v2824 = vpop.f32.mrf.mxu0
    %v2825 = vadd.f32 %v2776, %v2824
    %v2826 = vpop.f32.mrf.mxu0
    %v2827 = vadd.f32 %v2778, %v2826
    %2828 = vmatmul.bf16.gmra.mxu0 %v2590
    %v2829 = vpop.f32.mrf.mxu0
    %v2830 = vadd.f32 %v2781, %v2829
    %v2831 = vpop.f32.mrf.mxu0
    %v2832 = vadd.f32 %v2783, %v2831
    %2833 = vmatmul.bf16.gmra.mxu0 %v2593
    %v2834 = vpop.f32.mrf.mxu0
    %v2835 = vadd.f32 %v2786, %v2834
    %v2836 = vpop.f32.mrf.mxu0
    %v2837 = vadd.f32 %v2788, %v2836
    %2838 = vmatmul.bf16.gmra.mxu0 %v2596
    %v2839 = vpop.f32.mrf.mxu0
    %v2840 = vadd.f32 %v2791, %v2839
    %v2841 = vpop.f32.mrf.mxu0
    %v2842 = vadd.f32 %v2793, %v2841
    %2843 = vdwg.mxu0
    %2844 = vmatpush.bf16.msra.mxu0 0
    %2845 = vmatpush.bf16.msra.mxu0 0
    %2846 = vmatpush.bf16.msra.mxu0 0
    %2847 = vmatpush.bf16.msra.mxu0 0
    %2848 = vmatpush.bf16.msra.mxu0 0
    %2849 = vmatpush.bf16.msra.mxu0 0
    %2850 = vmatpush.bf16.msra.mxu0 %v2703
    %2851 = vmatpush.bf16.msra.mxu0 %v2702
    %2852 = vmatmul.bf16.gmra.mxu0 %v2723
    %v2853 = vpop.f32.mrf.mxu0
    %v2854 = vadd.f32 %v2805, %v2853
    %v2855 = vpop.f32.mrf.mxu0
    %v2856 = vadd.f32 %v2807, %v2855
    %2857 = vmatmul.bf16.gmra.mxu0 %v2726
    %v2858 = vpop.f32.mrf.mxu0
    %v2859 = vadd.f32 %v2810, %v2858
    %v2860 = vpop.f32.mrf.mxu0
    %v2861 = vadd.f32 %v2812, %v2860
    %2862 = vmatmul.bf16.gmra.mxu0 %v2729
    %v2863 = vpop.f32.mrf.mxu0
    %v2864 = vadd.f32 %v2815, %v2863
    %v2865 = vpop.f32.mrf.mxu0
    %v2866 = vadd.f32 %v2817, %v2865
    %2867 = vmatmul.bf16.gmra.mxu0 %v2732
    %v2868 = vpop.f32.mrf.mxu0
    %v2869 = vadd.f32 %v2820, %v2868
    %v2870 = vpop.f32.mrf.mxu0
    %v2871 = vadd.f32 %v2822, %v2870
    %2872 = vmatmul.bf16.gmra.mxu0 %v2735
    %v2873 = vpop.f32.mrf.mxu0
    %v2874 = vadd.f32 %v2825, %v2873
    %v2875 = vpop.f32.mrf.mxu0
    %v2876 = vadd.f32 %v2827, %v2875
    %2877 = vmatmul.bf16.gmra.mxu0 %v2738
    %v2878 = vpop.f32.mrf.mxu0
    %v2879 = vadd.f32 %v2830, %v2878
    %v2880 = vpop.f32.mrf.mxu0
    %v2881 = vadd.f32 %v2832, %v2880
    %2882 = vmatmul.bf16.gmra.mxu0 %v2741
    %v2883 = vpop.f32.mrf.mxu0
    %v2884 = vadd.f32 %v2835, %v2883
    %v2885 = vpop.f32.mrf.mxu0
    %v2886 = vadd.f32 %v2837, %v2885
    %2887 = vmatmul.bf16.gmra.mxu0 %v2744
    %v2888 = vpop.f32.mrf.mxu0
    %v2889 = vadd.f32 %v2840, %v2888
    %v2890 = vpop.f32.mrf.mxu0
    %v2891 = vadd.f32 %v2842, %v2890
    %2892 = vdwg.mxu0
    %v2893 = vsel %vm31, %v2854, 0.0
    %v2894 = vsel %vm31, %v2856, 0.0
    %v2895 = vadd.f32 %v2893, %v2894
    %v2896 = vsel %vm31, %v2859, 0.0
    %v2897 = vadd.f32 %v2895, %v2896
    %v2898 = vsel %vm31, %v2861, 0.0
    %v2899 = vadd.f32 %v2897, %v2898
    %v2900 = vsel %vm31, %v2864, 0.0
    %v2901 = vadd.f32 %v2899, %v2900
    %v2902 = vsel %vm31, %v2866, 0.0
    %v2903 = vadd.f32 %v2901, %v2902
    %v2904 = vsel %vm31, %v2869, 0.0
    %v2905 = vadd.f32 %v2903, %v2904
    %v2906 = vsel %vm31, %v2871, 0.0
    %v2907 = vadd.f32 %v2905, %v2906
    %v2908 = vsel %vm31, %v2874, 0.0
    %v2909 = vadd.f32 %v2907, %v2908
    %v2910 = vsel %vm31, %v2876, 0.0
    %v2911 = vadd.f32 %v2909, %v2910
    %v2912 = vsel %vm31, %v2879, 0.0
    %v2913 = vadd.f32 %v2911, %v2912
    %v2914 = vsel %vm31, %v2881, 0.0
    %v2915 = vadd.f32 %v2913, %v2914
    %v2916 = vsel %vm31, %v2884, 0.0
    %v2917 = vadd.f32 %v2915, %v2916
    %v2918 = vsel %vm31, %v2886, 0.0
    %v2919 = vadd.f32 %v2917, %v2918
    %v2920 = vsel %vm31, %v2889, 0.0
    %v2921 = vadd.f32 %v2919, %v2920
    %v2922 = vsel %vm31, %v2891, 0.0
    %v2923 = vadd.f32 %v2921, %v2922
    %v2924 = vrot.slane %v2923, 4
    %v2925 = vadd.f32 %v2923, %v2924
    %v2926 = vrot.slane %v2925, 2
    %v2927 = vadd.f32 %v2925, %v2926
    %v2928 = vrot.slane %v2927, 1
    %v2929 = vadd.f32 %v2927, %v2928
    %v2930 = vmul.f32 %v2854, %v2854
    %v2931 = vmul.f32 %v2856, %v2856
    %v2932 = vmul.f32 %v2859, %v2859
    %v2933 = vmul.f32 %v2861, %v2861
    %v2934 = vmul.f32 %v2864, %v2864
    %v2935 = vmul.f32 %v2866, %v2866
    %v2936 = vmul.f32 %v2869, %v2869
    %v2937 = vmul.f32 %v2871, %v2871
    %v2938 = vmul.f32 %v2874, %v2874
    %v2939 = vmul.f32 %v2876, %v2876
    %v2940 = vmul.f32 %v2879, %v2879
    %v2941 = vmul.f32 %v2881, %v2881
    %v2942 = vmul.f32 %v2884, %v2884
    %v2943 = vmul.f32 %v2886, %v2886
    %v2944 = vmul.f32 %v2889, %v2889
    %v2945 = vmul.f32 %v2891, %v2891
    %v2946 = vsel %vm31, %v2930, 0.0
    %v2947 = vsel %vm31, %v2931, 0.0
    %v2948 = vadd.f32 %v2946, %v2947
    %v2949 = vsel %vm31, %v2932, 0.0
    %v2950 = vadd.f32 %v2948, %v2949
    %v2951 = vsel %vm31, %v2933, 0.0
    %v2952 = vadd.f32 %v2950, %v2951
    %v2953 = vsel %vm31, %v2934, 0.0
    %v2954 = vadd.f32 %v2952, %v2953
    %v2955 = vsel %vm31, %v2935, 0.0
    %v2956 = vadd.f32 %v2954, %v2955
    %v2957 = vsel %vm31, %v2936, 0.0
    %v2958 = vadd.f32 %v2956, %v2957
    %v2959 = vsel %vm31, %v2937, 0.0
    %v2960 = vadd.f32 %v2958, %v2959
    %v2961 = vsel %vm31, %v2938, 0.0
    %v2962 = vadd.f32 %v2960, %v2961
    %v2963 = vsel %vm31, %v2939, 0.0
    %v2964 = vadd.f32 %v2962, %v2963
    %v2965 = vsel %vm31, %v2940, 0.0
    %v2966 = vadd.f32 %v2964, %v2965
    %v2967 = vsel %vm31, %v2941, 0.0
    %v2968 = vadd.f32 %v2966, %v2967
    %v2969 = vsel %vm31, %v2942, 0.0
    %v2970 = vadd.f32 %v2968, %v2969
    %v2971 = vsel %vm31, %v2943, 0.0
    %v2972 = vadd.f32 %v2970, %v2971
    %v2973 = vsel %vm31, %v2944, 0.0
    %v2974 = vadd.f32 %v2972, %v2973
    %v2975 = vsel %vm31, %v2945, 0.0
    %v2976 = vadd.f32 %v2974, %v2975
    %v2977 = vrot.slane %v2976, 4
    %v2978 = vadd.f32 %v2976, %v2977
    %v2979 = vrot.slane %v2978, 2
    %v2980 = vadd.f32 %v2978, %v2979
    %v2981 = vrot.slane %v2980, 1
    %v2982 = vadd.f32 %v2980, %v2981
    %v2983 = vmul.f32 %v2929, 0.0078125
    %v2984 = vmul.f32 %v2982, 0.0078125
    %v2985 = vmul.f32 %v2983, %v2983
    %v2986 = vsub.f32 %v2984, %v2985
    %v2987 = vadd.f32 %v2986, 1e-05
    %v2988 = vrsqrt.pop %v2987
    %v2989 = vmul.f32 %v2988, %v2987
    %v2990 = vmul.f32 %v2989, %v2988
    %v2991 = vmul.f32 0.5, %v2990
    %v2992 = vsub.f32 1.5, %v2991
    %v2993 = vmul.f32 %v2988, %v2992
    %vm2994 = vweird.f32 %v2987
    %vm2995 = vweird.f32 %v2988
    %vm2996 = vmor %vm2994, %vm2995
    %v2997 = vsel %vm2996, %v2988, %v2993
    %v2998 = vld [vmem:[%s6] sm:$0x1]
    %v2999 = vmul.f32 %v2997, %v2998
    %v3000 = vld [vmem:[%s7] sm:$0x1]
    %v3001 = vmul.f32 %v2983, %v2999
    %v3002 = vsub.f32 %v3000, %v3001
    %v3003 = vperm.slane %v2999, 0
    %v3004 = vmul.f32 %v2854, %v3003
    %v3005 = vmul.f32 %v2856, %v3003
    %v3006 = vmul.f32 %v2859, %v3003
    %v3007 = vmul.f32 %v2861, %v3003
    %v3008 = vmul.f32 %v2864, %v3003
    %v3009 = vmul.f32 %v2866, %v3003
    %v3010 = vmul.f32 %v2869, %v3003
    %v3011 = vmul.f32 %v2871, %v3003
    %v3012 = vmul.f32 %v2874, %v3003
    %v3013 = vmul.f32 %v2876, %v3003
    %v3014 = vmul.f32 %v2879, %v3003
    %v3015 = vmul.f32 %v2881, %v3003
    %v3016 = vmul.f32 %v2884, %v3003
    %v3017 = vmul.f32 %v2886, %v3003
    %v3018 = vmul.f32 %v2889, %v3003
    %v3019 = vmul.f32 %v2891, %v3003
    %v3021 = vperm.slane %v3002, 0
    %v3023 = vadd.f32 %v3004, %v3021
    %v3024 = vadd.f32 %v3005, %v3021
    %v3025 = vadd.f32 %v3006, %v3021
    %v3026 = vadd.f32 %v3007, %v3021
    %v3027 = vadd.f32 %v3008, %v3021
    %v3028 = vadd.f32 %v3009, %v3021
    %v3029 = vadd.f32 %v3010, %v3021
    %v3030 = vadd.f32 %v3011, %v3021
    %v3031 = vadd.f32 %v3012, %v3021
    %v3032 = vadd.f32 %v3013, %v3021
    %v3033 = vadd.f32 %v3014, %v3021
    %v3034 = vadd.f32 %v3015, %v3021
    %v3035 = vadd.f32 %v3016, %v3021
    %v3036 = vadd.f32 %v3017, %v3021
    %v3037 = vadd.f32 %v3018, %v3021
    %v3038 = vadd.f32 %v3019, %v3021
    %v3039 = vld [vmem:[%s0] sm:$0xff]
    %v3040 = vld [vmem:[%s0 + $0x8] sm:$0xff]
    %v3041 = vld [vmem:[%s0 + $0x10] sm:$0xff]
    %v3042 = vld [vmem:[%s0 + $0x18] sm:$0xff]
    %v3043 = vld [vmem:[%s0 + $0x20] sm:$0xff]
    %v3044 = vld [vmem:[%s0 + $0x28] sm:$0xff]
    %v3045 = vld [vmem:[%s0 + $0x30] sm:$0xff]
    %v3046 = vld [vmem:[%s0 + $0x38] sm:$0xff]
    %v3047 = vld [vmem:[%s0 + $0x40] sm:$0xff]
    %v3048 = vld [vmem:[%s0 + $0x48] sm:$0xff]
    %v3049 = vld [vmem:[%s0 + $0x50] sm:$0xff]
    %v3050 = vld [vmem:[%s0 + $0x58] sm:$0xff]
    %v3051 = vld [vmem:[%s0 + $0x60] sm:$0xff]
    %v3052 = vld [vmem:[%s0 + $0x68] sm:$0xff]
    %v3053 = vld [vmem:[%s0 + $0x70] sm:$0xff]
    %v3054 = vld [vmem:[%s0 + $0x78] sm:$0xff]
    %v3055 = vadd.f32 %v3039, %v3023
    %v3056 = vadd.f32 %v3040, %v3024
    %v3057 = vadd.f32 %v3041, %v3025
    %v3058 = vadd.f32 %v3042, %v3026
    %v3059 = vadd.f32 %v3043, %v3027
    %v3060 = vadd.f32 %v3044, %v3028
    %v3061 = vadd.f32 %v3045, %v3029
    %v3062 = vadd.f32 %v3046, %v3030
    %v3063 = vadd.f32 %v3047, %v3031
    %v3064 = vadd.f32 %v3048, %v3032
    %v3065 = vadd.f32 %v3049, %v3033
    %v3066 = vadd.f32 %v3050, %v3034
    %v3067 = vadd.f32 %v3051, %v3035
    %v3068 = vadd.f32 %v3052, %v3036
    %v3069 = vadd.f32 %v3053, %v3037
    %v3070 = vadd.f32 %v3054, %v3038
    %3071 = vst.msk [vmem:[#allocation4] sm:$0xff] %vm31, %v3055
    %3072 = vst.msk [vmem:[#allocation4 + $0x8] sm:$0xff] %vm31, %v3056
    %3073 = vst.msk [vmem:[#allocation4 + $0x10] sm:$0xff] %vm31, %v3057
    %3074 = vst.msk [vmem:[#allocation4 + $0x18] sm:$0xff] %vm31, %v3058
    %3075 = vst.msk [vmem:[#allocation4 + $0x20] sm:$0xff] %vm31, %v3059
    %3076 = vst.msk [vmem:[#allocation4 + $0x28] sm:$0xff] %vm31, %v3060
    %3077 = vst.msk [vmem:[#allocation4 + $0x30] sm:$0xff] %vm31, %v3061
    %3078 = vst.msk [vmem:[#allocation4 + $0x38] sm:$0xff] %vm31, %v3062
    %3079 = vst.msk [vmem:[#allocation4 + $0x40] sm:$0xff] %vm31, %v3063
    %3080 = vst.msk [vmem:[#allocation4 + $0x48] sm:$0xff] %vm31, %v3064
    %3081 = vst.msk [vmem:[#allocation4 + $0x50] sm:$0xff] %vm31, %v3065
    %3082 = vst.msk [vmem:[#allocation4 + $0x58] sm:$0xff] %vm31, %v3066
    %3083 = vst.msk [vmem:[#allocation4 + $0x60] sm:$0xff] %vm31, %v3067
    %3084 = vst.msk [vmem:[#allocation4 + $0x68] sm:$0xff] %vm31, %v3068
    %3085 = vst.msk [vmem:[#allocation4 + $0x70] sm:$0xff] %vm31, %v3069
    %3086 = vst.msk [vmem:[#allocation4 + $0x78] sm:$0xff] %vm31, %v3070
    // Predicated region
    $region34: #{conv_block_generator.1} parent=1 // pred_check
      _
    $region35: #{conv_block_generator.1} parent=1 // pred_check_branch
      %3088 = sbr.rel (0) target = $region37
    $region36: #{conv_block_generator.1} parent=1 // pred_region
      %3090 = vsyncadd [#allocation5], 0
      %s3091 = sshll.u32 [#allocation4], 4
      %s3092 = int_to_ptr.vmem [resolvable:$true] %s3091
      %s3093 = sshll.u32 %s8, 4
      %s3094 = int_to_ptr.hbm [resolvable:$true] %s3093
      %3099 = dma.vmem_to_hbm [thread:$0]  %s3092, 2048, %s3094, [#allocation5], 128, 128, 8
    $region37: #{conv_block_generator.1} parent=1 // pred_fallthru
      _
    // Predicated region
    $region38: #{conv_block_generator.1} parent=1 // pred_check
      _
    $region39: #{conv_block_generator.1} parent=1 // pred_check_branch
      %3101 = sbr.rel (0) target = $region41
    $region40: #{conv_block_generator.1} parent=1 // pred_region
      %3103 = dma.done [#allocation5], 2048
    $region41: #{conv_block_generator.1} parent=1 // pred_fallthru
      _
    %3104 = vsyncpa [#allocation5], 1

</llo_original>
